<compile_context>
chip_gen: v7x
topology: tpu7x:2x2x1
jax: 0.10.0
libtpu: 0.0.40
codegen_flags: <defaults>
</compile_context>

<pallas_src>
import jax
import jax.numpy as jnp
from jax.experimental import pallas as pl
from jax.experimental.pallas import tpu as pltpu

D_MODEL = 32
INPUT_DIM = 4
NHEAD = 2
HEAD_DIM = D_MODEL // NHEAD
NUM_LAYERS = 2
D_FF = 2048          # nn.TransformerEncoderLayer default dim_feedforward
LN_EPS = 1e-5

# contract the last dim of both operands:  a @ b.T  (standard NT matmul form)
_NT = (((1,), (1,)), ((), ()))


def _layer_norm(x, w, b):
    mean = jnp.mean(x, axis=-1, keepdims=True)
    var = jnp.mean((x - mean) ** 2, axis=-1, keepdims=True)
    return (x - mean) * jax.lax.rsqrt(var + LN_EPS) * w + b


def _make_kernel(ff_chunk):
    """Build the fused kernel for a given (static) FF chunk width."""
    assert D_FF % ff_chunk == 0
    n_chunks = D_FF // ff_chunk

    def transformer_kernel(x_ref, we_ref, be_ref,
                           wqkv_ref, bqkv_ref, wo_ref, bo_ref,
                           w1_ref, b1_ref, w2_ref, b2_ref,
                           n1w_ref, n1b_ref, n2w_ref, n2b_ref,
                           fcw_ref, fcb_ref, o_ref):
        f32 = jnp.float32
        bf16 = jnp.bfloat16
        D, HD = D_MODEL, HEAD_DIM

        x = x_ref[...]                                              # (N, INPUT_DIM) f32

        # embedding: Linear(input_dim, d_model); bf16 operands, f32 accumulation
        h = jnp.dot(x.astype(bf16), we_ref[...],
                    preferred_element_type=f32) + be_ref[...]       # (N, D) f32

        for l in range(NUM_LAYERS):                 # static unroll (2 layers)
            # ---- multi-head self-attention (post-norm; dropout = identity) ----
            h_bf = h.astype(bf16)
            # fused QKV projection; 1/sqrt(HD) already folded into the Q columns
            qkv = jnp.dot(h_bf, wqkv_ref[l],
                          preferred_element_type=f32) + bqkv_ref[l]  # (N, 3D) f32

            ctx_heads = []
            for hh in range(NHEAD):                 # static unroll (2 heads)
                q = qkv[:, hh * HD:(hh + 1) * HD].astype(bf16)            # (N, HD)
                k = qkv[:, D + hh * HD:D + (hh + 1) * HD].astype(bf16)    # (N, HD)
                v = qkv[:, 2 * D + hh * HD:2 * D + (hh + 1) * HD].astype(bf16)

                s = jax.lax.dot_general(q, k, _NT,
                                        preferred_element_type=f32)       # (N, N) f32
                p = jnp.exp(s - jnp.max(s, axis=-1, keepdims=True))       # unnormalized
                ctx = jnp.dot(p.astype(bf16), v,
                              preferred_element_type=f32)                 # (N, HD)
                # deferred softmax normalization on the (N, HD) context (exact recip)
                ctx = ctx * pl.reciprocal(jnp.sum(p, axis=-1, keepdims=True))
                ctx_heads.append(ctx)

            # 16+16 lanes live inside one vreg -> cheap lane concat, single out-proj dot
            ctx_cat = jnp.concatenate(ctx_heads, axis=-1).astype(bf16)    # (N, D)
            attn = jnp.dot(ctx_cat, wo_ref[l],
                           preferred_element_type=f32) + bo_ref[l]        # (N, D)
            h = _layer_norm(h + attn, n1w_ref[l], n1b_ref[l])

            # ---- feed-forward: linear1 -> relu -> linear2 ----
            h_bf = h.astype(bf16)
            if n_chunks == 1:
                # small-N path: whole FF in one pass, no accumulator
                a = jnp.dot(h_bf, w1_ref[l], preferred_element_type=f32) + b1_ref[l]
                a = jnp.maximum(a, 0.0)
                ff = jnp.dot(a.astype(bf16), w2_ref[l], preferred_element_type=f32)
            else:
                # large-N path: fuse over D_FF chunks, init accumulator with chunk 0
                ff = None
                for c in range(n_chunks):
                    lo = c * ff_chunk
                    a = jnp.dot(h_bf, w1_ref[l, :, pl.ds(lo, ff_chunk)],
                                preferred_element_type=f32) + b1_ref[l, :, pl.ds(lo, ff_chunk)]
                    a = jnp.maximum(a, 0.0)
                    part = jnp.dot(a.astype(bf16), w2_ref[l, pl.ds(lo, ff_chunk), :],
                                   preferred_element_type=f32)
                    ff = part if ff is None else ff + part
            ff = ff + b2_ref[l]
            h = _layer_norm(h + ff, n2w_ref[l], n2b_ref[l])

        # ---- final fc + sigmoid, emitted lane-dense as a (1, N) row ----
        logits = jax.lax.dot_general(fcw_ref[...], h.astype(bf16), _NT,
                                     preferred_element_type=f32) + fcb_ref[...]   # (1, N)
        o_ref[...] = jax.nn.sigmoid(logits)

    return transformer_kernel


def init_params(key):
    keys = iter(jax.random.split(key, 16))

    def w(shape, scale=0.1):
        return scale * jax.random.normal(next(keys), shape, dtype=jnp.float32)

    # PyTorch parameter shapes (out_features, in_features) / (out_features,)
    return dict(
        we=w((D_MODEL, INPUT_DIM)), be=w((D_MODEL,)),
        inw=w((NUM_LAYERS, 3 * D_MODEL, D_MODEL)), inb=w((NUM_LAYERS, 3 * D_MODEL)),
        outw=w((NUM_LAYERS, D_MODEL, D_MODEL)), outb=w((NUM_LAYERS, D_MODEL)),
        l1w=w((NUM_LAYERS, D_FF, D_MODEL)), l1b=w((NUM_LAYERS, D_FF)),
        l2w=w((NUM_LAYERS, D_MODEL, D_FF)), l2b=w((NUM_LAYERS, D_MODEL)),
        n1w=jnp.ones((NUM_LAYERS, D_MODEL), jnp.float32),
        n1b=jnp.zeros((NUM_LAYERS, D_MODEL), jnp.float32),
        n2w=jnp.ones((NUM_LAYERS, D_MODEL), jnp.float32),
        n2b=jnp.zeros((NUM_LAYERS, D_MODEL), jnp.float32),
        fcw=w((1, D_MODEL)), fcb=w((1,)),
    )


def pack_params(p):
    """One-time host-side layout plumbing (transposes, QKV stacking, scale fold,
    bf16 casts of matmul weights).  Hoisted out of the per-call path."""
    bf16 = jnp.bfloat16
    D = D_MODEL
    scale = 1.0 / (HEAD_DIM ** 0.5)

    inw, inb = p['inw'], p['inb']                       # (L, 3D, D), (L, 3D)
    # fold the attention scale into Q in f32, before the bf16 cast
    wq = inw[:, :D, :] * scale
    bq = inb[:, :D] * scale
    wqkv = jnp.concatenate([wq, inw[:, D:2 * D, :], inw[:, 2 * D:, :]], axis=1)  # (L, 3D, D)
    bqkv = jnp.concatenate([bq, inb[:, D:2 * D], inb[:, 2 * D:]], axis=1)        # (L, 3D)

    return dict(
        we=p['we'].T.astype(bf16),                                   # (INPUT_DIM, D)
        be=p['be'][None, :],                                         # (1, D)
        wqkv=jnp.transpose(wqkv, (0, 2, 1)).astype(bf16),            # (L, D, 3D)
        bqkv=bqkv[:, None, :],                                       # (L, 1, 3D)
        wo=jnp.transpose(p['outw'], (0, 2, 1)).astype(bf16),         # (L, D, D)
        bo=p['outb'][:, None, :],                                    # (L, 1, D)
        w1=jnp.transpose(p['l1w'], (0, 2, 1)).astype(bf16),          # (L, D, D_FF)
        b1=p['l1b'][:, None, :],                                     # (L, 1, D_FF)
        w2=jnp.transpose(p['l2w'], (0, 2, 1)).astype(bf16),          # (L, D_FF, D)
        b2=p['l2b'][:, None, :],                                     # (L, 1, D)
        n1w=p['n1w'][:, None, :], n1b=p['n1b'][:, None, :],
        n2w=p['n2w'][:, None, :], n2b=p['n2b'][:, None, :],
        fcw=p['fcw'].astype(bf16),                                   # (1, D)
        fcb=p['fcb'][None, :],                                       # (1, 1)
    )


@jax.jit
def diabetes_transformer(x, pk):
    """Per-call path: one fused pallas_call on pre-packed params.  All rows form
    one attention sequence, so the whole problem is a single VMEM-resident block."""
    N = x.shape[0]
    # small-N: run the whole FF in one pass; chunk only when (N, D_FF) gets large
    ff_chunk = D_FF if N <= 512 else 512

    args = (x,
            pk['we'], pk['be'],
            pk['wqkv'], pk['bqkv'], pk['wo'], pk['bo'],
            pk['w1'], pk['b1'], pk['w2'], pk['b2'],
            pk['n1w'], pk['n1b'], pk['n2w'], pk['n2b'],
            pk['fcw'], pk['fcb'])

    # advisory cost estimate for XLA scheduling around the custom call
    flops = (2 * N * INPUT_DIM * D_MODEL + 2 * N * D_MODEL
             + NUM_LAYERS * (2 * N * D_MODEL * 3 * D_MODEL       # fused QKV
                             + 4 * N * N * D_MODEL               # scores + p@v
                             + 2 * N * D_MODEL * D_MODEL         # out proj
                             + 4 * N * D_MODEL * D_FF))          # FF
    transcendentals = NUM_LAYERS * NHEAD * N * N + N
    bytes_accessed = sum(int(a.size) * a.dtype.itemsize for a in args) + 4 * N

    out = pl.pallas_call(
        _make_kernel(ff_chunk),
        out_shape=jax.ShapeDtypeStruct((1, N), jnp.float32),        # lane-dense row
        in_specs=[pl.BlockSpec(memory_space=pltpu.MemorySpace.VMEM)] * len(args),
        out_specs=pl.BlockSpec(memory_space=pltpu.MemorySpace.VMEM),
        compiler_params=pltpu.CompilerParams(
            # generation-safe scoped-VMEM cap (<= v7x 64 MiB physical); large N
            # should move to a query-tiled online-softmax grid instead of
            # raising this further.
            vmem_limit_bytes=48 * 1024 * 1024),
        cost_estimate=pl.CostEstimate(flops=flops,
                                      transcendentals=transcendentals,
                                      bytes_accessed=bytes_accessed),
    )(*args)
    return out[0]                                                    # matches .squeeze(-1)


def reference(x, p):
    """Pure-JAX f32 reference mirroring the PyTorch forward (eval mode)."""
    h = x @ p['we'].T + p['be']
    scale = 1.0 / (HEAD_DIM ** 0.5)
    for l in range(NUM_LAYERS):
        qkv = h @ p['inw'][l].T + p['inb'][l]
        q, k, v = qkv[:, :D_MODEL], qkv[:, D_MODEL:2 * D_MODEL], qkv[:, 2 * D_MODEL:]
        outs = []
        for hh in range(NHEAD):
            sl = slice(hh * HEAD_DIM, (hh + 1) * HEAD_DIM)
            s = (q[:, sl] @ k[:, sl].T) * scale
            pm = jax.nn.softmax(s, axis=-1)
            outs.append(pm @ v[:, sl])
        attn = jnp.concatenate(outs, axis=-1) @ p['outw'][l].T + p['outb'][l]
        h = _layer_norm(h + attn, p['n1w'][l], p['n1b'][l])
        ff = jnp.maximum(h @ p['l1w'][l].T + p['l1b'][l], 0.0) @ p['l2w'][l].T + p['l2b'][l]
        h = _layer_norm(h + ff, p['n2w'][l], p['n2b'][l])
    return jax.nn.sigmoid(h @ p['fcw'].T + p['fcb'])[:, 0]


if __name__ == "__main__":
    key = jax.random.PRNGKey(0)
    k_x, k_p = jax.random.split(key)
    N = 8                               # number of samples (= attention sequence length)
    x = jax.random.normal(k_x, (N, INPUT_DIM), dtype=jnp.float32)
    params = init_params(k_p)

    packed = pack_params(params)        # one-time weight repack / bf16 cast

    y = jax.block_until_ready(diabetes_transformer(x, packed))

    y_ref = reference(x, params)
    assert y.shape == (N,)
    # bf16 MXU operands (f32 accumulation) introduce small deviations vs. the
    # pure-f32 reference; tolerance sized accordingly.
    assert jnp.allclose(y, y_ref, atol=2e-2, rtol=2e-2), (y, y_ref)

    print("KERNEL_OK")
</pallas_src>

<mosaic_0001>
module attributes {stable_mosaic.version = 11 : i64} {
  func.func @transformer_kernel(%arg0: memref<8x4xf32, #tpu.memory_space<vmem>>, %arg1: memref<4x32xbf16, #tpu.memory_space<vmem>>, %arg2: memref<1x32xf32, #tpu.memory_space<vmem>>, %arg3: memref<2x32x96xbf16, #tpu.memory_space<vmem>>, %arg4: memref<2x1x96xf32, #tpu.memory_space<vmem>>, %arg5: memref<2x32x32xbf16, #tpu.memory_space<vmem>>, %arg6: memref<2x1x32xf32, #tpu.memory_space<vmem>>, %arg7: memref<2x32x2048xbf16, #tpu.memory_space<vmem>>, %arg8: memref<2x1x2048xf32, #tpu.memory_space<vmem>>, %arg9: memref<2x2048x32xbf16, #tpu.memory_space<vmem>>, %arg10: memref<2x1x32xf32, #tpu.memory_space<vmem>>, %arg11: memref<2x1x32xf32, #tpu.memory_space<vmem>>, %arg12: memref<2x1x32xf32, #tpu.memory_space<vmem>>, %arg13: memref<2x1x32xf32, #tpu.memory_space<vmem>>, %arg14: memref<2x1x32xf32, #tpu.memory_space<vmem>>, %arg15: memref<1x32xbf16, #tpu.memory_space<vmem>>, %arg16: memref<1x1xf32, #tpu.memory_space<vmem>>, %arg17: memref<1x8xf32, #tpu.memory_space<vmem>>) attributes {dimension_semantics = [], scalar_prefetch = 0 : i64, scratch_operands = 0 : i64, tpu.core_type = #tpu.core_type<tc>} {
    %c0 = arith.constant 0 : index
    %c0_0 = arith.constant 0 : index
    %0 = vector.load %arg0[%c0, %c0_0] : memref<8x4xf32, #tpu.memory_space<vmem>>, vector<8x4xf32>
    %1 = arith.truncf %0 : vector<8x4xf32> to vector<8x4xbf16>
    %c0_1 = arith.constant 0 : index
    %c0_2 = arith.constant 0 : index
    %2 = vector.load %arg1[%c0_1, %c0_2] : memref<4x32xbf16, #tpu.memory_space<vmem>>, vector<4x32xbf16>
    %cst = arith.constant dense<0.000000e+00> : vector<8x32xf32>
    %3 = tpu.matmul %1, %2, %cst {dimension_numbers = #tpu.dot_dimension_numbers<[1], [0], [0], [1], [0, 0, 1, 1], [], []>} : vector<8x4xbf16>, vector<4x32xbf16>, vector<8x32xf32> -> vector<8x32xf32>
    %c0_3 = arith.constant 0 : index
    %c0_4 = arith.constant 0 : index
    %4 = vector.load %arg2[%c0_3, %c0_4] : memref<1x32xf32, #tpu.memory_space<vmem>>, vector<1x32xf32>
    %5 = vector.broadcast %4 : vector<1x32xf32> to vector<8x32xf32>
    %6 = arith.addf %3, %5 : vector<8x32xf32>
    %7 = arith.truncf %6 : vector<8x32xf32> to vector<8x32xbf16>
    %c0_5 = arith.constant 0 : index
    %c0_6 = arith.constant 0 : index
    %c0_7 = arith.constant 0 : index
    %8 = vector.load %arg3[%c0_5, %c0_6, %c0_7] : memref<2x32x96xbf16, #tpu.memory_space<vmem>>, vector<1x32x96xbf16>
    %9 = vector.shape_cast %8 : vector<1x32x96xbf16> to vector<32x96xbf16>
    %cst_8 = arith.constant dense<0.000000e+00> : vector<8x96xf32>
    %10 = tpu.matmul %7, %9, %cst_8 {dimension_numbers = #tpu.dot_dimension_numbers<[1], [0], [0], [1], [0, 0, 1, 1], [], []>} : vector<8x32xbf16>, vector<32x96xbf16>, vector<8x96xf32> -> vector<8x96xf32>
    %c0_9 = arith.constant 0 : index
    %c0_10 = arith.constant 0 : index
    %c0_11 = arith.constant 0 : index
    %11 = vector.load %arg4[%c0_9, %c0_10, %c0_11] : memref<2x1x96xf32, #tpu.memory_space<vmem>>, vector<1x1x96xf32>
    %12 = vector.shape_cast %11 : vector<1x1x96xf32> to vector<1x96xf32>
    %13 = vector.broadcast %12 : vector<1x96xf32> to vector<8x96xf32>
    %14 = arith.addf %10, %13 : vector<8x96xf32>
    %15 = vector.extract_strided_slice %14 {offsets = [0, 0], sizes = [8, 16], strides = [1, 1]} : vector<8x96xf32> to vector<8x16xf32>
    %16 = arith.truncf %15 : vector<8x16xf32> to vector<8x16xbf16>
    %17 = vector.extract_strided_slice %14 {offsets = [0, 32], sizes = [8, 16], strides = [1, 1]} : vector<8x96xf32> to vector<8x16xf32>
    %18 = arith.truncf %17 : vector<8x16xf32> to vector<8x16xbf16>
    %19 = vector.extract_strided_slice %14 {offsets = [0, 64], sizes = [8, 16], strides = [1, 1]} : vector<8x96xf32> to vector<8x16xf32>
    %20 = arith.truncf %19 : vector<8x16xf32> to vector<8x16xbf16>
    %cst_12 = arith.constant dense<0.000000e+00> : vector<8x8xf32>
    %21 = tpu.matmul %16, %18, %cst_12 {dimension_numbers = #tpu.dot_dimension_numbers<[1], [1], [0], [0], [0, 0, 1, 0], [], []>} : vector<8x16xbf16>, vector<8x16xbf16>, vector<8x8xf32> -> vector<8x8xf32>
    %cst_13 = arith.constant dense<0xFF800000> : vector<8xf32>
    %22 = vector.multi_reduction <maximumf>, %21, %cst_13 [1] : vector<8x8xf32> to vector<8xf32>
    %23 = vector.shape_cast %22 : vector<8xf32> to vector<8x1xf32>
    %24 = vector.broadcast %23 : vector<8x1xf32> to vector<8x8xf32>
    %25 = arith.subf %21, %24 : vector<8x8xf32>
    %26 = math.exp %25 : vector<8x8xf32>
    %27 = arith.truncf %26 : vector<8x8xf32> to vector<8x8xbf16>
    %cst_14 = arith.constant dense<0.000000e+00> : vector<8x16xf32>
    %28 = tpu.matmul %27, %20, %cst_14 {dimension_numbers = #tpu.dot_dimension_numbers<[1], [0], [0], [1], [0, 0, 1, 1], [], []>} : vector<8x8xbf16>, vector<8x16xbf16>, vector<8x16xf32> -> vector<8x16xf32>
    %cst_15 = arith.constant dense<0.000000e+00> : vector<8xf32>
    %29 = vector.multi_reduction <add>, %26, %cst_15 [1] : vector<8x8xf32> to vector<8xf32>
    %30 = vector.shape_cast %29 : vector<8xf32> to vector<8x1xf32>
    %31 = tpu.reciprocal %30 : vector<8x1xf32> -> vector<8x1xf32>
    %32 = vector.broadcast %31 : vector<8x1xf32> to vector<8x16xf32>
    %33 = arith.mulf %28, %32 : vector<8x16xf32>
    %34 = vector.extract_strided_slice %14 {offsets = [0, 16], sizes = [8, 16], strides = [1, 1]} : vector<8x96xf32> to vector<8x16xf32>
    %35 = arith.truncf %34 : vector<8x16xf32> to vector<8x16xbf16>
    %36 = vector.extract_strided_slice %14 {offsets = [0, 48], sizes = [8, 16], strides = [1, 1]} : vector<8x96xf32> to vector<8x16xf32>
    %37 = arith.truncf %36 : vector<8x16xf32> to vector<8x16xbf16>
    %38 = vector.extract_strided_slice %14 {offsets = [0, 80], sizes = [8, 16], strides = [1, 1]} : vector<8x96xf32> to vector<8x16xf32>
    %39 = arith.truncf %38 : vector<8x16xf32> to vector<8x16xbf16>
    %cst_16 = arith.constant dense<0.000000e+00> : vector<8x8xf32>
    %40 = tpu.matmul %35, %37, %cst_16 {dimension_numbers = #tpu.dot_dimension_numbers<[1], [1], [0], [0], [0, 0, 1, 0], [], []>} : vector<8x16xbf16>, vector<8x16xbf16>, vector<8x8xf32> -> vector<8x8xf32>
    %cst_17 = arith.constant dense<0xFF800000> : vector<8xf32>
    %41 = vector.multi_reduction <maximumf>, %40, %cst_17 [1] : vector<8x8xf32> to vector<8xf32>
    %42 = vector.shape_cast %41 : vector<8xf32> to vector<8x1xf32>
    %43 = vector.broadcast %42 : vector<8x1xf32> to vector<8x8xf32>
    %44 = arith.subf %40, %43 : vector<8x8xf32>
    %45 = math.exp %44 : vector<8x8xf32>
    %46 = arith.truncf %45 : vector<8x8xf32> to vector<8x8xbf16>
    %cst_18 = arith.constant dense<0.000000e+00> : vector<8x16xf32>
    %47 = tpu.matmul %46, %39, %cst_18 {dimension_numbers = #tpu.dot_dimension_numbers<[1], [0], [0], [1], [0, 0, 1, 1], [], []>} : vector<8x8xbf16>, vector<8x16xbf16>, vector<8x16xf32> -> vector<8x16xf32>
    %cst_19 = arith.constant dense<0.000000e+00> : vector<8xf32>
    %48 = vector.multi_reduction <add>, %45, %cst_19 [1] : vector<8x8xf32> to vector<8xf32>
    %49 = vector.shape_cast %48 : vector<8xf32> to vector<8x1xf32>
    %50 = tpu.reciprocal %49 : vector<8x1xf32> -> vector<8x1xf32>
    %51 = vector.broadcast %50 : vector<8x1xf32> to vector<8x16xf32>
    %52 = arith.mulf %47, %51 : vector<8x16xf32>
    %53 = tpu.concatenate %33, %52 in 1 : vector<8x16xf32>, vector<8x16xf32> -> vector<8x32xf32>
    %54 = arith.truncf %53 : vector<8x32xf32> to vector<8x32xbf16>
    %c0_20 = arith.constant 0 : index
    %c0_21 = arith.constant 0 : index
    %c0_22 = arith.constant 0 : index
    %55 = vector.load %arg5[%c0_20, %c0_21, %c0_22] : memref<2x32x32xbf16, #tpu.memory_space<vmem>>, vector<1x32x32xbf16>
    %56 = vector.shape_cast %55 : vector<1x32x32xbf16> to vector<32x32xbf16>
    %cst_23 = arith.constant dense<0.000000e+00> : vector<8x32xf32>
    %57 = tpu.matmul %54, %56, %cst_23 {dimension_numbers = #tpu.dot_dimension_numbers<[1], [0], [0], [1], [0, 0, 1, 1], [], []>} : vector<8x32xbf16>, vector<32x32xbf16>, vector<8x32xf32> -> vector<8x32xf32>
    %c0_24 = arith.constant 0 : index
    %c0_25 = arith.constant 0 : index
    %c0_26 = arith.constant 0 : index
    %58 = vector.load %arg6[%c0_24, %c0_25, %c0_26] : memref<2x1x32xf32, #tpu.memory_space<vmem>>, vector<1x1x32xf32>
    %59 = vector.shape_cast %58 : vector<1x1x32xf32> to vector<1x32xf32>
    %60 = vector.broadcast %59 : vector<1x32xf32> to vector<8x32xf32>
    %61 = arith.addf %57, %60 : vector<8x32xf32>
    %62 = arith.addf %6, %61 : vector<8x32xf32>
    %c0_27 = arith.constant 0 : index
    %c0_28 = arith.constant 0 : index
    %c0_29 = arith.constant 0 : index
    %63 = vector.load %arg11[%c0_27, %c0_28, %c0_29] : memref<2x1x32xf32, #tpu.memory_space<vmem>>, vector<1x1x32xf32>
    %64 = vector.shape_cast %63 : vector<1x1x32xf32> to vector<1x32xf32>
    %c0_30 = arith.constant 0 : index
    %c0_31 = arith.constant 0 : index
    %c0_32 = arith.constant 0 : index
    %65 = vector.load %arg12[%c0_30, %c0_31, %c0_32] : memref<2x1x32xf32, #tpu.memory_space<vmem>>, vector<1x1x32xf32>
    %66 = vector.shape_cast %65 : vector<1x1x32xf32> to vector<1x32xf32>
    %cst_33 = arith.constant dense<0.000000e+00> : vector<8xf32>
    %67 = vector.multi_reduction <add>, %62, %cst_33 [1] : vector<8x32xf32> to vector<8xf32>
    %68 = vector.shape_cast %67 : vector<8xf32> to vector<8x1xf32>
    %cst_34 = arith.constant 3.200000e+01 : f32
    %69 = vector.broadcast %cst_34 : f32 to vector<8x1xf32>
    %70 = arith.divf %68, %69 : vector<8x1xf32>
    %71 = vector.broadcast %70 : vector<8x1xf32> to vector<8x32xf32>
    %72 = arith.subf %62, %71 : vector<8x32xf32>
    %73 = arith.mulf %72, %72 : vector<8x32xf32>
    %cst_35 = arith.constant dense<0.000000e+00> : vector<8xf32>
    %74 = vector.multi_reduction <add>, %73, %cst_35 [1] : vector<8x32xf32> to vector<8xf32>
    %75 = vector.shape_cast %74 : vector<8xf32> to vector<8x1xf32>
    %cst_36 = arith.constant 3.200000e+01 : f32
    %76 = vector.broadcast %cst_36 : f32 to vector<8x1xf32>
    %77 = arith.divf %75, %76 : vector<8x1xf32>
    %78 = vector.broadcast %70 : vector<8x1xf32> to vector<8x32xf32>
    %79 = arith.subf %62, %78 : vector<8x32xf32>
    %cst_37 = arith.constant 9.99999974E-6 : f32
    %80 = vector.broadcast %cst_37 : f32 to vector<8x1xf32>
    %81 = arith.addf %77, %80 : vector<8x1xf32>
    %82 = math.rsqrt %81 : vector<8x1xf32>
    %83 = vector.broadcast %82 : vector<8x1xf32> to vector<8x32xf32>
    %84 = arith.mulf %79, %83 : vector<8x32xf32>
    %85 = vector.broadcast %64 : vector<1x32xf32> to vector<8x32xf32>
    %86 = arith.mulf %84, %85 : vector<8x32xf32>
    %87 = vector.broadcast %66 : vector<1x32xf32> to vector<8x32xf32>
    %88 = arith.addf %86, %87 : vector<8x32xf32>
    %89 = arith.truncf %88 : vector<8x32xf32> to vector<8x32xbf16>
    %c0_38 = arith.constant 0 : index
    %c0_39 = arith.constant 0 : index
    %c0_40 = arith.constant 0 : index
    %90 = vector.load %arg7[%c0_38, %c0_39, %c0_40] : memref<2x32x2048xbf16, #tpu.memory_space<vmem>>, vector<1x32x2048xbf16>
    %91 = vector.shape_cast %90 : vector<1x32x2048xbf16> to vector<32x2048xbf16>
    %cst_41 = arith.constant dense<0.000000e+00> : vector<8x2048xf32>
    %92 = tpu.matmul %89, %91, %cst_41 {dimension_numbers = #tpu.dot_dimension_numbers<[1], [0], [0], [1], [0, 0, 1, 1], [], []>} : vector<8x32xbf16>, vector<32x2048xbf16>, vector<8x2048xf32> -> vector<8x2048xf32>
    %c0_42 = arith.constant 0 : index
    %c0_43 = arith.constant 0 : index
    %c0_44 = arith.constant 0 : index
    %93 = vector.load %arg8[%c0_42, %c0_43, %c0_44] : memref<2x1x2048xf32, #tpu.memory_space<vmem>>, vector<1x1x2048xf32>
    %94 = vector.shape_cast %93 : vector<1x1x2048xf32> to vector<1x2048xf32>
    %95 = vector.broadcast %94 : vector<1x2048xf32> to vector<8x2048xf32>
    %96 = arith.addf %92, %95 : vector<8x2048xf32>
    %cst_45 = arith.constant 0.000000e+00 : f32
    %97 = vector.broadcast %cst_45 : f32 to vector<8x2048xf32>
    %98 = arith.maximumf %96, %97 : vector<8x2048xf32>
    %99 = arith.truncf %98 : vector<8x2048xf32> to vector<8x2048xbf16>
    %c0_46 = arith.constant 0 : index
    %c0_47 = arith.constant 0 : index
    %c0_48 = arith.constant 0 : index
    %100 = vector.load %arg9[%c0_46, %c0_47, %c0_48] : memref<2x2048x32xbf16, #tpu.memory_space<vmem>>, vector<1x2048x32xbf16>
    %101 = vector.shape_cast %100 : vector<1x2048x32xbf16> to vector<2048x32xbf16>
    %cst_49 = arith.constant dense<0.000000e+00> : vector<8x32xf32>
    %102 = tpu.matmul %99, %101, %cst_49 {dimension_numbers = #tpu.dot_dimension_numbers<[1], [0], [0], [1], [0, 0, 1, 1], [], []>} : vector<8x2048xbf16>, vector<2048x32xbf16>, vector<8x32xf32> -> vector<8x32xf32>
    %c0_50 = arith.constant 0 : index
    %c0_51 = arith.constant 0 : index
    %c0_52 = arith.constant 0 : index
    %103 = vector.load %arg10[%c0_50, %c0_51, %c0_52] : memref<2x1x32xf32, #tpu.memory_space<vmem>>, vector<1x1x32xf32>
    %104 = vector.shape_cast %103 : vector<1x1x32xf32> to vector<1x32xf32>
    %105 = vector.broadcast %104 : vector<1x32xf32> to vector<8x32xf32>
    %106 = arith.addf %102, %105 : vector<8x32xf32>
    %107 = arith.addf %88, %106 : vector<8x32xf32>
    %c0_53 = arith.constant 0 : index
    %c0_54 = arith.constant 0 : index
    %c0_55 = arith.constant 0 : index
    %108 = vector.load %arg13[%c0_53, %c0_54, %c0_55] : memref<2x1x32xf32, #tpu.memory_space<vmem>>, vector<1x1x32xf32>
    %109 = vector.shape_cast %108 : vector<1x1x32xf32> to vector<1x32xf32>
    %c0_56 = arith.constant 0 : index
    %c0_57 = arith.constant 0 : index
    %c0_58 = arith.constant 0 : index
    %110 = vector.load %arg14[%c0_56, %c0_57, %c0_58] : memref<2x1x32xf32, #tpu.memory_space<vmem>>, vector<1x1x32xf32>
    %111 = vector.shape_cast %110 : vector<1x1x32xf32> to vector<1x32xf32>
    %cst_59 = arith.constant dense<0.000000e+00> : vector<8xf32>
    %112 = vector.multi_reduction <add>, %107, %cst_59 [1] : vector<8x32xf32> to vector<8xf32>
    %113 = vector.shape_cast %112 : vector<8xf32> to vector<8x1xf32>
    %cst_60 = arith.constant 3.200000e+01 : f32
    %114 = vector.broadcast %cst_60 : f32 to vector<8x1xf32>
    %115 = arith.divf %113, %114 : vector<8x1xf32>
    %116 = vector.broadcast %115 : vector<8x1xf32> to vector<8x32xf32>
    %117 = arith.subf %107, %116 : vector<8x32xf32>
    %118 = arith.mulf %117, %117 : vector<8x32xf32>
    %cst_61 = arith.constant dense<0.000000e+00> : vector<8xf32>
    %119 = vector.multi_reduction <add>, %118, %cst_61 [1] : vector<8x32xf32> to vector<8xf32>
    %120 = vector.shape_cast %119 : vector<8xf32> to vector<8x1xf32>
    %cst_62 = arith.constant 3.200000e+01 : f32
    %121 = vector.broadcast %cst_62 : f32 to vector<8x1xf32>
    %122 = arith.divf %120, %121 : vector<8x1xf32>
    %123 = vector.broadcast %115 : vector<8x1xf32> to vector<8x32xf32>
    %124 = arith.subf %107, %123 : vector<8x32xf32>
    %cst_63 = arith.constant 9.99999974E-6 : f32
    %125 = vector.broadcast %cst_63 : f32 to vector<8x1xf32>
    %126 = arith.addf %122, %125 : vector<8x1xf32>
    %127 = math.rsqrt %126 : vector<8x1xf32>
    %128 = vector.broadcast %127 : vector<8x1xf32> to vector<8x32xf32>
    %129 = arith.mulf %124, %128 : vector<8x32xf32>
    %130 = vector.broadcast %109 : vector<1x32xf32> to vector<8x32xf32>
    %131 = arith.mulf %129, %130 : vector<8x32xf32>
    %132 = vector.broadcast %111 : vector<1x32xf32> to vector<8x32xf32>
    %133 = arith.addf %131, %132 : vector<8x32xf32>
    %134 = arith.truncf %133 : vector<8x32xf32> to vector<8x32xbf16>
    %c1 = arith.constant 1 : index
    %c0_64 = arith.constant 0 : index
    %c0_65 = arith.constant 0 : index
    %135 = vector.load %arg3[%c1, %c0_64, %c0_65] : memref<2x32x96xbf16, #tpu.memory_space<vmem>>, vector<1x32x96xbf16>
    %136 = vector.shape_cast %135 : vector<1x32x96xbf16> to vector<32x96xbf16>
    %cst_66 = arith.constant dense<0.000000e+00> : vector<8x96xf32>
    %137 = tpu.matmul %134, %136, %cst_66 {dimension_numbers = #tpu.dot_dimension_numbers<[1], [0], [0], [1], [0, 0, 1, 1], [], []>} : vector<8x32xbf16>, vector<32x96xbf16>, vector<8x96xf32> -> vector<8x96xf32>
    %c1_67 = arith.constant 1 : index
    %c0_68 = arith.constant 0 : index
    %c0_69 = arith.constant 0 : index
    %138 = vector.load %arg4[%c1_67, %c0_68, %c0_69] : memref<2x1x96xf32, #tpu.memory_space<vmem>>, vector<1x1x96xf32>
    %139 = vector.shape_cast %138 : vector<1x1x96xf32> to vector<1x96xf32>
    %140 = vector.broadcast %139 : vector<1x96xf32> to vector<8x96xf32>
    %141 = arith.addf %137, %140 : vector<8x96xf32>
    %142 = vector.extract_strided_slice %141 {offsets = [0, 0], sizes = [8, 16], strides = [1, 1]} : vector<8x96xf32> to vector<8x16xf32>
    %143 = arith.truncf %142 : vector<8x16xf32> to vector<8x16xbf16>
    %144 = vector.extract_strided_slice %141 {offsets = [0, 32], sizes = [8, 16], strides = [1, 1]} : vector<8x96xf32> to vector<8x16xf32>
    %145 = arith.truncf %144 : vector<8x16xf32> to vector<8x16xbf16>
    %146 = vector.extract_strided_slice %141 {offsets = [0, 64], sizes = [8, 16], strides = [1, 1]} : vector<8x96xf32> to vector<8x16xf32>
    %147 = arith.truncf %146 : vector<8x16xf32> to vector<8x16xbf16>
    %cst_70 = arith.constant dense<0.000000e+00> : vector<8x8xf32>
    %148 = tpu.matmul %143, %145, %cst_70 {dimension_numbers = #tpu.dot_dimension_numbers<[1], [1], [0], [0], [0, 0, 1, 0], [], []>} : vector<8x16xbf16>, vector<8x16xbf16>, vector<8x8xf32> -> vector<8x8xf32>
    %cst_71 = arith.constant dense<0xFF800000> : vector<8xf32>
    %149 = vector.multi_reduction <maximumf>, %148, %cst_71 [1] : vector<8x8xf32> to vector<8xf32>
    %150 = vector.shape_cast %149 : vector<8xf32> to vector<8x1xf32>
    %151 = vector.broadcast %150 : vector<8x1xf32> to vector<8x8xf32>
    %152 = arith.subf %148, %151 : vector<8x8xf32>
    %153 = math.exp %152 : vector<8x8xf32>
    %154 = arith.truncf %153 : vector<8x8xf32> to vector<8x8xbf16>
    %cst_72 = arith.constant dense<0.000000e+00> : vector<8x16xf32>
    %155 = tpu.matmul %154, %147, %cst_72 {dimension_numbers = #tpu.dot_dimension_numbers<[1], [0], [0], [1], [0, 0, 1, 1], [], []>} : vector<8x8xbf16>, vector<8x16xbf16>, vector<8x16xf32> -> vector<8x16xf32>
    %cst_73 = arith.constant dense<0.000000e+00> : vector<8xf32>
    %156 = vector.multi_reduction <add>, %153, %cst_73 [1] : vector<8x8xf32> to vector<8xf32>
    %157 = vector.shape_cast %156 : vector<8xf32> to vector<8x1xf32>
    %158 = tpu.reciprocal %157 : vector<8x1xf32> -> vector<8x1xf32>
    %159 = vector.broadcast %158 : vector<8x1xf32> to vector<8x16xf32>
    %160 = arith.mulf %155, %159 : vector<8x16xf32>
    %161 = vector.extract_strided_slice %141 {offsets = [0, 16], sizes = [8, 16], strides = [1, 1]} : vector<8x96xf32> to vector<8x16xf32>
    %162 = arith.truncf %161 : vector<8x16xf32> to vector<8x16xbf16>
    %163 = vector.extract_strided_slice %141 {offsets = [0, 48], sizes = [8, 16], strides = [1, 1]} : vector<8x96xf32> to vector<8x16xf32>
    %164 = arith.truncf %163 : vector<8x16xf32> to vector<8x16xbf16>
    %165 = vector.extract_strided_slice %141 {offsets = [0, 80], sizes = [8, 16], strides = [1, 1]} : vector<8x96xf32> to vector<8x16xf32>
    %166 = arith.truncf %165 : vector<8x16xf32> to vector<8x16xbf16>
    %cst_74 = arith.constant dense<0.000000e+00> : vector<8x8xf32>
    %167 = tpu.matmul %162, %164, %cst_74 {dimension_numbers = #tpu.dot_dimension_numbers<[1], [1], [0], [0], [0, 0, 1, 0], [], []>} : vector<8x16xbf16>, vector<8x16xbf16>, vector<8x8xf32> -> vector<8x8xf32>
    %cst_75 = arith.constant dense<0xFF800000> : vector<8xf32>
    %168 = vector.multi_reduction <maximumf>, %167, %cst_75 [1] : vector<8x8xf32> to vector<8xf32>
    %169 = vector.shape_cast %168 : vector<8xf32> to vector<8x1xf32>
    %170 = vector.broadcast %169 : vector<8x1xf32> to vector<8x8xf32>
    %171 = arith.subf %167, %170 : vector<8x8xf32>
    %172 = math.exp %171 : vector<8x8xf32>
    %173 = arith.truncf %172 : vector<8x8xf32> to vector<8x8xbf16>
    %cst_76 = arith.constant dense<0.000000e+00> : vector<8x16xf32>
    %174 = tpu.matmul %173, %166, %cst_76 {dimension_numbers = #tpu.dot_dimension_numbers<[1], [0], [0], [1], [0, 0, 1, 1], [], []>} : vector<8x8xbf16>, vector<8x16xbf16>, vector<8x16xf32> -> vector<8x16xf32>
    %cst_77 = arith.constant dense<0.000000e+00> : vector<8xf32>
    %175 = vector.multi_reduction <add>, %172, %cst_77 [1] : vector<8x8xf32> to vector<8xf32>
    %176 = vector.shape_cast %175 : vector<8xf32> to vector<8x1xf32>
    %177 = tpu.reciprocal %176 : vector<8x1xf32> -> vector<8x1xf32>
    %178 = vector.broadcast %177 : vector<8x1xf32> to vector<8x16xf32>
    %179 = arith.mulf %174, %178 : vector<8x16xf32>
    %180 = tpu.concatenate %160, %179 in 1 : vector<8x16xf32>, vector<8x16xf32> -> vector<8x32xf32>
    %181 = arith.truncf %180 : vector<8x32xf32> to vector<8x32xbf16>
    %c1_78 = arith.constant 1 : index
    %c0_79 = arith.constant 0 : index
    %c0_80 = arith.constant 0 : index
    %182 = vector.load %arg5[%c1_78, %c0_79, %c0_80] : memref<2x32x32xbf16, #tpu.memory_space<vmem>>, vector<1x32x32xbf16>
    %183 = vector.shape_cast %182 : vector<1x32x32xbf16> to vector<32x32xbf16>
    %cst_81 = arith.constant dense<0.000000e+00> : vector<8x32xf32>
    %184 = tpu.matmul %181, %183, %cst_81 {dimension_numbers = #tpu.dot_dimension_numbers<[1], [0], [0], [1], [0, 0, 1, 1], [], []>} : vector<8x32xbf16>, vector<32x32xbf16>, vector<8x32xf32> -> vector<8x32xf32>
    %c1_82 = arith.constant 1 : index
    %c0_83 = arith.constant 0 : index
    %c0_84 = arith.constant 0 : index
    %185 = vector.load %arg6[%c1_82, %c0_83, %c0_84] : memref<2x1x32xf32, #tpu.memory_space<vmem>>, vector<1x1x32xf32>
    %186 = vector.shape_cast %185 : vector<1x1x32xf32> to vector<1x32xf32>
    %187 = vector.broadcast %186 : vector<1x32xf32> to vector<8x32xf32>
    %188 = arith.addf %184, %187 : vector<8x32xf32>
    %189 = arith.addf %133, %188 : vector<8x32xf32>
    %c1_85 = arith.constant 1 : index
    %c0_86 = arith.constant 0 : index
    %c0_87 = arith.constant 0 : index
    %190 = vector.load %arg11[%c1_85, %c0_86, %c0_87] : memref<2x1x32xf32, #tpu.memory_space<vmem>>, vector<1x1x32xf32>
    %191 = vector.shape_cast %190 : vector<1x1x32xf32> to vector<1x32xf32>
    %c1_88 = arith.constant 1 : index
    %c0_89 = arith.constant 0 : index
    %c0_90 = arith.constant 0 : index
    %192 = vector.load %arg12[%c1_88, %c0_89, %c0_90] : memref<2x1x32xf32, #tpu.memory_space<vmem>>, vector<1x1x32xf32>
    %193 = vector.shape_cast %192 : vector<1x1x32xf32> to vector<1x32xf32>
    %cst_91 = arith.constant dense<0.000000e+00> : vector<8xf32>
    %194 = vector.multi_reduction <add>, %189, %cst_91 [1] : vector<8x32xf32> to vector<8xf32>
    %195 = vector.shape_cast %194 : vector<8xf32> to vector<8x1xf32>
    %cst_92 = arith.constant 3.200000e+01 : f32
    %196 = vector.broadcast %cst_92 : f32 to vector<8x1xf32>
    %197 = arith.divf %195, %196 : vector<8x1xf32>
    %198 = vector.broadcast %197 : vector<8x1xf32> to vector<8x32xf32>
    %199 = arith.subf %189, %198 : vector<8x32xf32>
    %200 = arith.mulf %199, %199 : vector<8x32xf32>
    %cst_93 = arith.constant dense<0.000000e+00> : vector<8xf32>
    %201 = vector.multi_reduction <add>, %200, %cst_93 [1] : vector<8x32xf32> to vector<8xf32>
    %202 = vector.shape_cast %201 : vector<8xf32> to vector<8x1xf32>
    %cst_94 = arith.constant 3.200000e+01 : f32
    %203 = vector.broadcast %cst_94 : f32 to vector<8x1xf32>
    %204 = arith.divf %202, %203 : vector<8x1xf32>
    %205 = vector.broadcast %197 : vector<8x1xf32> to vector<8x32xf32>
    %206 = arith.subf %189, %205 : vector<8x32xf32>
    %cst_95 = arith.constant 9.99999974E-6 : f32
    %207 = vector.broadcast %cst_95 : f32 to vector<8x1xf32>
    %208 = arith.addf %204, %207 : vector<8x1xf32>
    %209 = math.rsqrt %208 : vector<8x1xf32>
    %210 = vector.broadcast %209 : vector<8x1xf32> to vector<8x32xf32>
    %211 = arith.mulf %206, %210 : vector<8x32xf32>
    %212 = vector.broadcast %191 : vector<1x32xf32> to vector<8x32xf32>
    %213 = arith.mulf %211, %212 : vector<8x32xf32>
    %214 = vector.broadcast %193 : vector<1x32xf32> to vector<8x32xf32>
    %215 = arith.addf %213, %214 : vector<8x32xf32>
    %216 = arith.truncf %215 : vector<8x32xf32> to vector<8x32xbf16>
    %c1_96 = arith.constant 1 : index
    %c0_97 = arith.constant 0 : index
    %c0_98 = arith.constant 0 : index
    %217 = vector.load %arg7[%c1_96, %c0_97, %c0_98] : memref<2x32x2048xbf16, #tpu.memory_space<vmem>>, vector<1x32x2048xbf16>
    %218 = vector.shape_cast %217 : vector<1x32x2048xbf16> to vector<32x2048xbf16>
    %cst_99 = arith.constant dense<0.000000e+00> : vector<8x2048xf32>
    %219 = tpu.matmul %216, %218, %cst_99 {dimension_numbers = #tpu.dot_dimension_numbers<[1], [0], [0], [1], [0, 0, 1, 1], [], []>} : vector<8x32xbf16>, vector<32x2048xbf16>, vector<8x2048xf32> -> vector<8x2048xf32>
    %c1_100 = arith.constant 1 : index
    %c0_101 = arith.constant 0 : index
    %c0_102 = arith.constant 0 : index
    %220 = vector.load %arg8[%c1_100, %c0_101, %c0_102] : memref<2x1x2048xf32, #tpu.memory_space<vmem>>, vector<1x1x2048xf32>
    %221 = vector.shape_cast %220 : vector<1x1x2048xf32> to vector<1x2048xf32>
    %222 = vector.broadcast %221 : vector<1x2048xf32> to vector<8x2048xf32>
    %223 = arith.addf %219, %222 : vector<8x2048xf32>
    %cst_103 = arith.constant 0.000000e+00 : f32
    %224 = vector.broadcast %cst_103 : f32 to vector<8x2048xf32>
    %225 = arith.maximumf %223, %224 : vector<8x2048xf32>
    %226 = arith.truncf %225 : vector<8x2048xf32> to vector<8x2048xbf16>
    %c1_104 = arith.constant 1 : index
    %c0_105 = arith.constant 0 : index
    %c0_106 = arith.constant 0 : index
    %227 = vector.load %arg9[%c1_104, %c0_105, %c0_106] : memref<2x2048x32xbf16, #tpu.memory_space<vmem>>, vector<1x2048x32xbf16>
    %228 = vector.shape_cast %227 : vector<1x2048x32xbf16> to vector<2048x32xbf16>
    %cst_107 = arith.constant dense<0.000000e+00> : vector<8x32xf32>
    %229 = tpu.matmul %226, %228, %cst_107 {dimension_numbers = #tpu.dot_dimension_numbers<[1], [0], [0], [1], [0, 0, 1, 1], [], []>} : vector<8x2048xbf16>, vector<2048x32xbf16>, vector<8x32xf32> -> vector<8x32xf32>
    %c1_108 = arith.constant 1 : index
    %c0_109 = arith.constant 0 : index
    %c0_110 = arith.constant 0 : index
    %230 = vector.load %arg10[%c1_108, %c0_109, %c0_110] : memref<2x1x32xf32, #tpu.memory_space<vmem>>, vector<1x1x32xf32>
    %231 = vector.shape_cast %230 : vector<1x1x32xf32> to vector<1x32xf32>
    %232 = vector.broadcast %231 : vector<1x32xf32> to vector<8x32xf32>
    %233 = arith.addf %229, %232 : vector<8x32xf32>
    %234 = arith.addf %215, %233 : vector<8x32xf32>
    %c1_111 = arith.constant 1 : index
    %c0_112 = arith.constant 0 : index
    %c0_113 = arith.constant 0 : index
    %235 = vector.load %arg13[%c1_111, %c0_112, %c0_113] : memref<2x1x32xf32, #tpu.memory_space<vmem>>, vector<1x1x32xf32>
    %236 = vector.shape_cast %235 : vector<1x1x32xf32> to vector<1x32xf32>
    %c1_114 = arith.constant 1 : index
    %c0_115 = arith.constant 0 : index
    %c0_116 = arith.constant 0 : index
    %237 = vector.load %arg14[%c1_114, %c0_115, %c0_116] : memref<2x1x32xf32, #tpu.memory_space<vmem>>, vector<1x1x32xf32>
    %238 = vector.shape_cast %237 : vector<1x1x32xf32> to vector<1x32xf32>
    %cst_117 = arith.constant dense<0.000000e+00> : vector<8xf32>
    %239 = vector.multi_reduction <add>, %234, %cst_117 [1] : vector<8x32xf32> to vector<8xf32>
    %240 = vector.shape_cast %239 : vector<8xf32> to vector<8x1xf32>
    %cst_118 = arith.constant 3.200000e+01 : f32
    %241 = vector.broadcast %cst_118 : f32 to vector<8x1xf32>
    %242 = arith.divf %240, %241 : vector<8x1xf32>
    %243 = vector.broadcast %242 : vector<8x1xf32> to vector<8x32xf32>
    %244 = arith.subf %234, %243 : vector<8x32xf32>
    %245 = arith.mulf %244, %244 : vector<8x32xf32>
    %cst_119 = arith.constant dense<0.000000e+00> : vector<8xf32>
    %246 = vector.multi_reduction <add>, %245, %cst_119 [1] : vector<8x32xf32> to vector<8xf32>
    %247 = vector.shape_cast %246 : vector<8xf32> to vector<8x1xf32>
    %cst_120 = arith.constant 3.200000e+01 : f32
    %248 = vector.broadcast %cst_120 : f32 to vector<8x1xf32>
    %249 = arith.divf %247, %248 : vector<8x1xf32>
    %250 = vector.broadcast %242 : vector<8x1xf32> to vector<8x32xf32>
    %251 = arith.subf %234, %250 : vector<8x32xf32>
    %cst_121 = arith.constant 9.99999974E-6 : f32
    %252 = vector.broadcast %cst_121 : f32 to vector<8x1xf32>
    %253 = arith.addf %249, %252 : vector<8x1xf32>
    %254 = math.rsqrt %253 : vector<8x1xf32>
    %255 = vector.broadcast %254 : vector<8x1xf32> to vector<8x32xf32>
    %256 = arith.mulf %251, %255 : vector<8x32xf32>
    %257 = vector.broadcast %236 : vector<1x32xf32> to vector<8x32xf32>
    %258 = arith.mulf %256, %257 : vector<8x32xf32>
    %259 = vector.broadcast %238 : vector<1x32xf32> to vector<8x32xf32>
    %260 = arith.addf %258, %259 : vector<8x32xf32>
    %c0_122 = arith.constant 0 : index
    %c0_123 = arith.constant 0 : index
    %261 = vector.load %arg15[%c0_122, %c0_123] : memref<1x32xbf16, #tpu.memory_space<vmem>>, vector<1x32xbf16>
    %262 = arith.truncf %260 : vector<8x32xf32> to vector<8x32xbf16>
    %cst_124 = arith.constant dense<0.000000e+00> : vector<1x8xf32>
    %263 = tpu.matmul %261, %262, %cst_124 {dimension_numbers = #tpu.dot_dimension_numbers<[1], [1], [0], [0], [0, 0, 1, 0], [], []>} : vector<1x32xbf16>, vector<8x32xbf16>, vector<1x8xf32> -> vector<1x8xf32>
    %c0_125 = arith.constant 0 : index
    %c0_126 = arith.constant 0 : index
    %264 = vector.load %arg16[%c0_125, %c0_126] : memref<1x1xf32, #tpu.memory_space<vmem>>, vector<1x1xf32>
    %265 = vector.broadcast %264 : vector<1x1xf32> to vector<1x8xf32>
    %266 = arith.addf %263, %265 : vector<1x8xf32>
    %267 = arith.negf %266 : vector<1x8xf32>
    %268 = math.exp %267 : vector<1x8xf32>
    %cst_127 = arith.constant 1.000000e+00 : f32
    %269 = vector.broadcast %cst_127 : f32 to vector<1x8xf32>
    %270 = arith.addf %269, %268 : vector<1x8xf32>
    %271 = arith.divf %269, %270 : vector<1x8xf32>
    %c0_128 = arith.constant 0 : index
    %c0_129 = arith.constant 0 : index
    %272 = vector.load %arg17[%c0_128, %c0_129] : memref<1x8xf32, #tpu.memory_space<vmem>>, vector<1x8xf32>
    tpu.vector_store %arg17[%c0_128, %c0_129], %271 {strides = array<i32>} : memref<1x8xf32, #tpu.memory_space<vmem>>, vector<1x8xf32>,
    return
  }
}

</mosaic_0001>

<llo_original>
// kernel: diabetes_transformer.1
$region0: #{diabetes_transformer.1}
  #allocation0 [shape = 'u32[]', space=smem, size = 0x4, offset = 0x4, fixed_abs, tag = 'smem constant byte address 0x4 - core index']
  #allocation1 [shape = 'u32[144,128]{1,0:T(1,128)}', space=vmem, size = 0x12000, scoped, tag = 'internal scratch']
  #allocation2 [shape = 'f32[1,1]{1,0:T(1,128)S(1)}', space=vmem, size = 0x200, scoped, tag = 'scoped memory for diabetes_transformer.1']
  %s0 = inlined_call_operand.vmem [shape: f32[8,4], index: 0, kind: input, shape index: {}]
  %s1 = inlined_call_operand.vmem [shape: bf16[4,32], index: 1, kind: input, shape index: {}]
  %s2 = inlined_call_operand.vmem [shape: f32[1,32], index: 2, kind: input, shape index: {}]
  %s3 = inlined_call_operand.vmem [shape: bf16[2,32,96], index: 3, kind: input, shape index: {}]
  %s4 = inlined_call_operand.vmem [shape: f32[2,1,96], index: 4, kind: input, shape index: {}]
  %s5 = inlined_call_operand.vmem [shape: bf16[2,32,32], index: 5, kind: input, shape index: {}]
  %s6 = inlined_call_operand.vmem [shape: f32[2,1,32], index: 6, kind: input, shape index: {}]
  %s7 = inlined_call_operand.vmem [shape: bf16[2,32,2048], index: 7, kind: input, shape index: {}]
  %s8 = inlined_call_operand.vmem [shape: f32[2,1,2048], index: 8, kind: input, shape index: {}]
  %s9 = inlined_call_operand.vmem [shape: bf16[2,2048,32], index: 9, kind: input, shape index: {}]
  %s10 = inlined_call_operand.vmem [shape: f32[2,1,32], index: 10, kind: input, shape index: {}]
  %s11 = inlined_call_operand.vmem [shape: f32[2,1,32], index: 11, kind: input, shape index: {}]
  %s12 = inlined_call_operand.vmem [shape: f32[2,1,32], index: 12, kind: input, shape index: {}]
  %s13 = inlined_call_operand.vmem [shape: f32[2,1,32], index: 13, kind: input, shape index: {}]
  %s14 = inlined_call_operand.vmem [shape: f32[2,1,32], index: 14, kind: input, shape index: {}]
  %s15 = inlined_call_operand.vmem [shape: bf16[1,32], index: 15, kind: input, shape index: {}]
  %s16 = inlined_call_operand.<no memory space> [shape: f32[1,1], index: 16, kind: input, shape index: {}]
  %s17 = inlined_call_operand.hbm [shape: f32[1,8], index: 17, kind: output, shape index: {}]
  %s18 = sld [smem:[#allocation0]]
  $region78: #{diabetes_transformer.1} parent=0
    _
  %s20 = ssub.s32 1, %s18
  %s21 = scalar_select 0, %s20, %s18
  %v22 = vstv %s16
  %23 = vst [vmem:[#allocation2] sm:$0x1] %v22
  $region1: #{diabetes_transformer.1} parent=0
    #allocation3 [shape = 'u8[512]{0}', space=vmem, size = 0x400, scoped, tag = 'output window, operand 0, single buffered']
    #allocation4 [shape = 's32[1]{0}', space=sflag, size = 0x4, scoped, tag = 'scoped memory for diabetes_transformer.1']
    %24 = vsyncpa [#allocation4], 0
    // Predicated region
    $region2: #{diabetes_transformer.1} parent=1 // pred_check
      _
    $region3: #{diabetes_transformer.1} parent=1 // pred_check_branch
      %26 = sbr.rel (0) target = $region5
    $region4: #{diabetes_transformer.1} parent=1 // pred_region
      _
    $region5: #{diabetes_transformer.1} parent=1 // pred_fallthru
      _
    // Predicated region
    $region6: #{diabetes_transformer.1} parent=1 // pred_check
      _
    $region7: #{diabetes_transformer.1} parent=1 // pred_check_branch
      %28 = sbr.rel (0) target = $region9
    $region8: #{diabetes_transformer.1} parent=1 // pred_region
      _
    $region9: #{diabetes_transformer.1} parent=1 // pred_fallthru
      _
    // Predicated region
    $region10: #{diabetes_transformer.1} parent=1 // pred_check
      _
    $region11: #{diabetes_transformer.1} parent=1 // pred_check_branch
      %30 = sbr.rel (0) target = $region13
    $region12: #{diabetes_transformer.1} parent=1 // pred_region
      _
    $region13: #{diabetes_transformer.1} parent=1 // pred_fallthru
      _
    // Predicated region
    $region14: #{diabetes_transformer.1} parent=1 // pred_check
      _
    $region15: #{diabetes_transformer.1} parent=1 // pred_check_branch
      %32 = sbr.rel (0) target = $region17
    $region16: #{diabetes_transformer.1} parent=1 // pred_region
      _
    $region17: #{diabetes_transformer.1} parent=1 // pred_fallthru
      _
    // Predicated region
    $region18: #{diabetes_transformer.1} parent=1 // pred_check
      _
    $region19: #{diabetes_transformer.1} parent=1 // pred_check_branch
      %34 = sbr.rel (0) target = $region21
    $region20: #{diabetes_transformer.1} parent=1 // pred_region
      _
    $region21: #{diabetes_transformer.1} parent=1 // pred_fallthru
      _
    // Predicated region
    $region22: #{diabetes_transformer.1} parent=1 // pred_check
      _
    $region23: #{diabetes_transformer.1} parent=1 // pred_check_branch
      %36 = sbr.rel (0) target = $region25
    $region24: #{diabetes_transformer.1} parent=1 // pred_region
      _
    $region25: #{diabetes_transformer.1} parent=1 // pred_fallthru
      _
    // Predicated region
    $region26: #{diabetes_transformer.1} parent=1 // pred_check
      _
    $region27: #{diabetes_transformer.1} parent=1 // pred_check_branch
      %38 = sbr.rel (0) target = $region29
    $region28: #{diabetes_transformer.1} parent=1 // pred_region
      _
    $region29: #{diabetes_transformer.1} parent=1 // pred_fallthru
      _
    // Predicated region
    $region30: #{diabetes_transformer.1} parent=1 // pred_check
      _
    $region31: #{diabetes_transformer.1} parent=1 // pred_check_branch
      %40 = sbr.rel (0) target = $region33
    $region32: #{diabetes_transformer.1} parent=1 // pred_region
      _
    $region33: #{diabetes_transformer.1} parent=1 // pred_fallthru
      _
    // Predicated region
    $region34: #{diabetes_transformer.1} parent=1 // pred_check
      _
    $region35: #{diabetes_transformer.1} parent=1 // pred_check_branch
      %42 = sbr.rel (0) target = $region37
    $region36: #{diabetes_transformer.1} parent=1 // pred_region
      _
    $region37: #{diabetes_transformer.1} parent=1 // pred_fallthru
      _
    // Predicated region
    $region38: #{diabetes_transformer.1} parent=1 // pred_check
      _
    $region39: #{diabetes_transformer.1} parent=1 // pred_check_branch
      %44 = sbr.rel (0) target = $region41
    $region40: #{diabetes_transformer.1} parent=1 // pred_region
      _
    $region41: #{diabetes_transformer.1} parent=1 // pred_fallthru
      _
    // Predicated region
    $region42: #{diabetes_transformer.1} parent=1 // pred_check
      _
    $region43: #{diabetes_transformer.1} parent=1 // pred_check_branch
      %46 = sbr.rel (0) target = $region45
    $region44: #{diabetes_transformer.1} parent=1 // pred_region
      _
    $region45: #{diabetes_transformer.1} parent=1 // pred_fallthru
      _
    // Predicated region
    $region46: #{diabetes_transformer.1} parent=1 // pred_check
      _
    $region47: #{diabetes_transformer.1} parent=1 // pred_check_branch
      %48 = sbr.rel (0) target = $region49
    $region48: #{diabetes_transformer.1} parent=1 // pred_region
      _
    $region49: #{diabetes_transformer.1} parent=1 // pred_fallthru
      _
    // Predicated region
    $region50: #{diabetes_transformer.1} parent=1 // pred_check
      _
    $region51: #{diabetes_transformer.1} parent=1 // pred_check_branch
      %50 = sbr.rel (0) target = $region53
    $region52: #{diabetes_transformer.1} parent=1 // pred_region
      _
    $region53: #{diabetes_transformer.1} parent=1 // pred_fallthru
      _
    // Predicated region
    $region54: #{diabetes_transformer.1} parent=1 // pred_check
      _
    $region55: #{diabetes_transformer.1} parent=1 // pred_check_branch
      %52 = sbr.rel (0) target = $region57
    $region56: #{diabetes_transformer.1} parent=1 // pred_region
      _
    $region57: #{diabetes_transformer.1} parent=1 // pred_fallthru
      _
    // Predicated region
    $region58: #{diabetes_transformer.1} parent=1 // pred_check
      _
    $region59: #{diabetes_transformer.1} parent=1 // pred_check_branch
      %54 = sbr.rel (0) target = $region61
    $region60: #{diabetes_transformer.1} parent=1 // pred_region
      _
    $region61: #{diabetes_transformer.1} parent=1 // pred_fallthru
      _
    // Predicated region
    $region62: #{diabetes_transformer.1} parent=1 // pred_check
      _
    $region63: #{diabetes_transformer.1} parent=1 // pred_check_branch
      %56 = sbr.rel (0) target = $region65
    $region64: #{diabetes_transformer.1} parent=1 // pred_region
      _
    $region65: #{diabetes_transformer.1} parent=1 // pred_fallthru
      _
    // Predicated region
    $region66: #{diabetes_transformer.1} parent=1 // pred_check
      _
    $region67: #{diabetes_transformer.1} parent=1 // pred_check_branch
      %58 = sbr.rel (0) target = $region69
    $region68: #{diabetes_transformer.1} parent=1 // pred_region
      _
    $region69: #{diabetes_transformer.1} parent=1 // pred_fallthru
      _
    %v60 = vld [vmem:[%s0] sm:$0xff]
    %v61 = vpack.c.bf16 %v60, %v60
    %v62 = vld [vmem:[%s1] sm:$0x3]
    %v63 = vld [vmem:[%s2] sm:$0x1]
    %v65 = vlaneseq
    %v66 = vshrl.u32 %v65, 7
    %v67 = vsub.s32 0, %v66
    %v68 = vrot.slane %v63, %v67
    %vm70 = vcmask 31744
    %v72 = vsel %vm70, %v61, 0
    %vm74 = vcmask 1041408
    %v76 = vsel %vm74, %v62, 0
    %78 = vmatprep.subr.bf16.mxu0 0
    %79 = vmatpush1.bf16.msra.mxu0 %v76
    %80 = vmatprep.subr.bf16.mxu0 0
    %81 = vmatpush1.bf16.msra.mxu0 0
    %82 = vmatprep.subr.bf16.mxu0 0
    %83 = vmatpush1.bf16.msra.mxu0 0
    %84 = vmatprep.subr.bf16.mxu0 0
    %85 = vmatpush1.bf16.msra.mxu0 0
    %86 = vmatprep.subr.bf16.mxu0 0
    %87 = vmatpush1.bf16.msra.mxu0 0
    %88 = vmatprep.subr.bf16.mxu0 0
    %89 = vmatpush1.bf16.msra.mxu0 0
    %90 = vmatprep.subr.bf16.mxu0 0
    %91 = vmatpush1.bf16.msra.mxu0 0
    %92 = vmatprep.subr.bf16.mxu0 0
    %93 = vmatpush1.bf16.msra.mxu0 0
    %94 = vmatprep.subr.bf16.mxu0 0
    %95 = vmatpush1.bf16.msra.mxu0 0
    %96 = vmatprep.subr.bf16.mxu0 0
    %97 = vmatpush1.bf16.msra.mxu0 0
    %98 = vmatprep.subr.bf16.mxu0 0
    %99 = vmatpush1.bf16.msra.mxu0 0
    %100 = vmatprep.subr.bf16.mxu0 0
    %101 = vmatpush1.bf16.msra.mxu0 0
    %102 = vmatprep.subr.bf16.mxu0 0
    %103 = vmatpush1.bf16.msra.mxu0 0
    %104 = vmatprep.subr.bf16.mxu0 0
    %105 = vmatpush1.bf16.msra.mxu0 0
    %106 = vmatprep.subr.bf16.mxu0 0
    %107 = vmatpush1.bf16.msra.mxu0 0
    %108 = vmatprep.subr.bf16.mxu0 0
    %109 = vmatpush1.bf16.msra.mxu0 0
    %110 = vmatprep.mubr.bf16.mxu0 0
    %111 = vmatmul.mubr.bf16.gmra.mrb[0].mxu0 %v72
    %v112 = vpop.f32.mrb[0].mxu0
    %v113 = vadd.f32 %v68, %v112
    %v114 = vpop.f32.mrb[0].mxu0
    %v115 = vpop.f32.mrb[0].mxu0
    %v116 = vpop.f32.mrb[0].mxu0
    %117 = vdwg.mxu0
    %v118 = vpack.c.bf16 %v113, %v113
    %v119 = vld [vmem:[%s3] sm:$0xf]
    %v120 = vld [vmem:[%s3 + $0x4] sm:$0xf]
    %v121 = vld [vmem:[%s3 + $0x8] sm:$0xf]
    %v122 = vld [vmem:[%s3 + $0xc] sm:$0xf]
    %v123 = vld [vmem:[%s4] sm:$0x1]
    %v125 = vlaneseq
    %v126 = vshrl.u32 %v125, 7
    %v127 = vsub.s32 0, %v126
    %v128 = vrot.slane %v123, %v127
    %v134 = vunpack.c.l.b16 %v119
    %v135 = vunpack.c.l.b16 %v120
    %v136 = vunpack.c.l.b16 %v121
    %v137 = vunpack.c.l.b16 %v122
    %v138 = vpack.c.b16 %v135, %v134
    %v139 = vpack.c.b16 %v137, %v136
    %vm142 = vcmask 261120
    %v144 = vsel %vm142, %v118, 0
    %146 = vmatprep.subr.bf16.mxu0 0
    %147 = vmatpush1.bf16.msra.mxu0 %v138
    %148 = vmatprep.subr.bf16.mxu0 0
    %149 = vmatpush1.bf16.msra.mxu0 %v139
    %150 = vmatprep.subr.bf16.mxu0 0
    %151 = vmatpush1.bf16.msra.mxu0 0
    %152 = vmatprep.subr.bf16.mxu0 0
    %153 = vmatpush1.bf16.msra.mxu0 0
    %154 = vmatprep.subr.bf16.mxu0 0
    %155 = vmatpush1.bf16.msra.mxu0 0
    %156 = vmatprep.subr.bf16.mxu0 0
    %157 = vmatpush1.bf16.msra.mxu0 0
    %158 = vmatprep.subr.bf16.mxu0 0
    %159 = vmatpush1.bf16.msra.mxu0 0
    %160 = vmatprep.subr.bf16.mxu0 0
    %161 = vmatpush1.bf16.msra.mxu0 0
    %162 = vmatprep.subr.bf16.mxu0 0
    %163 = vmatpush1.bf16.msra.mxu0 0
    %164 = vmatprep.subr.bf16.mxu0 0
    %165 = vmatpush1.bf16.msra.mxu0 0
    %166 = vmatprep.subr.bf16.mxu0 0
    %167 = vmatpush1.bf16.msra.mxu0 0
    %168 = vmatprep.subr.bf16.mxu0 0
    %169 = vmatpush1.bf16.msra.mxu0 0
    %170 = vmatprep.subr.bf16.mxu0 0
    %171 = vmatpush1.bf16.msra.mxu0 0
    %172 = vmatprep.subr.bf16.mxu0 0
    %173 = vmatpush1.bf16.msra.mxu0 0
    %174 = vmatprep.subr.bf16.mxu0 0
    %175 = vmatpush1.bf16.msra.mxu0 0
    %176 = vmatprep.subr.bf16.mxu0 0
    %177 = vmatpush1.bf16.msra.mxu0 0
    %178 = vmatprep.mubr.bf16.mxu0 0
    %179 = vmatmul.mubr.bf16.gmra.mrb[0].mxu0 %v144
    %v180 = vpop.f32.mrb[0].mxu0
    %v181 = vadd.f32 %v128, %v180
    %v182 = vpop.f32.mrb[0].mxu0
    %v183 = vpop.f32.mrb[0].mxu0
    %v184 = vpop.f32.mrb[0].mxu0
    %185 = vdwg.mxu0
    %v186 = vpack.c.bf16 %v181, %v181
    %188 = vrot.lane.b32.xlu0 %v186, 96
    %v189 = vpop.permute.xlu0 %188
    %vm190 = vcmask 130048
    %v192 = vsel %vm190, %v186, 0
    %v195 = vsel %vm190, %v189, 0
    %197 = vmatprep.subr.bf16.mxu0 0
    %198 = vmatpush1.bf16.xpose.msra.mxu0 %v195
    %199 = vmatprep.subr.bf16.mxu0 0
    %200 = vmatpush1.bf16.xpose.msra.mxu0 0
    %201 = vmatprep.subr.bf16.mxu0 0
    %202 = vmatpush1.bf16.xpose.msra.mxu0 0
    %203 = vmatprep.subr.bf16.mxu0 0
    %204 = vmatpush1.bf16.xpose.msra.mxu0 0
    %205 = vmatprep.subr.bf16.mxu0 0
    %206 = vmatpush1.bf16.xpose.msra.mxu0 0
    %207 = vmatprep.subr.bf16.mxu0 0
    %208 = vmatpush1.bf16.xpose.msra.mxu0 0
    %209 = vmatprep.subr.bf16.mxu0 0
    %210 = vmatpush1.bf16.xpose.msra.mxu0 0
    %211 = vmatprep.subr.bf16.mxu0 0
    %212 = vmatpush1.bf16.xpose.msra.mxu0 0
    %213 = vmatprep.subr.bf16.mxu0 0
    %214 = vmatpush1.bf16.xpose.msra.mxu0 0
    %215 = vmatprep.subr.bf16.mxu0 0
    %216 = vmatpush1.bf16.xpose.msra.mxu0 0
    %217 = vmatprep.subr.bf16.mxu0 0
    %218 = vmatpush1.bf16.xpose.msra.mxu0 0
    %219 = vmatprep.subr.bf16.mxu0 0
    %220 = vmatpush1.bf16.xpose.msra.mxu0 0
    %221 = vmatprep.subr.bf16.mxu0 0
    %222 = vmatpush1.bf16.xpose.msra.mxu0 0
    %223 = vmatprep.subr.bf16.mxu0 0
    %224 = vmatpush1.bf16.xpose.msra.mxu0 0
    %225 = vmatprep.subr.bf16.mxu0 0
    %226 = vmatpush1.bf16.xpose.msra.mxu0 0
    %227 = vmatprep.subr.bf16.mxu0 0
    %228 = vmatpush1.bf16.xpose.msra.mxu0 0
    %229 = vmatprep.mubr.bf16.mxu0 0
    %230 = vmatmul.mubr.bf16.gmra.mrb[0].mxu0 %v192
    %v231 = vpop.f32.mrb[0].mxu0
    %v232 = vadd.f32 0.0, %v231
    %v233 = vpop.f32.mrb[0].mxu0
    %v234 = vpop.f32.mrb[0].mxu0
    %v235 = vpop.f32.mrb[0].mxu0
    %236 = vdwg.mxu0
    %vm237 = vcmask 64512
    %v238 = vsel %vm237, %v232, -inf
    %239 = vmax.xlane.f32.xlu0 %v238
    %v240 = vpop.xlane.xlu0 %239
    %v241 = vsub.f32 %v232, %v240
    %v242 = vmul.f32 %v241, 1.442695
    %v243 = vpow.pop %v242
    %v244 = vpack.c.bf16 %v243, %v243
    %245 = vrot.lane.b32.xlu0 %v186, 64
    %v246 = vpop.permute.xlu0 %245
    %v248 = vsel %vm237, %v244, 0
    %vm250 = vcmask 1043456
    %v252 = vsel %vm250, %v246, 0
    %254 = vmatprep.subr.bf16.mxu0 0
    %255 = vmatpush1.bf16.msra.mxu0 %v252
    %256 = vmatprep.subr.bf16.mxu0 0
    %257 = vmatpush1.bf16.msra.mxu0 0
    %258 = vmatprep.subr.bf16.mxu0 0
    %259 = vmatpush1.bf16.msra.mxu0 0
    %260 = vmatprep.subr.bf16.mxu0 0
    %261 = vmatpush1.bf16.msra.mxu0 0
    %262 = vmatprep.subr.bf16.mxu0 0
    %263 = vmatpush1.bf16.msra.mxu0 0
    %264 = vmatprep.subr.bf16.mxu0 0
    %265 = vmatpush1.bf16.msra.mxu0 0
    %266 = vmatprep.subr.bf16.mxu0 0
    %267 = vmatpush1.bf16.msra.mxu0 0
    %268 = vmatprep.subr.bf16.mxu0 0
    %269 = vmatpush1.bf16.msra.mxu0 0
    %270 = vmatprep.subr.bf16.mxu0 0
    %271 = vmatpush1.bf16.msra.mxu0 0
    %272 = vmatprep.subr.bf16.mxu0 0
    %273 = vmatpush1.bf16.msra.mxu0 0
    %274 = vmatprep.subr.bf16.mxu0 0
    %275 = vmatpush1.bf16.msra.mxu0 0
    %276 = vmatprep.subr.bf16.mxu0 0
    %277 = vmatpush1.bf16.msra.mxu0 0
    %278 = vmatprep.subr.bf16.mxu0 0
    %279 = vmatpush1.bf16.msra.mxu0 0
    %280 = vmatprep.subr.bf16.mxu0 0
    %281 = vmatpush1.bf16.msra.mxu0 0
    %282 = vmatprep.subr.bf16.mxu0 0
    %283 = vmatpush1.bf16.msra.mxu0 0
    %284 = vmatprep.subr.bf16.mxu0 0
    %285 = vmatpush1.bf16.msra.mxu0 0
    %286 = vmatprep.mubr.bf16.mxu0 0
    %287 = vmatmul.mubr.bf16.gmra.mrb[0].mxu0 %v248
    %v288 = vpop.f32.mrb[0].mxu0
    %v289 = vadd.f32 0.0, %v288
    %v290 = vpop.f32.mrb[0].mxu0
    %v291 = vpop.f32.mrb[0].mxu0
    %v292 = vpop.f32.mrb[0].mxu0
    %293 = vdwg.mxu0
    %v294 = vsel %vm237, %v243, 0.0
    %295 = vadd.xlane.f32.xlu0 %v294
    %v296 = vpop.xlane.xlu0 %295
    %v297 = vrcp.pop %v296
    %v298 = vmul.f32 %v289, %v297
    %299 = vrot.lane.b32.xlu0 %v186, 112
    %v300 = vpop.permute.xlu0 %299
    %301 = vrot.lane.b32.xlu0 %v186, 80
    %v302 = vpop.permute.xlu0 %301
    %v304 = vsel %vm190, %v300, 0
    %v307 = vsel %vm190, %v302, 0
    %309 = vmatprep.subr.bf16.mxu0 0
    %310 = vmatpush1.bf16.xpose.msra.mxu0 %v307
    %311 = vmatprep.subr.bf16.mxu0 0
    %312 = vmatpush1.bf16.xpose.msra.mxu0 0
    %313 = vmatprep.subr.bf16.mxu0 0
    %314 = vmatpush1.bf16.xpose.msra.mxu0 0
    %315 = vmatprep.subr.bf16.mxu0 0
    %316 = vmatpush1.bf16.xpose.msra.mxu0 0
    %317 = vmatprep.subr.bf16.mxu0 0
    %318 = vmatpush1.bf16.xpose.msra.mxu0 0
    %319 = vmatprep.subr.bf16.mxu0 0
    %320 = vmatpush1.bf16.xpose.msra.mxu0 0
    %321 = vmatprep.subr.bf16.mxu0 0
    %322 = vmatpush1.bf16.xpose.msra.mxu0 0
    %323 = vmatprep.subr.bf16.mxu0 0
    %324 = vmatpush1.bf16.xpose.msra.mxu0 0
    %325 = vmatprep.subr.bf16.mxu0 0
    %326 = vmatpush1.bf16.xpose.msra.mxu0 0
    %327 = vmatprep.subr.bf16.mxu0 0
    %328 = vmatpush1.bf16.xpose.msra.mxu0 0
    %329 = vmatprep.subr.bf16.mxu0 0
    %330 = vmatpush1.bf16.xpose.msra.mxu0 0
    %331 = vmatprep.subr.bf16.mxu0 0
    %332 = vmatpush1.bf16.xpose.msra.mxu0 0
    %333 = vmatprep.subr.bf16.mxu0 0
    %334 = vmatpush1.bf16.xpose.msra.mxu0 0
    %335 = vmatprep.subr.bf16.mxu0 0
    %336 = vmatpush1.bf16.xpose.msra.mxu0 0
    %337 = vmatprep.subr.bf16.mxu0 0
    %338 = vmatpush1.bf16.xpose.msra.mxu0 0
    %339 = vmatprep.subr.bf16.mxu0 0
    %340 = vmatpush1.bf16.xpose.msra.mxu0 0
    %341 = vmatprep.mubr.bf16.mxu0 0
    %342 = vmatmul.mubr.bf16.gmra.mrb[0].mxu0 %v304
    %v343 = vpop.f32.mrb[0].mxu0
    %v344 = vadd.f32 0.0, %v343
    %v345 = vpop.f32.mrb[0].mxu0
    %v346 = vpop.f32.mrb[0].mxu0
    %v347 = vpop.f32.mrb[0].mxu0
    %348 = vdwg.mxu0
    %v349 = vsel %vm237, %v344, -inf
    %350 = vmax.xlane.f32.xlu0 %v349
    %v351 = vpop.xlane.xlu0 %350
    %v352 = vsub.f32 %v344, %v351
    %v353 = vmul.f32 %v352, 1.442695
    %v354 = vpow.pop %v353
    %v355 = vpack.c.bf16 %v354, %v354
    %356 = vrot.lane.b32.xlu0 %v186, 48
    %v357 = vpop.permute.xlu0 %356
    %v359 = vsel %vm237, %v355, 0
    %v362 = vsel %vm250, %v357, 0
    %364 = vmatprep.subr.bf16.mxu0 0
    %365 = vmatpush1.bf16.msra.mxu0 %v362
    %366 = vmatprep.subr.bf16.mxu0 0
    %367 = vmatpush1.bf16.msra.mxu0 0
    %368 = vmatprep.subr.bf16.mxu0 0
    %369 = vmatpush1.bf16.msra.mxu0 0
    %370 = vmatprep.subr.bf16.mxu0 0
    %371 = vmatpush1.bf16.msra.mxu0 0
    %372 = vmatprep.subr.bf16.mxu0 0
    %373 = vmatpush1.bf16.msra.mxu0 0
    %374 = vmatprep.subr.bf16.mxu0 0
    %375 = vmatpush1.bf16.msra.mxu0 0
    %376 = vmatprep.subr.bf16.mxu0 0
    %377 = vmatpush1.bf16.msra.mxu0 0
    %378 = vmatprep.subr.bf16.mxu0 0
    %379 = vmatpush1.bf16.msra.mxu0 0
    %380 = vmatprep.subr.bf16.mxu0 0
    %381 = vmatpush1.bf16.msra.mxu0 0
    %382 = vmatprep.subr.bf16.mxu0 0
    %383 = vmatpush1.bf16.msra.mxu0 0
    %384 = vmatprep.subr.bf16.mxu0 0
    %385 = vmatpush1.bf16.msra.mxu0 0
    %386 = vmatprep.subr.bf16.mxu0 0
    %387 = vmatpush1.bf16.msra.mxu0 0
    %388 = vmatprep.subr.bf16.mxu0 0
    %389 = vmatpush1.bf16.msra.mxu0 0
    %390 = vmatprep.subr.bf16.mxu0 0
    %391 = vmatpush1.bf16.msra.mxu0 0
    %392 = vmatprep.subr.bf16.mxu0 0
    %393 = vmatpush1.bf16.msra.mxu0 0
    %394 = vmatprep.subr.bf16.mxu0 0
    %395 = vmatpush1.bf16.msra.mxu0 0
    %396 = vmatprep.mubr.bf16.mxu0 0
    %397 = vmatmul.mubr.bf16.gmra.mrb[0].mxu0 %v359
    %v398 = vpop.f32.mrb[0].mxu0
    %v399 = vadd.f32 0.0, %v398
    %v400 = vpop.f32.mrb[0].mxu0
    %v401 = vpop.f32.mrb[0].mxu0
    %v402 = vpop.f32.mrb[0].mxu0
    %403 = vdwg.mxu0
    %v404 = vsel %vm237, %v354, 0.0
    %405 = vadd.xlane.f32.xlu0 %v404
    %v406 = vpop.xlane.xlu0 %405
    %v407 = vrcp.pop %v406
    %v408 = vmul.f32 %v399, %v407
    %410 = vrot.lane.b32.xlu0 %v408, 16
    %v411 = vpop.permute.xlu0 %410
    %v413 = vsel %vm190, %v298, %v411
    %v414 = vpack.c.bf16 %v413, %v413
    %v415 = vld [vmem:[%s5] sm:$0xf]
    %v416 = vld [vmem:[%s5 + $0x4] sm:$0xf]
    %v417 = vld [vmem:[%s5 + $0x8] sm:$0xf]
    %v418 = vld [vmem:[%s5 + $0xc] sm:$0xf]
    %v419 = vld [vmem:[%s6] sm:$0x1]
    %v421 = vlaneseq
    %v422 = vshrl.u32 %v421, 7
    %v423 = vsub.s32 0, %v422
    %v424 = vrot.slane %v419, %v423
    %v430 = vunpack.c.l.b16 %v415
    %v431 = vunpack.c.l.b16 %v416
    %v432 = vunpack.c.l.b16 %v417
    %v433 = vunpack.c.l.b16 %v418
    %v434 = vpack.c.b16 %v431, %v430
    %v435 = vpack.c.b16 %v433, %v432
    %v439 = vsel %vm142, %v414, 0
    %441 = vmatprep.subr.bf16.mxu0 0
    %442 = vmatpush1.bf16.msra.mxu0 %v434
    %443 = vmatprep.subr.bf16.mxu0 0
    %444 = vmatpush1.bf16.msra.mxu0 %v435
    %445 = vmatprep.subr.bf16.mxu0 0
    %446 = vmatpush1.bf16.msra.mxu0 0
    %447 = vmatprep.subr.bf16.mxu0 0
    %448 = vmatpush1.bf16.msra.mxu0 0
    %449 = vmatprep.subr.bf16.mxu0 0
    %450 = vmatpush1.bf16.msra.mxu0 0
    %451 = vmatprep.subr.bf16.mxu0 0
    %452 = vmatpush1.bf16.msra.mxu0 0
    %453 = vmatprep.subr.bf16.mxu0 0
    %454 = vmatpush1.bf16.msra.mxu0 0
    %455 = vmatprep.subr.bf16.mxu0 0
    %456 = vmatpush1.bf16.msra.mxu0 0
    %457 = vmatprep.subr.bf16.mxu0 0
    %458 = vmatpush1.bf16.msra.mxu0 0
    %459 = vmatprep.subr.bf16.mxu0 0
    %460 = vmatpush1.bf16.msra.mxu0 0
    %461 = vmatprep.subr.bf16.mxu0 0
    %462 = vmatpush1.bf16.msra.mxu0 0
    %463 = vmatprep.subr.bf16.mxu0 0
    %464 = vmatpush1.bf16.msra.mxu0 0
    %465 = vmatprep.subr.bf16.mxu0 0
    %466 = vmatpush1.bf16.msra.mxu0 0
    %467 = vmatprep.subr.bf16.mxu0 0
    %468 = vmatpush1.bf16.msra.mxu0 0
    %469 = vmatprep.subr.bf16.mxu0 0
    %470 = vmatpush1.bf16.msra.mxu0 0
    %471 = vmatprep.subr.bf16.mxu0 0
    %472 = vmatpush1.bf16.msra.mxu0 0
    %473 = vmatprep.mubr.bf16.mxu0 0
    %474 = vmatmul.mubr.bf16.gmra.mrb[0].mxu0 %v439
    %v475 = vpop.f32.mrb[0].mxu0
    %v476 = vadd.f32 %v424, %v475
    %v477 = vpop.f32.mrb[0].mxu0
    %v478 = vpop.f32.mrb[0].mxu0
    %v479 = vpop.f32.mrb[0].mxu0
    %480 = vdwg.mxu0
    %v481 = vadd.f32 %v113, %v476
    %v482 = vld [vmem:[%s11] sm:$0x1]
    %v483 = vld [vmem:[%s12] sm:$0x1]
    %v484 = vsel %vm142, %v481, 0.0
    %485 = vadd.xlane.f32.xlu0 %v484
    %v486 = vpop.xlane.xlu0 %485
    %v487 = vrcp.pop 32.0
    %v488 = vmul.f32 %v486, %v487
    %v489 = vsub.f32 %v481, %v488
    %v490 = vmul.f32 %v489, %v489
    %v491 = vsel %vm142, %v490, 0.0
    %492 = vadd.xlane.f32.xlu0 %v491
    %v493 = vpop.xlane.xlu0 %492
    %v494 = vmul.f32 %v493, %v487
    %v495 = vadd.f32 %v494, 1e-05
    %v496 = vrsqrt.pop %v495
    %v497 = vmul.f32 %v489, %v496
    %v499 = vlaneseq
    %v500 = vshrl.u32 %v499, 7
    %v501 = vsub.s32 0, %v500
    %v502 = vrot.slane %v482, %v501
    %v504 = vmul.f32 %v497, %v502
    %v506 = vlaneseq
    %v507 = vshrl.u32 %v506, 7
    %v508 = vsub.s32 0, %v507
    %v509 = vrot.slane %v483, %v508
    %v511 = vadd.f32 %v504, %v509
    %v512 = vpack.c.bf16 %v511, %v511
    %v513 = vld [vmem:[%s7] sm:$0xff]
    %v514 = vld [vmem:[%s7 + $0x8] sm:$0xff]
    %v515 = vld [vmem:[%s7 + $0x10] sm:$0xff]
    %v516 = vld [vmem:[%s7 + $0x18] sm:$0xff]
    %v517 = vld [vmem:[%s7 + $0x20] sm:$0xff]
    %v518 = vld [vmem:[%s7 + $0x28] sm:$0xff]
    %v519 = vld [vmem:[%s7 + $0x30] sm:$0xff]
    %v520 = vld [vmem:[%s7 + $0x38] sm:$0xff]
    %v521 = vld [vmem:[%s7 + $0x40] sm:$0xff]
    %v522 = vld [vmem:[%s7 + $0x48] sm:$0xff]
    %v523 = vld [vmem:[%s7 + $0x50] sm:$0xff]
    %v524 = vld [vmem:[%s7 + $0x58] sm:$0xff]
    %v525 = vld [vmem:[%s7 + $0x60] sm:$0xff]
    %v526 = vld [vmem:[%s7 + $0x68] sm:$0xff]
    %v527 = vld [vmem:[%s7 + $0x70] sm:$0xff]
    %v528 = vld [vmem:[%s7 + $0x78] sm:$0xff]
    %v529 = vld [vmem:[%s7 + $0x80] sm:$0xff]
    %v530 = vld [vmem:[%s7 + $0x88] sm:$0xff]
    %v531 = vld [vmem:[%s7 + $0x90] sm:$0xff]
    %v532 = vld [vmem:[%s7 + $0x98] sm:$0xff]
    %v533 = vld [vmem:[%s7 + $0xa0] sm:$0xff]
    %v534 = vld [vmem:[%s7 + $0xa8] sm:$0xff]
    %v535 = vld [vmem:[%s7 + $0xb0] sm:$0xff]
    %v536 = vld [vmem:[%s7 + $0xb8] sm:$0xff]
    %v537 = vld [vmem:[%s7 + $0xc0] sm:$0xff]
    %v538 = vld [vmem:[%s7 + $0xc8] sm:$0xff]
    %v539 = vld [vmem:[%s7 + $0xd0] sm:$0xff]
    %v540 = vld [vmem:[%s7 + $0xd8] sm:$0xff]
    %v541 = vld [vmem:[%s7 + $0xe0] sm:$0xff]
    %v542 = vld [vmem:[%s7 + $0xe8] sm:$0xff]
    %v543 = vld [vmem:[%s7 + $0xf0] sm:$0xff]
    %v544 = vld [vmem:[%s7 + $0xf8] sm:$0xff]
    %v545 = vld [vmem:[%s8] sm:$0xff]
    %v546 = vld [vmem:[%s8 + $0x8] sm:$0xff]
    %v549 = vlaneseq
    %v550 = vshrl.u32 %v549, 7
    %v551 = vsub.s32 0, %v550
    %v552 = vrot.slane %v545, %v551
    %v553 = vlaneseq
    %v554 = vshrl.u32 %v553, 7
    %v555 = vsub.s32 1, %v554
    %v556 = vrot.slane %v545, %v555
    %v557 = vlaneseq
    %v558 = vshrl.u32 %v557, 7
    %v559 = vsub.s32 2, %v558
    %v560 = vrot.slane %v545, %v559
    %v561 = vlaneseq
    %v562 = vshrl.u32 %v561, 7
    %v563 = vsub.s32 3, %v562
    %v564 = vrot.slane %v545, %v563
    %v565 = vlaneseq
    %v566 = vshrl.u32 %v565, 7
    %v567 = vsub.s32 4, %v566
    %v568 = vrot.slane %v545, %v567
    %v569 = vlaneseq
    %v570 = vshrl.u32 %v569, 7
    %v571 = vsub.s32 5, %v570
    %v572 = vrot.slane %v545, %v571
    %v573 = vlaneseq
    %v574 = vshrl.u32 %v573, 7
    %v575 = vsub.s32 6, %v574
    %v576 = vrot.slane %v545, %v575
    %v577 = vlaneseq
    %v578 = vshrl.u32 %v577, 7
    %v579 = vsub.s32 7, %v578
    %v580 = vrot.slane %v545, %v579
    %v581 = vlaneseq
    %v582 = vshrl.u32 %v581, 7
    %v583 = vsub.s32 0, %v582
    %v584 = vrot.slane %v546, %v583
    %v585 = vlaneseq
    %v586 = vshrl.u32 %v585, 7
    %v587 = vsub.s32 1, %v586
    %v588 = vrot.slane %v546, %v587
    %v589 = vlaneseq
    %v590 = vshrl.u32 %v589, 7
    %v591 = vsub.s32 2, %v590
    %v592 = vrot.slane %v546, %v591
    %v593 = vlaneseq
    %v594 = vshrl.u32 %v593, 7
    %v595 = vsub.s32 3, %v594
    %v596 = vrot.slane %v546, %v595
    %v597 = vlaneseq
    %v598 = vshrl.u32 %v597, 7
    %v599 = vsub.s32 4, %v598
    %v600 = vrot.slane %v546, %v599
    %v601 = vlaneseq
    %v602 = vshrl.u32 %v601, 7
    %v603 = vsub.s32 5, %v602
    %v604 = vrot.slane %v546, %v603
    %v605 = vlaneseq
    %v606 = vshrl.u32 %v605, 7
    %v607 = vsub.s32 6, %v606
    %v608 = vrot.slane %v546, %v607
    %v609 = vlaneseq
    %v610 = vshrl.u32 %v609, 7
    %v611 = vsub.s32 7, %v610
    %v612 = vrot.slane %v546, %v611
    %v661 = vunpack.c.l.b16 %v513
    %v662 = vunpack.c.h.b16 %v513
    %v663 = vunpack.c.l.b16 %v514
    %v664 = vunpack.c.h.b16 %v514
    %v665 = vunpack.c.l.b16 %v515
    %v666 = vunpack.c.h.b16 %v515
    %v667 = vunpack.c.l.b16 %v516
    %v668 = vunpack.c.h.b16 %v516
    %v669 = vunpack.c.l.b16 %v517
    %v670 = vunpack.c.h.b16 %v517
    %v671 = vunpack.c.l.b16 %v518
    %v672 = vunpack.c.h.b16 %v518
    %v673 = vunpack.c.l.b16 %v519
    %v674 = vunpack.c.h.b16 %v519
    %v675 = vunpack.c.l.b16 %v520
    %v676 = vunpack.c.h.b16 %v520
    %v677 = vunpack.c.l.b16 %v521
    %v678 = vunpack.c.h.b16 %v521
    %v679 = vunpack.c.l.b16 %v522
    %v680 = vunpack.c.h.b16 %v522
    %v681 = vunpack.c.l.b16 %v523
    %v682 = vunpack.c.h.b16 %v523
    %v683 = vunpack.c.l.b16 %v524
    %v684 = vunpack.c.h.b16 %v524
    %v685 = vunpack.c.l.b16 %v525
    %v686 = vunpack.c.h.b16 %v525
    %v687 = vunpack.c.l.b16 %v526
    %v688 = vunpack.c.h.b16 %v526
    %v689 = vunpack.c.l.b16 %v527
    %v690 = vunpack.c.h.b16 %v527
    %v691 = vunpack.c.l.b16 %v528
    %v692 = vunpack.c.h.b16 %v528
    %v693 = vunpack.c.l.b16 %v529
    %v694 = vunpack.c.h.b16 %v529
    %v695 = vunpack.c.l.b16 %v530
    %v696 = vunpack.c.h.b16 %v530
    %v697 = vunpack.c.l.b16 %v531
    %v698 = vunpack.c.h.b16 %v531
    %v699 = vunpack.c.l.b16 %v532
    %v700 = vunpack.c.h.b16 %v532
    %v701 = vunpack.c.l.b16 %v533
    %v702 = vunpack.c.h.b16 %v533
    %v703 = vunpack.c.l.b16 %v534
    %v704 = vunpack.c.h.b16 %v534
    %v705 = vunpack.c.l.b16 %v535
    %v706 = vunpack.c.h.b16 %v535
    %v707 = vunpack.c.l.b16 %v536
    %v708 = vunpack.c.h.b16 %v536
    %v709 = vunpack.c.l.b16 %v537
    %v710 = vunpack.c.h.b16 %v537
    %v711 = vunpack.c.l.b16 %v538
    %v712 = vunpack.c.h.b16 %v538
    %v713 = vunpack.c.l.b16 %v539
    %v714 = vunpack.c.h.b16 %v539
    %v715 = vunpack.c.l.b16 %v540
    %v716 = vunpack.c.h.b16 %v540
    %v717 = vunpack.c.l.b16 %v541
    %v718 = vunpack.c.h.b16 %v541
    %v719 = vunpack.c.l.b16 %v542
    %v720 = vunpack.c.h.b16 %v542
    %v721 = vunpack.c.l.b16 %v543
    %v722 = vunpack.c.h.b16 %v543
    %v723 = vunpack.c.l.b16 %v544
    %v724 = vunpack.c.h.b16 %v544
    %v725 = vpack.c.b16 %v677, %v661
    %v726 = vpack.c.b16 %v678, %v662
    %v727 = vpack.c.b16 %v679, %v663
    %v728 = vpack.c.b16 %v680, %v664
    %v729 = vpack.c.b16 %v681, %v665
    %v730 = vpack.c.b16 %v682, %v666
    %v731 = vpack.c.b16 %v683, %v667
    %v732 = vpack.c.b16 %v684, %v668
    %v733 = vpack.c.b16 %v685, %v669
    %v734 = vpack.c.b16 %v686, %v670
    %v735 = vpack.c.b16 %v687, %v671
    %v736 = vpack.c.b16 %v688, %v672
    %v737 = vpack.c.b16 %v689, %v673
    %v738 = vpack.c.b16 %v690, %v674
    %v739 = vpack.c.b16 %v691, %v675
    %v740 = vpack.c.b16 %v692, %v676
    %v741 = vpack.c.b16 %v709, %v693
    %v742 = vpack.c.b16 %v710, %v694
    %v743 = vpack.c.b16 %v711, %v695
    %v744 = vpack.c.b16 %v712, %v696
    %v745 = vpack.c.b16 %v713, %v697
    %v746 = vpack.c.b16 %v714, %v698
    %v747 = vpack.c.b16 %v715, %v699
    %v748 = vpack.c.b16 %v716, %v700
    %v749 = vpack.c.b16 %v717, %v701
    %v750 = vpack.c.b16 %v718, %v702
    %v751 = vpack.c.b16 %v719, %v703
    %v752 = vpack.c.b16 %v720, %v704
    %v753 = vpack.c.b16 %v721, %v705
    %v754 = vpack.c.b16 %v722, %v706
    %v755 = vpack.c.b16 %v723, %v707
    %v756 = vpack.c.b16 %v724, %v708
    %v790 = vsel %vm142, %v512, 0
    %792 = vmatprep.subr.bf16.mxu0 %v726
    %793 = vmatpush1.bf16.msra.mxu0 %v725
    %794 = vmatprep.subr.bf16.mxu0 %v742
    %795 = vmatpush1.bf16.msra.mxu0 %v741
    %796 = vmatprep.subr.bf16.mxu0 0
    %797 = vmatpush1.bf16.msra.mxu0 0
    %798 = vmatprep.subr.bf16.mxu0 0
    %799 = vmatpush1.bf16.msra.mxu0 0
    %800 = vmatprep.subr.bf16.mxu0 0
    %801 = vmatpush1.bf16.msra.mxu0 0
    %802 = vmatprep.subr.bf16.mxu0 0
    %803 = vmatpush1.bf16.msra.mxu0 0
    %804 = vmatprep.subr.bf16.mxu0 0
    %805 = vmatpush1.bf16.msra.mxu0 0
    %806 = vmatprep.subr.bf16.mxu0 0
    %807 = vmatpush1.bf16.msra.mxu0 0
    %808 = vmatprep.subr.bf16.mxu0 0
    %809 = vmatpush1.bf16.msra.mxu0 0
    %810 = vmatprep.subr.bf16.mxu0 0
    %811 = vmatpush1.bf16.msra.mxu0 0
    %812 = vmatprep.subr.bf16.mxu0 0
    %813 = vmatpush1.bf16.msra.mxu0 0
    %814 = vmatprep.subr.bf16.mxu0 0
    %815 = vmatpush1.bf16.msra.mxu0 0
    %816 = vmatprep.subr.bf16.mxu0 0
    %817 = vmatpush1.bf16.msra.mxu0 0
    %818 = vmatprep.subr.bf16.mxu0 0
    %819 = vmatpush1.bf16.msra.mxu0 0
    %820 = vmatprep.subr.bf16.mxu0 0
    %821 = vmatpush1.bf16.msra.mxu0 0
    %822 = vmatprep.subr.bf16.mxu0 0
    %823 = vmatpush1.bf16.msra.mxu0 0
    %824 = vmatprep.mubr.bf16.mxu0 0
    %825 = vmatmul.mubr.bf16.gmra.mrb[0].mxu0 %v790
    %v826 = vpop.f32.mrb[0].mxu0
    %v827 = vadd.f32 %v552, %v826
    %v828 = vpop.f32.mrb[0].mxu0
    %v829 = vadd.f32 %v556, %v828
    %v830 = vpop.f32.mrb[0].mxu0
    %v831 = vpop.f32.mrb[0].mxu0
    %832 = vdwg.mxu0
    %833 = vmatprep.subr.bf16.mxu0 %v728
    %834 = vmatpush1.bf16.msra.mxu0 %v727
    %835 = vmatprep.subr.bf16.mxu0 %v744
    %836 = vmatpush1.bf16.msra.mxu0 %v743
    %837 = vmatprep.subr.bf16.mxu0 0
    %838 = vmatpush1.bf16.msra.mxu0 0
    %839 = vmatprep.subr.bf16.mxu0 0
    %840 = vmatpush1.bf16.msra.mxu0 0
    %841 = vmatprep.subr.bf16.mxu0 0
    %842 = vmatpush1.bf16.msra.mxu0 0
    %843 = vmatprep.subr.bf16.mxu0 0
    %844 = vmatpush1.bf16.msra.mxu0 0
    %845 = vmatprep.subr.bf16.mxu0 0
    %846 = vmatpush1.bf16.msra.mxu0 0
    %847 = vmatprep.subr.bf16.mxu0 0
    %848 = vmatpush1.bf16.msra.mxu0 0
    %849 = vmatprep.subr.bf16.mxu0 0
    %850 = vmatpush1.bf16.msra.mxu0 0
    %851 = vmatprep.subr.bf16.mxu0 0
    %852 = vmatpush1.bf16.msra.mxu0 0
    %853 = vmatprep.subr.bf16.mxu0 0
    %854 = vmatpush1.bf16.msra.mxu0 0
    %855 = vmatprep.subr.bf16.mxu0 0
    %856 = vmatpush1.bf16.msra.mxu0 0
    %857 = vmatprep.subr.bf16.mxu0 0
    %858 = vmatpush1.bf16.msra.mxu0 0
    %859 = vmatprep.subr.bf16.mxu0 0
    %860 = vmatpush1.bf16.msra.mxu0 0
    %861 = vmatprep.subr.bf16.mxu0 0
    %862 = vmatpush1.bf16.msra.mxu0 0
    %863 = vmatprep.subr.bf16.mxu0 0
    %864 = vmatpush1.bf16.msra.mxu0 0
    %865 = vmatprep.mubr.bf16.mxu0 0
    %866 = vmatmul.mubr.bf16.gmra.mrb[0].mxu0 %v790
    %v867 = vpop.f32.mrb[0].mxu0
    %v868 = vadd.f32 %v560, %v867
    %v869 = vpop.f32.mrb[0].mxu0
    %v870 = vadd.f32 %v564, %v869
    %v871 = vpop.f32.mrb[0].mxu0
    %v872 = vpop.f32.mrb[0].mxu0
    %873 = vdwg.mxu0
    %874 = vmatprep.subr.bf16.mxu0 %v730
    %875 = vmatpush1.bf16.msra.mxu0 %v729
    %876 = vmatprep.subr.bf16.mxu0 %v746
    %877 = vmatpush1.bf16.msra.mxu0 %v745
    %878 = vmatprep.subr.bf16.mxu0 0
    %879 = vmatpush1.bf16.msra.mxu0 0
    %880 = vmatprep.subr.bf16.mxu0 0
    %881 = vmatpush1.bf16.msra.mxu0 0
    %882 = vmatprep.subr.bf16.mxu0 0
    %883 = vmatpush1.bf16.msra.mxu0 0
    %884 = vmatprep.subr.bf16.mxu0 0
    %885 = vmatpush1.bf16.msra.mxu0 0
    %886 = vmatprep.subr.bf16.mxu0 0
    %887 = vmatpush1.bf16.msra.mxu0 0
    %888 = vmatprep.subr.bf16.mxu0 0
    %889 = vmatpush1.bf16.msra.mxu0 0
    %890 = vmatprep.subr.bf16.mxu0 0
    %891 = vmatpush1.bf16.msra.mxu0 0
    %892 = vmatprep.subr.bf16.mxu0 0
    %893 = vmatpush1.bf16.msra.mxu0 0
    %894 = vmatprep.subr.bf16.mxu0 0
    %895 = vmatpush1.bf16.msra.mxu0 0
    %896 = vmatprep.subr.bf16.mxu0 0
    %897 = vmatpush1.bf16.msra.mxu0 0
    %898 = vmatprep.subr.bf16.mxu0 0
    %899 = vmatpush1.bf16.msra.mxu0 0
    %900 = vmatprep.subr.bf16.mxu0 0
    %901 = vmatpush1.bf16.msra.mxu0 0
    %902 = vmatprep.subr.bf16.mxu0 0
    %903 = vmatpush1.bf16.msra.mxu0 0
    %904 = vmatprep.subr.bf16.mxu0 0
    %905 = vmatpush1.bf16.msra.mxu0 0
    %906 = vmatprep.mubr.bf16.mxu0 0
    %907 = vmatmul.mubr.bf16.gmra.mrb[0].mxu0 %v790
    %v908 = vpop.f32.mrb[0].mxu0
    %v909 = vadd.f32 %v568, %v908
    %v910 = vpop.f32.mrb[0].mxu0
    %v911 = vadd.f32 %v572, %v910
    %v912 = vpop.f32.mrb[0].mxu0
    %v913 = vpop.f32.mrb[0].mxu0
    %914 = vdwg.mxu0
    %915 = vmatprep.subr.bf16.mxu0 %v732
    %916 = vmatpush1.bf16.msra.mxu0 %v731
    %917 = vmatprep.subr.bf16.mxu0 %v748
    %918 = vmatpush1.bf16.msra.mxu0 %v747
    %919 = vmatprep.subr.bf16.mxu0 0
    %920 = vmatpush1.bf16.msra.mxu0 0
    %921 = vmatprep.subr.bf16.mxu0 0
    %922 = vmatpush1.bf16.msra.mxu0 0
    %923 = vmatprep.subr.bf16.mxu0 0
    %924 = vmatpush1.bf16.msra.mxu0 0
    %925 = vmatprep.subr.bf16.mxu0 0
    %926 = vmatpush1.bf16.msra.mxu0 0
    %927 = vmatprep.subr.bf16.mxu0 0
    %928 = vmatpush1.bf16.msra.mxu0 0
    %929 = vmatprep.subr.bf16.mxu0 0
    %930 = vmatpush1.bf16.msra.mxu0 0
    %931 = vmatprep.subr.bf16.mxu0 0
    %932 = vmatpush1.bf16.msra.mxu0 0
    %933 = vmatprep.subr.bf16.mxu0 0
    %934 = vmatpush1.bf16.msra.mxu0 0
    %935 = vmatprep.subr.bf16.mxu0 0
    %936 = vmatpush1.bf16.msra.mxu0 0
    %937 = vmatprep.subr.bf16.mxu0 0
    %938 = vmatpush1.bf16.msra.mxu0 0
    %939 = vmatprep.subr.bf16.mxu0 0
    %940 = vmatpush1.bf16.msra.mxu0 0
    %941 = vmatprep.subr.bf16.mxu0 0
    %942 = vmatpush1.bf16.msra.mxu0 0
    %943 = vmatprep.subr.bf16.mxu0 0
    %944 = vmatpush1.bf16.msra.mxu0 0
    %945 = vmatprep.subr.bf16.mxu0 0
    %946 = vmatpush1.bf16.msra.mxu0 0
    %947 = vmatprep.mubr.bf16.mxu0 0
    %948 = vmatmul.mubr.bf16.gmra.mrb[0].mxu0 %v790
    %v949 = vpop.f32.mrb[0].mxu0
    %v950 = vadd.f32 %v576, %v949
    %v951 = vpop.f32.mrb[0].mxu0
    %v952 = vadd.f32 %v580, %v951
    %v953 = vpop.f32.mrb[0].mxu0
    %v954 = vpop.f32.mrb[0].mxu0
    %955 = vdwg.mxu0
    %956 = vmatprep.subr.bf16.mxu0 %v734
    %957 = vmatpush1.bf16.msra.mxu0 %v733
    %958 = vmatprep.subr.bf16.mxu0 %v750
    %959 = vmatpush1.bf16.msra.mxu0 %v749
    %960 = vmatprep.subr.bf16.mxu0 0
    %961 = vmatpush1.bf16.msra.mxu0 0
    %962 = vmatprep.subr.bf16.mxu0 0
    %963 = vmatpush1.bf16.msra.mxu0 0
    %964 = vmatprep.subr.bf16.mxu0 0
    %965 = vmatpush1.bf16.msra.mxu0 0
    %966 = vmatprep.subr.bf16.mxu0 0
    %967 = vmatpush1.bf16.msra.mxu0 0
    %968 = vmatprep.subr.bf16.mxu0 0
    %969 = vmatpush1.bf16.msra.mxu0 0
    %970 = vmatprep.subr.bf16.mxu0 0
    %971 = vmatpush1.bf16.msra.mxu0 0
    %972 = vmatprep.subr.bf16.mxu0 0
    %973 = vmatpush1.bf16.msra.mxu0 0
    %974 = vmatprep.subr.bf16.mxu0 0
    %975 = vmatpush1.bf16.msra.mxu0 0
    %976 = vmatprep.subr.bf16.mxu0 0
    %977 = vmatpush1.bf16.msra.mxu0 0
    %978 = vmatprep.subr.bf16.mxu0 0
    %979 = vmatpush1.bf16.msra.mxu0 0
    %980 = vmatprep.subr.bf16.mxu0 0
    %981 = vmatpush1.bf16.msra.mxu0 0
    %982 = vmatprep.subr.bf16.mxu0 0
    %983 = vmatpush1.bf16.msra.mxu0 0
    %984 = vmatprep.subr.bf16.mxu0 0
    %985 = vmatpush1.bf16.msra.mxu0 0
    %986 = vmatprep.subr.bf16.mxu0 0
    %987 = vmatpush1.bf16.msra.mxu0 0
    %988 = vmatprep.mubr.bf16.mxu0 0
    %989 = vmatmul.mubr.bf16.gmra.mrb[0].mxu0 %v790
    %v990 = vpop.f32.mrb[0].mxu0
    %v991 = vadd.f32 %v584, %v990
    %v992 = vpop.f32.mrb[0].mxu0
    %v993 = vadd.f32 %v588, %v992
    %v994 = vpop.f32.mrb[0].mxu0
    %v995 = vpop.f32.mrb[0].mxu0
    %996 = vdwg.mxu0
    %997 = vmatprep.subr.bf16.mxu0 %v736
    %998 = vmatpush1.bf16.msra.mxu0 %v735
    %999 = vmatprep.subr.bf16.mxu0 %v752
    %1000 = vmatpush1.bf16.msra.mxu0 %v751
    %1001 = vmatprep.subr.bf16.mxu0 0
    %1002 = vmatpush1.bf16.msra.mxu0 0
    %1003 = vmatprep.subr.bf16.mxu0 0
    %1004 = vmatpush1.bf16.msra.mxu0 0
    %1005 = vmatprep.subr.bf16.mxu0 0
    %1006 = vmatpush1.bf16.msra.mxu0 0
    %1007 = vmatprep.subr.bf16.mxu0 0
    %1008 = vmatpush1.bf16.msra.mxu0 0
    %1009 = vmatprep.subr.bf16.mxu0 0
    %1010 = vmatpush1.bf16.msra.mxu0 0
    %1011 = vmatprep.subr.bf16.mxu0 0
    %1012 = vmatpush1.bf16.msra.mxu0 0
    %1013 = vmatprep.subr.bf16.mxu0 0
    %1014 = vmatpush1.bf16.msra.mxu0 0
    %1015 = vmatprep.subr.bf16.mxu0 0
    %1016 = vmatpush1.bf16.msra.mxu0 0
    %1017 = vmatprep.subr.bf16.mxu0 0
    %1018 = vmatpush1.bf16.msra.mxu0 0
    %1019 = vmatprep.subr.bf16.mxu0 0
    %1020 = vmatpush1.bf16.msra.mxu0 0
    %1021 = vmatprep.subr.bf16.mxu0 0
    %1022 = vmatpush1.bf16.msra.mxu0 0
    %1023 = vmatprep.subr.bf16.mxu0 0
    %1024 = vmatpush1.bf16.msra.mxu0 0
    %1025 = vmatprep.subr.bf16.mxu0 0
    %1026 = vmatpush1.bf16.msra.mxu0 0
    %1027 = vmatprep.subr.bf16.mxu0 0
    %1028 = vmatpush1.bf16.msra.mxu0 0
    %1029 = vmatprep.mubr.bf16.mxu0 0
    %1030 = vmatmul.mubr.bf16.gmra.mrb[0].mxu0 %v790
    %v1031 = vpop.f32.mrb[0].mxu0
    %v1032 = vadd.f32 %v592, %v1031
    %v1033 = vpop.f32.mrb[0].mxu0
    %v1034 = vadd.f32 %v596, %v1033
    %v1035 = vpop.f32.mrb[0].mxu0
    %v1036 = vpop.f32.mrb[0].mxu0
    %1037 = vdwg.mxu0
    %1038 = vmatprep.subr.bf16.mxu0 %v738
    %1039 = vmatpush1.bf16.msra.mxu0 %v737
    %1040 = vmatprep.subr.bf16.mxu0 %v754
    %1041 = vmatpush1.bf16.msra.mxu0 %v753
    %1042 = vmatprep.subr.bf16.mxu0 0
    %1043 = vmatpush1.bf16.msra.mxu0 0
    %1044 = vmatprep.subr.bf16.mxu0 0
    %1045 = vmatpush1.bf16.msra.mxu0 0
    %1046 = vmatprep.subr.bf16.mxu0 0
    %1047 = vmatpush1.bf16.msra.mxu0 0
    %1048 = vmatprep.subr.bf16.mxu0 0
    %1049 = vmatpush1.bf16.msra.mxu0 0
    %1050 = vmatprep.subr.bf16.mxu0 0
    %1051 = vmatpush1.bf16.msra.mxu0 0
    %1052 = vmatprep.subr.bf16.mxu0 0
    %1053 = vmatpush1.bf16.msra.mxu0 0
    %1054 = vmatprep.subr.bf16.mxu0 0
    %1055 = vmatpush1.bf16.msra.mxu0 0
    %1056 = vmatprep.subr.bf16.mxu0 0
    %1057 = vmatpush1.bf16.msra.mxu0 0
    %1058 = vmatprep.subr.bf16.mxu0 0
    %1059 = vmatpush1.bf16.msra.mxu0 0
    %1060 = vmatprep.subr.bf16.mxu0 0
    %1061 = vmatpush1.bf16.msra.mxu0 0
    %1062 = vmatprep.subr.bf16.mxu0 0
    %1063 = vmatpush1.bf16.msra.mxu0 0
    %1064 = vmatprep.subr.bf16.mxu0 0
    %1065 = vmatpush1.bf16.msra.mxu0 0
    %1066 = vmatprep.subr.bf16.mxu0 0
    %1067 = vmatpush1.bf16.msra.mxu0 0
    %1068 = vmatprep.subr.bf16.mxu0 0
    %1069 = vmatpush1.bf16.msra.mxu0 0
    %1070 = vmatprep.mubr.bf16.mxu0 0
    %1071 = vmatmul.mubr.bf16.gmra.mrb[0].mxu0 %v790
    %v1072 = vpop.f32.mrb[0].mxu0
    %v1073 = vadd.f32 %v600, %v1072
    %v1074 = vpop.f32.mrb[0].mxu0
    %v1075 = vadd.f32 %v604, %v1074
    %v1076 = vpop.f32.mrb[0].mxu0
    %v1077 = vpop.f32.mrb[0].mxu0
    %1078 = vdwg.mxu0
    %1079 = vmatprep.subr.bf16.mxu0 %v740
    %1080 = vmatpush1.bf16.msra.mxu0 %v739
    %1081 = vmatprep.subr.bf16.mxu0 %v756
    %1082 = vmatpush1.bf16.msra.mxu0 %v755
    %1083 = vmatprep.subr.bf16.mxu0 0
    %1084 = vmatpush1.bf16.msra.mxu0 0
    %1085 = vmatprep.subr.bf16.mxu0 0
    %1086 = vmatpush1.bf16.msra.mxu0 0
    %1087 = vmatprep.subr.bf16.mxu0 0
    %1088 = vmatpush1.bf16.msra.mxu0 0
    %1089 = vmatprep.subr.bf16.mxu0 0
    %1090 = vmatpush1.bf16.msra.mxu0 0
    %1091 = vmatprep.subr.bf16.mxu0 0
    %1092 = vmatpush1.bf16.msra.mxu0 0
    %1093 = vmatprep.subr.bf16.mxu0 0
    %1094 = vmatpush1.bf16.msra.mxu0 0
    %1095 = vmatprep.subr.bf16.mxu0 0
    %1096 = vmatpush1.bf16.msra.mxu0 0
    %1097 = vmatprep.subr.bf16.mxu0 0
    %1098 = vmatpush1.bf16.msra.mxu0 0
    %1099 = vmatprep.subr.bf16.mxu0 0
    %1100 = vmatpush1.bf16.msra.mxu0 0
    %1101 = vmatprep.subr.bf16.mxu0 0
    %1102 = vmatpush1.bf16.msra.mxu0 0
    %1103 = vmatprep.subr.bf16.mxu0 0
    %1104 = vmatpush1.bf16.msra.mxu0 0
    %1105 = vmatprep.subr.bf16.mxu0 0
    %1106 = vmatpush1.bf16.msra.mxu0 0
    %1107 = vmatprep.subr.bf16.mxu0 0
    %1108 = vmatpush1.bf16.msra.mxu0 0
    %1109 = vmatprep.subr.bf16.mxu0 0
    %1110 = vmatpush1.bf16.msra.mxu0 0
    %1111 = vmatprep.mubr.bf16.mxu0 0
    %1112 = vmatmul.mubr.bf16.gmra.mrb[0].mxu0 %v790
    %v1113 = vpop.f32.mrb[0].mxu0
    %v1114 = vadd.f32 %v608, %v1113
    %v1115 = vpop.f32.mrb[0].mxu0
    %v1116 = vadd.f32 %v612, %v1115
    %v1117 = vpop.f32.mrb[0].mxu0
    %v1118 = vpop.f32.mrb[0].mxu0
    %1119 = vdwg.mxu0
    %v1120 = vmax.f32 %v827, 0.0
    %v1121 = vmax.f32 %v829, 0.0
    %v1122 = vmax.f32 %v868, 0.0
    %v1123 = vmax.f32 %v870, 0.0
    %v1124 = vmax.f32 %v909, 0.0
    %v1125 = vmax.f32 %v911, 0.0
    %v1126 = vmax.f32 %v950, 0.0
    %v1127 = vmax.f32 %v952, 0.0
    %v1128 = vmax.f32 %v991, 0.0
    %v1129 = vmax.f32 %v993, 0.0
    %v1130 = vmax.f32 %v1032, 0.0
    %v1131 = vmax.f32 %v1034, 0.0
    %v1132 = vmax.f32 %v1073, 0.0
    %v1133 = vmax.f32 %v1075, 0.0
    %v1134 = vmax.f32 %v1114, 0.0
    %v1135 = vmax.f32 %v1116, 0.0
    %v1136 = vpack.c.bf16 %v1120, %v1120
    %v1137 = vpack.c.bf16 %v1121, %v1121
    %v1138 = vpack.c.bf16 %v1122, %v1122
    %v1139 = vpack.c.bf16 %v1123, %v1123
    %v1140 = vpack.c.bf16 %v1124, %v1124
    %v1141 = vpack.c.bf16 %v1125, %v1125
    %v1142 = vpack.c.bf16 %v1126, %v1126
    %v1143 = vpack.c.bf16 %v1127, %v1127
    %v1144 = vpack.c.bf16 %v1128, %v1128
    %v1145 = vpack.c.bf16 %v1129, %v1129
    %v1146 = vpack.c.bf16 %v1130, %v1130
    %v1147 = vpack.c.bf16 %v1131, %v1131
    %v1148 = vpack.c.bf16 %v1132, %v1132
    %v1149 = vpack.c.bf16 %v1133, %v1133
    %v1150 = vpack.c.bf16 %v1134, %v1134
    %v1151 = vpack.c.bf16 %v1135, %v1135
    %v1152 = vld [vmem:[%s9] sm:$0xf]
    %v1153 = vld [vmem:[%s9 + $0x4] sm:$0xf]
    %v1154 = vld [vmem:[%s9 + $0x8] sm:$0xf]
    %v1155 = vld [vmem:[%s9 + $0xc] sm:$0xf]
    %v1156 = vld [vmem:[%s9 + $0x10] sm:$0xf]
    %v1157 = vld [vmem:[%s9 + $0x14] sm:$0xf]
    %v1158 = vld [vmem:[%s9 + $0x18] sm:$0xf]
    %v1159 = vld [vmem:[%s9 + $0x1c] sm:$0xf]
    %v1160 = vld [vmem:[%s9 + $0x20] sm:$0xf]
    %v1161 = vld [vmem:[%s9 + $0x24] sm:$0xf]
    %v1162 = vld [vmem:[%s9 + $0x28] sm:$0xf]
    %v1163 = vld [vmem:[%s9 + $0x2c] sm:$0xf]
    %v1164 = vld [vmem:[%s9 + $0x30] sm:$0xf]
    %v1165 = vld [vmem:[%s9 + $0x34] sm:$0xf]
    %v1166 = vld [vmem:[%s9 + $0x38] sm:$0xf]
    %v1167 = vld [vmem:[%s9 + $0x3c] sm:$0xf]
    %v1168 = vld [vmem:[%s9 + $0x40] sm:$0xf]
    %v1169 = vld [vmem:[%s9 + $0x44] sm:$0xf]
    %v1170 = vld [vmem:[%s9 + $0x48] sm:$0xf]
    %v1171 = vld [vmem:[%s9 + $0x4c] sm:$0xf]
    %v1172 = vld [vmem:[%s9 + $0x50] sm:$0xf]
    %v1173 = vld [vmem:[%s9 + $0x54] sm:$0xf]
    %v1174 = vld [vmem:[%s9 + $0x58] sm:$0xf]
    %v1175 = vld [vmem:[%s9 + $0x5c] sm:$0xf]
    %v1176 = vld [vmem:[%s9 + $0x60] sm:$0xf]
    %v1177 = vld [vmem:[%s9 + $0x64] sm:$0xf]
    %v1178 = vld [vmem:[%s9 + $0x68] sm:$0xf]
    %v1179 = vld [vmem:[%s9 + $0x6c] sm:$0xf]
    %v1180 = vld [vmem:[%s9 + $0x70] sm:$0xf]
    %v1181 = vld [vmem:[%s9 + $0x74] sm:$0xf]
    %v1182 = vld [vmem:[%s9 + $0x78] sm:$0xf]
    %v1183 = vld [vmem:[%s9 + $0x7c] sm:$0xf]
    %v1184 = vld [vmem:[%s9 + $0x80] sm:$0xf]
    %v1185 = vld [vmem:[%s9 + $0x84] sm:$0xf]
    %v1186 = vld [vmem:[%s9 + $0x88] sm:$0xf]
    %v1187 = vld [vmem:[%s9 + $0x8c] sm:$0xf]
    %v1188 = vld [vmem:[%s9 + $0x90] sm:$0xf]
    %v1189 = vld [vmem:[%s9 + $0x94] sm:$0xf]
    %v1190 = vld [vmem:[%s9 + $0x98] sm:$0xf]
    %v1191 = vld [vmem:[%s9 + $0x9c] sm:$0xf]
    %v1192 = vld [vmem:[%s9 + $0xa0] sm:$0xf]
    %v1193 = vld [vmem:[%s9 + $0xa4] sm:$0xf]
    %v1194 = vld [vmem:[%s9 + $0xa8] sm:$0xf]
    %v1195 = vld [vmem:[%s9 + $0xac] sm:$0xf]
    %v1196 = vld [vmem:[%s9 + $0xb0] sm:$0xf]
    %v1197 = vld [vmem:[%s9 + $0xb4] sm:$0xf]
    %v1198 = vld [vmem:[%s9 + $0xb8] sm:$0xf]
    %v1199 = vld [vmem:[%s9 + $0xbc] sm:$0xf]
    %v1200 = vld [vmem:[%s9 + $0xc0] sm:$0xf]
    %v1201 = vld [vmem:[%s9 + $0xc4] sm:$0xf]
    %v1202 = vld [vmem:[%s9 + $0xc8] sm:$0xf]
    %v1203 = vld [vmem:[%s9 + $0xcc] sm:$0xf]
    %v1204 = vld [vmem:[%s9 + $0xd0] sm:$0xf]
    %v1205 = vld [vmem:[%s9 + $0xd4] sm:$0xf]
    %v1206 = vld [vmem:[%s9 + $0xd8] sm:$0xf]
    %v1207 = vld [vmem:[%s9 + $0xdc] sm:$0xf]
    %v1208 = vld [vmem:[%s9 + $0xe0] sm:$0xf]
    %v1209 = vld [vmem:[%s9 + $0xe4] sm:$0xf]
    %v1210 = vld [vmem:[%s9 + $0xe8] sm:$0xf]
    %v1211 = vld [vmem:[%s9 + $0xec] sm:$0xf]
    %v1212 = vld [vmem:[%s9 + $0xf0] sm:$0xf]
    %v1213 = vld [vmem:[%s9 + $0xf4] sm:$0xf]
    %v1214 = vld [vmem:[%s9 + $0xf8] sm:$0xf]
    %v1215 = vld [vmem:[%s9 + $0xfc] sm:$0xf]
    %v1216 = vld [vmem:[%s9 + $0x100] sm:$0xf]
    %v1217 = vld [vmem:[%s9 + $0x104] sm:$0xf]
    %v1218 = vld [vmem:[%s9 + $0x108] sm:$0xf]
    %v1219 = vld [vmem:[%s9 + $0x10c] sm:$0xf]
    %v1220 = vld [vmem:[%s9 + $0x110] sm:$0xf]
    %v1221 = vld [vmem:[%s9 + $0x114] sm:$0xf]
    %v1222 = vld [vmem:[%s9 + $0x118] sm:$0xf]
    %v1223 = vld [vmem:[%s9 + $0x11c] sm:$0xf]
    %v1224 = vld [vmem:[%s9 + $0x120] sm:$0xf]
    %v1225 = vld [vmem:[%s9 + $0x124] sm:$0xf]
    %v1226 = vld [vmem:[%s9 + $0x128] sm:$0xf]
    %v1227 = vld [vmem:[%s9 + $0x12c] sm:$0xf]
    %v1228 = vld [vmem:[%s9 + $0x130] sm:$0xf]
    %v1229 = vld [vmem:[%s9 + $0x134] sm:$0xf]
    %v1230 = vld [vmem:[%s9 + $0x138] sm:$0xf]
    %v1231 = vld [vmem:[%s9 + $0x13c] sm:$0xf]
    %v1232 = vld [vmem:[%s9 + $0x140] sm:$0xf]
    %v1233 = vld [vmem:[%s9 + $0x144] sm:$0xf]
    %v1234 = vld [vmem:[%s9 + $0x148] sm:$0xf]
    %v1235 = vld [vmem:[%s9 + $0x14c] sm:$0xf]
    %v1236 = vld [vmem:[%s9 + $0x150] sm:$0xf]
    %v1237 = vld [vmem:[%s9 + $0x154] sm:$0xf]
    %v1238 = vld [vmem:[%s9 + $0x158] sm:$0xf]
    %v1239 = vld [vmem:[%s9 + $0x15c] sm:$0xf]
    %v1240 = vld [vmem:[%s9 + $0x160] sm:$0xf]
    %v1241 = vld [vmem:[%s9 + $0x164] sm:$0xf]
    %v1242 = vld [vmem:[%s9 + $0x168] sm:$0xf]
    %v1243 = vld [vmem:[%s9 + $0x16c] sm:$0xf]
    %v1244 = vld [vmem:[%s9 + $0x170] sm:$0xf]
    %v1245 = vld [vmem:[%s9 + $0x174] sm:$0xf]
    %v1246 = vld [vmem:[%s9 + $0x178] sm:$0xf]
    %v1247 = vld [vmem:[%s9 + $0x17c] sm:$0xf]
    %v1248 = vld [vmem:[%s9 + $0x180] sm:$0xf]
    %v1249 = vld [vmem:[%s9 + $0x184] sm:$0xf]
    %v1250 = vld [vmem:[%s9 + $0x188] sm:$0xf]
    %v1251 = vld [vmem:[%s9 + $0x18c] sm:$0xf]
    %v1252 = vld [vmem:[%s9 + $0x190] sm:$0xf]
    %v1253 = vld [vmem:[%s9 + $0x194] sm:$0xf]
    %v1254 = vld [vmem:[%s9 + $0x198] sm:$0xf]
    %v1255 = vld [vmem:[%s9 + $0x19c] sm:$0xf]
    %v1256 = vld [vmem:[%s9 + $0x1a0] sm:$0xf]
    %v1257 = vld [vmem:[%s9 + $0x1a4] sm:$0xf]
    %v1258 = vld [vmem:[%s9 + $0x1a8] sm:$0xf]
    %v1259 = vld [vmem:[%s9 + $0x1ac] sm:$0xf]
    %v1260 = vld [vmem:[%s9 + $0x1b0] sm:$0xf]
    %v1261 = vld [vmem:[%s9 + $0x1b4] sm:$0xf]
    %v1262 = vld [vmem:[%s9 + $0x1b8] sm:$0xf]
    %v1263 = vld [vmem:[%s9 + $0x1bc] sm:$0xf]
    %v1264 = vld [vmem:[%s9 + $0x1c0] sm:$0xf]
    %v1265 = vld [vmem:[%s9 + $0x1c4] sm:$0xf]
    %v1266 = vld [vmem:[%s9 + $0x1c8] sm:$0xf]
    %v1267 = vld [vmem:[%s9 + $0x1cc] sm:$0xf]
    %v1268 = vld [vmem:[%s9 + $0x1d0] sm:$0xf]
    %v1269 = vld [vmem:[%s9 + $0x1d4] sm:$0xf]
    %v1270 = vld [vmem:[%s9 + $0x1d8] sm:$0xf]
    %v1271 = vld [vmem:[%s9 + $0x1dc] sm:$0xf]
    %v1272 = vld [vmem:[%s9 + $0x1e0] sm:$0xf]
    %v1273 = vld [vmem:[%s9 + $0x1e4] sm:$0xf]
    %v1274 = vld [vmem:[%s9 + $0x1e8] sm:$0xf]
    %v1275 = vld [vmem:[%s9 + $0x1ec] sm:$0xf]
    %v1276 = vld [vmem:[%s9 + $0x1f0] sm:$0xf]
    %v1277 = vld [vmem:[%s9 + $0x1f4] sm:$0xf]
    %v1278 = vld [vmem:[%s9 + $0x1f8] sm:$0xf]
    %v1279 = vld [vmem:[%s9 + $0x1fc] sm:$0xf]
    %v1280 = vld [vmem:[%s9 + $0x200] sm:$0xf]
    %v1281 = vld [vmem:[%s9 + $0x204] sm:$0xf]
    %v1282 = vld [vmem:[%s9 + $0x208] sm:$0xf]
    %v1283 = vld [vmem:[%s9 + $0x20c] sm:$0xf]
    %v1284 = vld [vmem:[%s9 + $0x210] sm:$0xf]
    %v1285 = vld [vmem:[%s9 + $0x214] sm:$0xf]
    %v1286 = vld [vmem:[%s9 + $0x218] sm:$0xf]
    %v1287 = vld [vmem:[%s9 + $0x21c] sm:$0xf]
    %v1288 = vld [vmem:[%s9 + $0x220] sm:$0xf]
    %v1289 = vld [vmem:[%s9 + $0x224] sm:$0xf]
    %v1290 = vld [vmem:[%s9 + $0x228] sm:$0xf]
    %v1291 = vld [vmem:[%s9 + $0x22c] sm:$0xf]
    %v1292 = vld [vmem:[%s9 + $0x230] sm:$0xf]
    %v1293 = vld [vmem:[%s9 + $0x234] sm:$0xf]
    %v1294 = vld [vmem:[%s9 + $0x238] sm:$0xf]
    %v1295 = vld [vmem:[%s9 + $0x23c] sm:$0xf]
    %v1296 = vld [vmem:[%s9 + $0x240] sm:$0xf]
    %v1297 = vld [vmem:[%s9 + $0x244] sm:$0xf]
    %v1298 = vld [vmem:[%s9 + $0x248] sm:$0xf]
    %v1299 = vld [vmem:[%s9 + $0x24c] sm:$0xf]
    %v1300 = vld [vmem:[%s9 + $0x250] sm:$0xf]
    %v1301 = vld [vmem:[%s9 + $0x254] sm:$0xf]
    %v1302 = vld [vmem:[%s9 + $0x258] sm:$0xf]
    %v1303 = vld [vmem:[%s9 + $0x25c] sm:$0xf]
    %v1304 = vld [vmem:[%s9 + $0x260] sm:$0xf]
    %v1305 = vld [vmem:[%s9 + $0x264] sm:$0xf]
    %v1306 = vld [vmem:[%s9 + $0x268] sm:$0xf]
    %v1307 = vld [vmem:[%s9 + $0x26c] sm:$0xf]
    %v1308 = vld [vmem:[%s9 + $0x270] sm:$0xf]
    %v1309 = vld [vmem:[%s9 + $0x274] sm:$0xf]
    %v1310 = vld [vmem:[%s9 + $0x278] sm:$0xf]
    %v1311 = vld [vmem:[%s9 + $0x27c] sm:$0xf]
    %v1312 = vld [vmem:[%s9 + $0x280] sm:$0xf]
    %v1313 = vld [vmem:[%s9 + $0x284] sm:$0xf]
    %v1314 = vld [vmem:[%s9 + $0x288] sm:$0xf]
    %v1315 = vld [vmem:[%s9 + $0x28c] sm:$0xf]
    %v1316 = vld [vmem:[%s9 + $0x290] sm:$0xf]
    %v1317 = vld [vmem:[%s9 + $0x294] sm:$0xf]
    %v1318 = vld [vmem:[%s9 + $0x298] sm:$0xf]
    %v1319 = vld [vmem:[%s9 + $0x29c] sm:$0xf]
    %v1320 = vld [vmem:[%s9 + $0x2a0] sm:$0xf]
    %v1321 = vld [vmem:[%s9 + $0x2a4] sm:$0xf]
    %v1322 = vld [vmem:[%s9 + $0x2a8] sm:$0xf]
    %v1323 = vld [vmem:[%s9 + $0x2ac] sm:$0xf]
    %v1324 = vld [vmem:[%s9 + $0x2b0] sm:$0xf]
    %v1325 = vld [vmem:[%s9 + $0x2b4] sm:$0xf]
    %v1326 = vld [vmem:[%s9 + $0x2b8] sm:$0xf]
    %v1327 = vld [vmem:[%s9 + $0x2bc] sm:$0xf]
    %v1328 = vld [vmem:[%s9 + $0x2c0] sm:$0xf]
    %v1329 = vld [vmem:[%s9 + $0x2c4] sm:$0xf]
    %v1330 = vld [vmem:[%s9 + $0x2c8] sm:$0xf]
    %v1331 = vld [vmem:[%s9 + $0x2cc] sm:$0xf]
    %v1332 = vld [vmem:[%s9 + $0x2d0] sm:$0xf]
    %v1333 = vld [vmem:[%s9 + $0x2d4] sm:$0xf]
    %v1334 = vld [vmem:[%s9 + $0x2d8] sm:$0xf]
    %v1335 = vld [vmem:[%s9 + $0x2dc] sm:$0xf]
    %v1336 = vld [vmem:[%s9 + $0x2e0] sm:$0xf]
    %v1337 = vld [vmem:[%s9 + $0x2e4] sm:$0xf]
    %v1338 = vld [vmem:[%s9 + $0x2e8] sm:$0xf]
    %v1339 = vld [vmem:[%s9 + $0x2ec] sm:$0xf]
    %v1340 = vld [vmem:[%s9 + $0x2f0] sm:$0xf]
    %v1341 = vld [vmem:[%s9 + $0x2f4] sm:$0xf]
    %v1342 = vld [vmem:[%s9 + $0x2f8] sm:$0xf]
    %v1343 = vld [vmem:[%s9 + $0x2fc] sm:$0xf]
    %v1344 = vld [vmem:[%s9 + $0x300] sm:$0xf]
    %v1345 = vld [vmem:[%s9 + $0x304] sm:$0xf]
    %v1346 = vld [vmem:[%s9 + $0x308] sm:$0xf]
    %v1347 = vld [vmem:[%s9 + $0x30c] sm:$0xf]
    %v1348 = vld [vmem:[%s9 + $0x310] sm:$0xf]
    %v1349 = vld [vmem:[%s9 + $0x314] sm:$0xf]
    %v1350 = vld [vmem:[%s9 + $0x318] sm:$0xf]
    %v1351 = vld [vmem:[%s9 + $0x31c] sm:$0xf]
    %v1352 = vld [vmem:[%s9 + $0x320] sm:$0xf]
    %v1353 = vld [vmem:[%s9 + $0x324] sm:$0xf]
    %v1354 = vld [vmem:[%s9 + $0x328] sm:$0xf]
    %v1355 = vld [vmem:[%s9 + $0x32c] sm:$0xf]
    %v1356 = vld [vmem:[%s9 + $0x330] sm:$0xf]
    %v1357 = vld [vmem:[%s9 + $0x334] sm:$0xf]
    %v1358 = vld [vmem:[%s9 + $0x338] sm:$0xf]
    %v1359 = vld [vmem:[%s9 + $0x33c] sm:$0xf]
    %v1360 = vld [vmem:[%s9 + $0x340] sm:$0xf]
    %v1361 = vld [vmem:[%s9 + $0x344] sm:$0xf]
    %v1362 = vld [vmem:[%s9 + $0x348] sm:$0xf]
    %v1363 = vld [vmem:[%s9 + $0x34c] sm:$0xf]
    %v1364 = vld [vmem:[%s9 + $0x350] sm:$0xf]
    %v1365 = vld [vmem:[%s9 + $0x354] sm:$0xf]
    %v1366 = vld [vmem:[%s9 + $0x358] sm:$0xf]
    %v1367 = vld [vmem:[%s9 + $0x35c] sm:$0xf]
    %v1368 = vld [vmem:[%s9 + $0x360] sm:$0xf]
    %v1369 = vld [vmem:[%s9 + $0x364] sm:$0xf]
    %v1370 = vld [vmem:[%s9 + $0x368] sm:$0xf]
    %v1371 = vld [vmem:[%s9 + $0x36c] sm:$0xf]
    %v1372 = vld [vmem:[%s9 + $0x370] sm:$0xf]
    %v1373 = vld [vmem:[%s9 + $0x374] sm:$0xf]
    %v1374 = vld [vmem:[%s9 + $0x378] sm:$0xf]
    %v1375 = vld [vmem:[%s9 + $0x37c] sm:$0xf]
    %v1376 = vld [vmem:[%s9 + $0x380] sm:$0xf]
    %v1377 = vld [vmem:[%s9 + $0x384] sm:$0xf]
    %v1378 = vld [vmem:[%s9 + $0x388] sm:$0xf]
    %v1379 = vld [vmem:[%s9 + $0x38c] sm:$0xf]
    %v1380 = vld [vmem:[%s9 + $0x390] sm:$0xf]
    %v1381 = vld [vmem:[%s9 + $0x394] sm:$0xf]
    %v1382 = vld [vmem:[%s9 + $0x398] sm:$0xf]
    %v1383 = vld [vmem:[%s9 + $0x39c] sm:$0xf]
    %v1384 = vld [vmem:[%s9 + $0x3a0] sm:$0xf]
    %v1385 = vld [vmem:[%s9 + $0x3a4] sm:$0xf]
    %v1386 = vld [vmem:[%s9 + $0x3a8] sm:$0xf]
    %v1387 = vld [vmem:[%s9 + $0x3ac] sm:$0xf]
    %v1388 = vld [vmem:[%s9 + $0x3b0] sm:$0xf]
    %v1389 = vld [vmem:[%s9 + $0x3b4] sm:$0xf]
    %v1390 = vld [vmem:[%s9 + $0x3b8] sm:$0xf]
    %v1391 = vld [vmem:[%s9 + $0x3bc] sm:$0xf]
    %v1392 = vld [vmem:[%s9 + $0x3c0] sm:$0xf]
    %v1393 = vld [vmem:[%s9 + $0x3c4] sm:$0xf]
    %v1394 = vld [vmem:[%s9 + $0x3c8] sm:$0xf]
    %v1395 = vld [vmem:[%s9 + $0x3cc] sm:$0xf]
    %v1396 = vld [vmem:[%s9 + $0x3d0] sm:$0xf]
    %v1397 = vld [vmem:[%s9 + $0x3d4] sm:$0xf]
    %v1398 = vld [vmem:[%s9 + $0x3d8] sm:$0xf]
    %v1399 = vld [vmem:[%s9 + $0x3dc] sm:$0xf]
    %v1400 = vld [vmem:[%s9 + $0x3e0] sm:$0xf]
    %v1401 = vld [vmem:[%s9 + $0x3e4] sm:$0xf]
    %v1402 = vld [vmem:[%s9 + $0x3e8] sm:$0xf]
    %v1403 = vld [vmem:[%s9 + $0x3ec] sm:$0xf]
    %v1404 = vld [vmem:[%s9 + $0x3f0] sm:$0xf]
    %v1405 = vld [vmem:[%s9 + $0x3f4] sm:$0xf]
    %v1406 = vld [vmem:[%s9 + $0x3f8] sm:$0xf]
    %v1407 = vld [vmem:[%s9 + $0x3fc] sm:$0xf]
    %v1408 = vld [vmem:[%s10] sm:$0x1]
    %v1410 = vlaneseq
    %v1411 = vshrl.u32 %v1410, 7
    %v1412 = vsub.s32 0, %v1411
    %v1413 = vrot.slane %v1408, %v1412
    %v1671 = vunpack.c.l.b16 %v1152
    %v1672 = vunpack.c.l.b16 %v1153
    %v1673 = vunpack.c.l.b16 %v1154
    %v1674 = vunpack.c.l.b16 %v1155
    %v1675 = vunpack.c.l.b16 %v1156
    %v1676 = vunpack.c.l.b16 %v1157
    %v1677 = vunpack.c.l.b16 %v1158
    %v1678 = vunpack.c.l.b16 %v1159
    %v1679 = vunpack.c.l.b16 %v1160
    %v1680 = vunpack.c.l.b16 %v1161
    %v1681 = vunpack.c.l.b16 %v1162
    %v1682 = vunpack.c.l.b16 %v1163
    %v1683 = vunpack.c.l.b16 %v1164
    %v1684 = vunpack.c.l.b16 %v1165
    %v1685 = vunpack.c.l.b16 %v1166
    %v1686 = vunpack.c.l.b16 %v1167
    %v1687 = vunpack.c.l.b16 %v1168
    %v1688 = vunpack.c.l.b16 %v1169
    %v1689 = vunpack.c.l.b16 %v1170
    %v1690 = vunpack.c.l.b16 %v1171
    %v1691 = vunpack.c.l.b16 %v1172
    %v1692 = vunpack.c.l.b16 %v1173
    %v1693 = vunpack.c.l.b16 %v1174
    %v1694 = vunpack.c.l.b16 %v1175
    %v1695 = vunpack.c.l.b16 %v1176
    %v1696 = vunpack.c.l.b16 %v1177
    %v1697 = vunpack.c.l.b16 %v1178
    %v1698 = vunpack.c.l.b16 %v1179
    %v1699 = vunpack.c.l.b16 %v1180
    %v1700 = vunpack.c.l.b16 %v1181
    %v1701 = vunpack.c.l.b16 %v1182
    %v1702 = vunpack.c.l.b16 %v1183
    %v1703 = vunpack.c.l.b16 %v1184
    %v1704 = vunpack.c.l.b16 %v1185
    %v1705 = vunpack.c.l.b16 %v1186
    %v1706 = vunpack.c.l.b16 %v1187
    %v1707 = vunpack.c.l.b16 %v1188
    %v1708 = vunpack.c.l.b16 %v1189
    %v1709 = vunpack.c.l.b16 %v1190
    %v1710 = vunpack.c.l.b16 %v1191
    %v1711 = vunpack.c.l.b16 %v1192
    %v1712 = vunpack.c.l.b16 %v1193
    %v1713 = vunpack.c.l.b16 %v1194
    %v1714 = vunpack.c.l.b16 %v1195
    %v1715 = vunpack.c.l.b16 %v1196
    %v1716 = vunpack.c.l.b16 %v1197
    %v1717 = vunpack.c.l.b16 %v1198
    %v1718 = vunpack.c.l.b16 %v1199
    %v1719 = vunpack.c.l.b16 %v1200
    %v1720 = vunpack.c.l.b16 %v1201
    %v1721 = vunpack.c.l.b16 %v1202
    %v1722 = vunpack.c.l.b16 %v1203
    %v1723 = vunpack.c.l.b16 %v1204
    %v1724 = vunpack.c.l.b16 %v1205
    %v1725 = vunpack.c.l.b16 %v1206
    %v1726 = vunpack.c.l.b16 %v1207
    %v1727 = vunpack.c.l.b16 %v1208
    %v1728 = vunpack.c.l.b16 %v1209
    %v1729 = vunpack.c.l.b16 %v1210
    %v1730 = vunpack.c.l.b16 %v1211
    %v1731 = vunpack.c.l.b16 %v1212
    %v1732 = vunpack.c.l.b16 %v1213
    %v1733 = vunpack.c.l.b16 %v1214
    %v1734 = vunpack.c.l.b16 %v1215
    %v1735 = vunpack.c.l.b16 %v1216
    %v1736 = vunpack.c.l.b16 %v1217
    %v1737 = vunpack.c.l.b16 %v1218
    %v1738 = vunpack.c.l.b16 %v1219
    %v1739 = vunpack.c.l.b16 %v1220
    %v1740 = vunpack.c.l.b16 %v1221
    %v1741 = vunpack.c.l.b16 %v1222
    %v1742 = vunpack.c.l.b16 %v1223
    %v1743 = vunpack.c.l.b16 %v1224
    %v1744 = vunpack.c.l.b16 %v1225
    %v1745 = vunpack.c.l.b16 %v1226
    %v1746 = vunpack.c.l.b16 %v1227
    %v1747 = vunpack.c.l.b16 %v1228
    %v1748 = vunpack.c.l.b16 %v1229
    %v1749 = vunpack.c.l.b16 %v1230
    %v1750 = vunpack.c.l.b16 %v1231
    %v1751 = vunpack.c.l.b16 %v1232
    %v1752 = vunpack.c.l.b16 %v1233
    %v1753 = vunpack.c.l.b16 %v1234
    %v1754 = vunpack.c.l.b16 %v1235
    %v1755 = vunpack.c.l.b16 %v1236
    %v1756 = vunpack.c.l.b16 %v1237
    %v1757 = vunpack.c.l.b16 %v1238
    %v1758 = vunpack.c.l.b16 %v1239
    %v1759 = vunpack.c.l.b16 %v1240
    %v1760 = vunpack.c.l.b16 %v1241
    %v1761 = vunpack.c.l.b16 %v1242
    %v1762 = vunpack.c.l.b16 %v1243
    %v1763 = vunpack.c.l.b16 %v1244
    %v1764 = vunpack.c.l.b16 %v1245
    %v1765 = vunpack.c.l.b16 %v1246
    %v1766 = vunpack.c.l.b16 %v1247
    %v1767 = vunpack.c.l.b16 %v1248
    %v1768 = vunpack.c.l.b16 %v1249
    %v1769 = vunpack.c.l.b16 %v1250
    %v1770 = vunpack.c.l.b16 %v1251
    %v1771 = vunpack.c.l.b16 %v1252
    %v1772 = vunpack.c.l.b16 %v1253
    %v1773 = vunpack.c.l.b16 %v1254
    %v1774 = vunpack.c.l.b16 %v1255
    %v1775 = vunpack.c.l.b16 %v1256
    %v1776 = vunpack.c.l.b16 %v1257
    %v1777 = vunpack.c.l.b16 %v1258
    %v1778 = vunpack.c.l.b16 %v1259
    %v1779 = vunpack.c.l.b16 %v1260
    %v1780 = vunpack.c.l.b16 %v1261
    %v1781 = vunpack.c.l.b16 %v1262
    %v1782 = vunpack.c.l.b16 %v1263
    %v1783 = vunpack.c.l.b16 %v1264
    %v1784 = vunpack.c.l.b16 %v1265
    %v1785 = vunpack.c.l.b16 %v1266
    %v1786 = vunpack.c.l.b16 %v1267
    %v1787 = vunpack.c.l.b16 %v1268
    %v1788 = vunpack.c.l.b16 %v1269
    %v1789 = vunpack.c.l.b16 %v1270
    %v1790 = vunpack.c.l.b16 %v1271
    %v1791 = vunpack.c.l.b16 %v1272
    %v1792 = vunpack.c.l.b16 %v1273
    %v1793 = vunpack.c.l.b16 %v1274
    %v1794 = vunpack.c.l.b16 %v1275
    %v1795 = vunpack.c.l.b16 %v1276
    %v1796 = vunpack.c.l.b16 %v1277
    %v1797 = vunpack.c.l.b16 %v1278
    %v1798 = vunpack.c.l.b16 %v1279
    %v1799 = vunpack.c.l.b16 %v1280
    %v1800 = vunpack.c.l.b16 %v1281
    %v1801 = vunpack.c.l.b16 %v1282
    %v1802 = vunpack.c.l.b16 %v1283
    %v1803 = vunpack.c.l.b16 %v1284
    %v1804 = vunpack.c.l.b16 %v1285
    %v1805 = vunpack.c.l.b16 %v1286
    %v1806 = vunpack.c.l.b16 %v1287
    %v1807 = vunpack.c.l.b16 %v1288
    %v1808 = vunpack.c.l.b16 %v1289
    %v1809 = vunpack.c.l.b16 %v1290
    %v1810 = vunpack.c.l.b16 %v1291
    %v1811 = vunpack.c.l.b16 %v1292
    %v1812 = vunpack.c.l.b16 %v1293
    %v1813 = vunpack.c.l.b16 %v1294
    %v1814 = vunpack.c.l.b16 %v1295
    %v1815 = vunpack.c.l.b16 %v1296
    %v1816 = vunpack.c.l.b16 %v1297
    %v1817 = vunpack.c.l.b16 %v1298
    %v1818 = vunpack.c.l.b16 %v1299
    %v1819 = vunpack.c.l.b16 %v1300
    %v1820 = vunpack.c.l.b16 %v1301
    %v1821 = vunpack.c.l.b16 %v1302
    %v1822 = vunpack.c.l.b16 %v1303
    %v1823 = vunpack.c.l.b16 %v1304
    %v1824 = vunpack.c.l.b16 %v1305
    %v1825 = vunpack.c.l.b16 %v1306
    %v1826 = vunpack.c.l.b16 %v1307
    %v1827 = vunpack.c.l.b16 %v1308
    %v1828 = vunpack.c.l.b16 %v1309
    %v1829 = vunpack.c.l.b16 %v1310
    %v1830 = vunpack.c.l.b16 %v1311
    %v1831 = vunpack.c.l.b16 %v1312
    %v1832 = vunpack.c.l.b16 %v1313
    %v1833 = vunpack.c.l.b16 %v1314
    %v1834 = vunpack.c.l.b16 %v1315
    %v1835 = vunpack.c.l.b16 %v1316
    %v1836 = vunpack.c.l.b16 %v1317
    %v1837 = vunpack.c.l.b16 %v1318
    %v1838 = vunpack.c.l.b16 %v1319
    %v1839 = vunpack.c.l.b16 %v1320
    %v1840 = vunpack.c.l.b16 %v1321
    %v1841 = vunpack.c.l.b16 %v1322
    %v1842 = vunpack.c.l.b16 %v1323
    %v1843 = vunpack.c.l.b16 %v1324
    %v1844 = vunpack.c.l.b16 %v1325
    %v1845 = vunpack.c.l.b16 %v1326
    %v1846 = vunpack.c.l.b16 %v1327
    %v1847 = vunpack.c.l.b16 %v1328
    %v1848 = vunpack.c.l.b16 %v1329
    %v1849 = vunpack.c.l.b16 %v1330
    %v1850 = vunpack.c.l.b16 %v1331
    %v1851 = vunpack.c.l.b16 %v1332
    %v1852 = vunpack.c.l.b16 %v1333
    %v1853 = vunpack.c.l.b16 %v1334
    %v1854 = vunpack.c.l.b16 %v1335
    %v1855 = vunpack.c.l.b16 %v1336
    %v1856 = vunpack.c.l.b16 %v1337
    %v1857 = vunpack.c.l.b16 %v1338
    %v1858 = vunpack.c.l.b16 %v1339
    %v1859 = vunpack.c.l.b16 %v1340
    %v1860 = vunpack.c.l.b16 %v1341
    %v1861 = vunpack.c.l.b16 %v1342
    %v1862 = vunpack.c.l.b16 %v1343
    %v1863 = vunpack.c.l.b16 %v1344
    %v1864 = vunpack.c.l.b16 %v1345
    %v1865 = vunpack.c.l.b16 %v1346
    %v1866 = vunpack.c.l.b16 %v1347
    %v1867 = vunpack.c.l.b16 %v1348
    %v1868 = vunpack.c.l.b16 %v1349
    %v1869 = vunpack.c.l.b16 %v1350
    %v1870 = vunpack.c.l.b16 %v1351
    %v1871 = vunpack.c.l.b16 %v1352
    %v1872 = vunpack.c.l.b16 %v1353
    %v1873 = vunpack.c.l.b16 %v1354
    %v1874 = vunpack.c.l.b16 %v1355
    %v1875 = vunpack.c.l.b16 %v1356
    %v1876 = vunpack.c.l.b16 %v1357
    %v1877 = vunpack.c.l.b16 %v1358
    %v1878 = vunpack.c.l.b16 %v1359
    %v1879 = vunpack.c.l.b16 %v1360
    %v1880 = vunpack.c.l.b16 %v1361
    %v1881 = vunpack.c.l.b16 %v1362
    %v1882 = vunpack.c.l.b16 %v1363
    %v1883 = vunpack.c.l.b16 %v1364
    %v1884 = vunpack.c.l.b16 %v1365
    %v1885 = vunpack.c.l.b16 %v1366
    %v1886 = vunpack.c.l.b16 %v1367
    %v1887 = vunpack.c.l.b16 %v1368
    %v1888 = vunpack.c.l.b16 %v1369
    %v1889 = vunpack.c.l.b16 %v1370
    %v1890 = vunpack.c.l.b16 %v1371
    %v1891 = vunpack.c.l.b16 %v1372
    %v1892 = vunpack.c.l.b16 %v1373
    %v1893 = vunpack.c.l.b16 %v1374
    %v1894 = vunpack.c.l.b16 %v1375
    %v1895 = vunpack.c.l.b16 %v1376
    %v1896 = vunpack.c.l.b16 %v1377
    %v1897 = vunpack.c.l.b16 %v1378
    %v1898 = vunpack.c.l.b16 %v1379
    %v1899 = vunpack.c.l.b16 %v1380
    %v1900 = vunpack.c.l.b16 %v1381
    %v1901 = vunpack.c.l.b16 %v1382
    %v1902 = vunpack.c.l.b16 %v1383
    %v1903 = vunpack.c.l.b16 %v1384
    %v1904 = vunpack.c.l.b16 %v1385
    %v1905 = vunpack.c.l.b16 %v1386
    %v1906 = vunpack.c.l.b16 %v1387
    %v1907 = vunpack.c.l.b16 %v1388
    %v1908 = vunpack.c.l.b16 %v1389
    %v1909 = vunpack.c.l.b16 %v1390
    %v1910 = vunpack.c.l.b16 %v1391
    %v1911 = vunpack.c.l.b16 %v1392
    %v1912 = vunpack.c.l.b16 %v1393
    %v1913 = vunpack.c.l.b16 %v1394
    %v1914 = vunpack.c.l.b16 %v1395
    %v1915 = vunpack.c.l.b16 %v1396
    %v1916 = vunpack.c.l.b16 %v1397
    %v1917 = vunpack.c.l.b16 %v1398
    %v1918 = vunpack.c.l.b16 %v1399
    %v1919 = vunpack.c.l.b16 %v1400
    %v1920 = vunpack.c.l.b16 %v1401
    %v1921 = vunpack.c.l.b16 %v1402
    %v1922 = vunpack.c.l.b16 %v1403
    %v1923 = vunpack.c.l.b16 %v1404
    %v1924 = vunpack.c.l.b16 %v1405
    %v1925 = vunpack.c.l.b16 %v1406
    %v1926 = vunpack.c.l.b16 %v1407
    %v1927 = vpack.c.b16 %v1672, %v1671
    %v1928 = vpack.c.b16 %v1674, %v1673
    %v1929 = vpack.c.b16 %v1676, %v1675
    %v1930 = vpack.c.b16 %v1678, %v1677
    %v1931 = vpack.c.b16 %v1680, %v1679
    %v1932 = vpack.c.b16 %v1682, %v1681
    %v1933 = vpack.c.b16 %v1684, %v1683
    %v1934 = vpack.c.b16 %v1686, %v1685
    %v1935 = vpack.c.b16 %v1688, %v1687
    %v1936 = vpack.c.b16 %v1690, %v1689
    %v1937 = vpack.c.b16 %v1692, %v1691
    %v1938 = vpack.c.b16 %v1694, %v1693
    %v1939 = vpack.c.b16 %v1696, %v1695
    %v1940 = vpack.c.b16 %v1698, %v1697
    %v1941 = vpack.c.b16 %v1700, %v1699
    %v1942 = vpack.c.b16 %v1702, %v1701
    %v1943 = vpack.c.b16 %v1704, %v1703
    %v1944 = vpack.c.b16 %v1706, %v1705
    %v1945 = vpack.c.b16 %v1708, %v1707
    %v1946 = vpack.c.b16 %v1710, %v1709
    %v1947 = vpack.c.b16 %v1712, %v1711
    %v1948 = vpack.c.b16 %v1714, %v1713
    %v1949 = vpack.c.b16 %v1716, %v1715
    %v1950 = vpack.c.b16 %v1718, %v1717
    %v1951 = vpack.c.b16 %v1720, %v1719
    %v1952 = vpack.c.b16 %v1722, %v1721
    %v1953 = vpack.c.b16 %v1724, %v1723
    %v1954 = vpack.c.b16 %v1726, %v1725
    %v1955 = vpack.c.b16 %v1728, %v1727
    %v1956 = vpack.c.b16 %v1730, %v1729
    %v1957 = vpack.c.b16 %v1732, %v1731
    %v1958 = vpack.c.b16 %v1734, %v1733
    %v1959 = vpack.c.b16 %v1736, %v1735
    %v1960 = vpack.c.b16 %v1738, %v1737
    %v1961 = vpack.c.b16 %v1740, %v1739
    %v1962 = vpack.c.b16 %v1742, %v1741
    %v1963 = vpack.c.b16 %v1744, %v1743
    %v1964 = vpack.c.b16 %v1746, %v1745
    %v1965 = vpack.c.b16 %v1748, %v1747
    %v1966 = vpack.c.b16 %v1750, %v1749
    %v1967 = vpack.c.b16 %v1752, %v1751
    %v1968 = vpack.c.b16 %v1754, %v1753
    %v1969 = vpack.c.b16 %v1756, %v1755
    %v1970 = vpack.c.b16 %v1758, %v1757
    %v1971 = vpack.c.b16 %v1760, %v1759
    %v1972 = vpack.c.b16 %v1762, %v1761
    %v1973 = vpack.c.b16 %v1764, %v1763
    %v1974 = vpack.c.b16 %v1766, %v1765
    %v1975 = vpack.c.b16 %v1768, %v1767
    %v1976 = vpack.c.b16 %v1770, %v1769
    %v1977 = vpack.c.b16 %v1772, %v1771
    %v1978 = vpack.c.b16 %v1774, %v1773
    %v1979 = vpack.c.b16 %v1776, %v1775
    %v1980 = vpack.c.b16 %v1778, %v1777
    %v1981 = vpack.c.b16 %v1780, %v1779
    %v1982 = vpack.c.b16 %v1782, %v1781
    %v1983 = vpack.c.b16 %v1784, %v1783
    %v1984 = vpack.c.b16 %v1786, %v1785
    %v1985 = vpack.c.b16 %v1788, %v1787
    %v1986 = vpack.c.b16 %v1790, %v1789
    %v1987 = vpack.c.b16 %v1792, %v1791
    %v1988 = vpack.c.b16 %v1794, %v1793
    %v1989 = vpack.c.b16 %v1796, %v1795
    %v1990 = vpack.c.b16 %v1798, %v1797
    %v1991 = vpack.c.b16 %v1800, %v1799
    %v1992 = vpack.c.b16 %v1802, %v1801
    %v1993 = vpack.c.b16 %v1804, %v1803
    %v1994 = vpack.c.b16 %v1806, %v1805
    %v1995 = vpack.c.b16 %v1808, %v1807
    %v1996 = vpack.c.b16 %v1810, %v1809
    %v1997 = vpack.c.b16 %v1812, %v1811
    %v1998 = vpack.c.b16 %v1814, %v1813
    %v1999 = vpack.c.b16 %v1816, %v1815
    %v2000 = vpack.c.b16 %v1818, %v1817
    %v2001 = vpack.c.b16 %v1820, %v1819
    %v2002 = vpack.c.b16 %v1822, %v1821
    %v2003 = vpack.c.b16 %v1824, %v1823
    %v2004 = vpack.c.b16 %v1826, %v1825
    %v2005 = vpack.c.b16 %v1828, %v1827
    %v2006 = vpack.c.b16 %v1830, %v1829
    %v2007 = vpack.c.b16 %v1832, %v1831
    %v2008 = vpack.c.b16 %v1834, %v1833
    %v2009 = vpack.c.b16 %v1836, %v1835
    %v2010 = vpack.c.b16 %v1838, %v1837
    %v2011 = vpack.c.b16 %v1840, %v1839
    %v2012 = vpack.c.b16 %v1842, %v1841
    %v2013 = vpack.c.b16 %v1844, %v1843
    %v2014 = vpack.c.b16 %v1846, %v1845
    %v2015 = vpack.c.b16 %v1848, %v1847
    %v2016 = vpack.c.b16 %v1850, %v1849
    %v2017 = vpack.c.b16 %v1852, %v1851
    %v2018 = vpack.c.b16 %v1854, %v1853
    %v2019 = vpack.c.b16 %v1856, %v1855
    %v2020 = vpack.c.b16 %v1858, %v1857
    %v2021 = vpack.c.b16 %v1860, %v1859
    %v2022 = vpack.c.b16 %v1862, %v1861
    %v2023 = vpack.c.b16 %v1864, %v1863
    %v2024 = vpack.c.b16 %v1866, %v1865
    %v2025 = vpack.c.b16 %v1868, %v1867
    %v2026 = vpack.c.b16 %v1870, %v1869
    %v2027 = vpack.c.b16 %v1872, %v1871
    %v2028 = vpack.c.b16 %v1874, %v1873
    %v2029 = vpack.c.b16 %v1876, %v1875
    %v2030 = vpack.c.b16 %v1878, %v1877
    %v2031 = vpack.c.b16 %v1880, %v1879
    %v2032 = vpack.c.b16 %v1882, %v1881
    %v2033 = vpack.c.b16 %v1884, %v1883
    %v2034 = vpack.c.b16 %v1886, %v1885
    %v2035 = vpack.c.b16 %v1888, %v1887
    %v2036 = vpack.c.b16 %v1890, %v1889
    %v2037 = vpack.c.b16 %v1892, %v1891
    %v2038 = vpack.c.b16 %v1894, %v1893
    %v2039 = vpack.c.b16 %v1896, %v1895
    %v2040 = vpack.c.b16 %v1898, %v1897
    %v2041 = vpack.c.b16 %v1900, %v1899
    %v2042 = vpack.c.b16 %v1902, %v1901
    %v2043 = vpack.c.b16 %v1904, %v1903
    %v2044 = vpack.c.b16 %v1906, %v1905
    %v2045 = vpack.c.b16 %v1908, %v1907
    %v2046 = vpack.c.b16 %v1910, %v1909
    %v2047 = vpack.c.b16 %v1912, %v1911
    %v2048 = vpack.c.b16 %v1914, %v1913
    %v2049 = vpack.c.b16 %v1916, %v1915
    %v2050 = vpack.c.b16 %v1918, %v1917
    %v2051 = vpack.c.b16 %v1920, %v1919
    %v2052 = vpack.c.b16 %v1922, %v1921
    %v2053 = vpack.c.b16 %v1924, %v1923
    %v2054 = vpack.c.b16 %v1926, %v1925
    %2183 = vmatprep.subr.bf16.mxu0 0
    %2184 = vmatpush1.bf16.msra.mxu0 %v1927
    %2185 = vmatprep.subr.bf16.mxu0 0
    %2186 = vmatpush1.bf16.msra.mxu0 %v1928
    %2187 = vmatprep.subr.bf16.mxu0 0
    %2188 = vmatpush1.bf16.msra.mxu0 %v1929
    %2189 = vmatprep.subr.bf16.mxu0 0
    %2190 = vmatpush1.bf16.msra.mxu0 %v1930
    %2191 = vmatprep.subr.bf16.mxu0 0
    %2192 = vmatpush1.bf16.msra.mxu0 %v1931
    %2193 = vmatprep.subr.bf16.mxu0 0
    %2194 = vmatpush1.bf16.msra.mxu0 %v1932
    %2195 = vmatprep.subr.bf16.mxu0 0
    %2196 = vmatpush1.bf16.msra.mxu0 %v1933
    %2197 = vmatprep.subr.bf16.mxu0 0
    %2198 = vmatpush1.bf16.msra.mxu0 %v1934
    %2199 = vmatprep.subr.bf16.mxu0 0
    %2200 = vmatpush1.bf16.msra.mxu0 %v1935
    %2201 = vmatprep.subr.bf16.mxu0 0
    %2202 = vmatpush1.bf16.msra.mxu0 %v1936
    %2203 = vmatprep.subr.bf16.mxu0 0
    %2204 = vmatpush1.bf16.msra.mxu0 %v1937
    %2205 = vmatprep.subr.bf16.mxu0 0
    %2206 = vmatpush1.bf16.msra.mxu0 %v1938
    %2207 = vmatprep.subr.bf16.mxu0 0
    %2208 = vmatpush1.bf16.msra.mxu0 %v1939
    %2209 = vmatprep.subr.bf16.mxu0 0
    %2210 = vmatpush1.bf16.msra.mxu0 %v1940
    %2211 = vmatprep.subr.bf16.mxu0 0
    %2212 = vmatpush1.bf16.msra.mxu0 %v1941
    %2213 = vmatprep.subr.bf16.mxu0 0
    %2214 = vmatpush1.bf16.msra.mxu0 %v1942
    %2215 = vmatprep.mubr.bf16.mxu0 %v1137
    %2216 = vmatmul.mubr.bf16.gmra.mrb[0].mxu0 %v1136
    %v2217 = vpop.f32.mrb[0].mxu0
    %v2218 = vadd.f32 %v1413, %v2217
    %v2219 = vpop.f32.mrb[0].mxu0
    %v2220 = vpop.f32.mrb[0].mxu0
    %v2221 = vpop.f32.mrb[0].mxu0
    %2222 = vdwg.mxu0
    %2223 = vmatprep.subr.bf16.mxu0 0
    %2224 = vmatpush1.bf16.msra.mxu0 %v1943
    %2225 = vmatprep.subr.bf16.mxu0 0
    %2226 = vmatpush1.bf16.msra.mxu0 %v1944
    %2227 = vmatprep.subr.bf16.mxu0 0
    %2228 = vmatpush1.bf16.msra.mxu0 %v1945
    %2229 = vmatprep.subr.bf16.mxu0 0
    %2230 = vmatpush1.bf16.msra.mxu0 %v1946
    %2231 = vmatprep.subr.bf16.mxu0 0
    %2232 = vmatpush1.bf16.msra.mxu0 %v1947
    %2233 = vmatprep.subr.bf16.mxu0 0
    %2234 = vmatpush1.bf16.msra.mxu0 %v1948
    %2235 = vmatprep.subr.bf16.mxu0 0
    %2236 = vmatpush1.bf16.msra.mxu0 %v1949
    %2237 = vmatprep.subr.bf16.mxu0 0
    %2238 = vmatpush1.bf16.msra.mxu0 %v1950
    %2239 = vmatprep.subr.bf16.mxu0 0
    %2240 = vmatpush1.bf16.msra.mxu0 %v1951
    %2241 = vmatprep.subr.bf16.mxu0 0
    %2242 = vmatpush1.bf16.msra.mxu0 %v1952
    %2243 = vmatprep.subr.bf16.mxu0 0
    %2244 = vmatpush1.bf16.msra.mxu0 %v1953
    %2245 = vmatprep.subr.bf16.mxu0 0
    %2246 = vmatpush1.bf16.msra.mxu0 %v1954
    %2247 = vmatprep.subr.bf16.mxu0 0
    %2248 = vmatpush1.bf16.msra.mxu0 %v1955
    %2249 = vmatprep.subr.bf16.mxu0 0
    %2250 = vmatpush1.bf16.msra.mxu0 %v1956
    %2251 = vmatprep.subr.bf16.mxu0 0
    %2252 = vmatpush1.bf16.msra.mxu0 %v1957
    %2253 = vmatprep.subr.bf16.mxu0 0
    %2254 = vmatpush1.bf16.msra.mxu0 %v1958
    %2255 = vmatprep.mubr.bf16.mxu0 %v1139
    %2256 = vmatmul.mubr.bf16.gmra.mrb[0].mxu0 %v1138
    %v2257 = vpop.f32.mrb[0].mxu0
    %v2258 = vadd.f32 %v2218, %v2257
    %v2259 = vpop.f32.mrb[0].mxu0
    %v2260 = vpop.f32.mrb[0].mxu0
    %v2261 = vpop.f32.mrb[0].mxu0
    %2262 = vdwg.mxu0
    %2263 = vmatprep.subr.bf16.mxu0 0
    %2264 = vmatpush1.bf16.msra.mxu0 %v1959
    %2265 = vmatprep.subr.bf16.mxu0 0
    %2266 = vmatpush1.bf16.msra.mxu0 %v1960
    %2267 = vmatprep.subr.bf16.mxu0 0
    %2268 = vmatpush1.bf16.msra.mxu0 %v1961
    %2269 = vmatprep.subr.bf16.mxu0 0
    %2270 = vmatpush1.bf16.msra.mxu0 %v1962
    %2271 = vmatprep.subr.bf16.mxu0 0
    %2272 = vmatpush1.bf16.msra.mxu0 %v1963
    %2273 = vmatprep.subr.bf16.mxu0 0
    %2274 = vmatpush1.bf16.msra.mxu0 %v1964
    %2275 = vmatprep.subr.bf16.mxu0 0
    %2276 = vmatpush1.bf16.msra.mxu0 %v1965
    %2277 = vmatprep.subr.bf16.mxu0 0
    %2278 = vmatpush1.bf16.msra.mxu0 %v1966
    %2279 = vmatprep.subr.bf16.mxu0 0
    %2280 = vmatpush1.bf16.msra.mxu0 %v1967
    %2281 = vmatprep.subr.bf16.mxu0 0
    %2282 = vmatpush1.bf16.msra.mxu0 %v1968
    %2283 = vmatprep.subr.bf16.mxu0 0
    %2284 = vmatpush1.bf16.msra.mxu0 %v1969
    %2285 = vmatprep.subr.bf16.mxu0 0
    %2286 = vmatpush1.bf16.msra.mxu0 %v1970
    %2287 = vmatprep.subr.bf16.mxu0 0
    %2288 = vmatpush1.bf16.msra.mxu0 %v1971
    %2289 = vmatprep.subr.bf16.mxu0 0
    %2290 = vmatpush1.bf16.msra.mxu0 %v1972
    %2291 = vmatprep.subr.bf16.mxu0 0
    %2292 = vmatpush1.bf16.msra.mxu0 %v1973
    %2293 = vmatprep.subr.bf16.mxu0 0
    %2294 = vmatpush1.bf16.msra.mxu0 %v1974
    %2295 = vmatprep.mubr.bf16.mxu0 %v1141
    %2296 = vmatmul.mubr.bf16.gmra.mrb[0].mxu0 %v1140
    %v2297 = vpop.f32.mrb[0].mxu0
    %v2298 = vadd.f32 %v2258, %v2297
    %v2299 = vpop.f32.mrb[0].mxu0
    %v2300 = vpop.f32.mrb[0].mxu0
    %v2301 = vpop.f32.mrb[0].mxu0
    %2302 = vdwg.mxu0
    %2303 = vmatprep.subr.bf16.mxu0 0
    %2304 = vmatpush1.bf16.msra.mxu0 %v1975
    %2305 = vmatprep.subr.bf16.mxu0 0
    %2306 = vmatpush1.bf16.msra.mxu0 %v1976
    %2307 = vmatprep.subr.bf16.mxu0 0
    %2308 = vmatpush1.bf16.msra.mxu0 %v1977
    %2309 = vmatprep.subr.bf16.mxu0 0
    %2310 = vmatpush1.bf16.msra.mxu0 %v1978
    %2311 = vmatprep.subr.bf16.mxu0 0
    %2312 = vmatpush1.bf16.msra.mxu0 %v1979
    %2313 = vmatprep.subr.bf16.mxu0 0
    %2314 = vmatpush1.bf16.msra.mxu0 %v1980
    %2315 = vmatprep.subr.bf16.mxu0 0
    %2316 = vmatpush1.bf16.msra.mxu0 %v1981
    %2317 = vmatprep.subr.bf16.mxu0 0
    %2318 = vmatpush1.bf16.msra.mxu0 %v1982
    %2319 = vmatprep.subr.bf16.mxu0 0
    %2320 = vmatpush1.bf16.msra.mxu0 %v1983
    %2321 = vmatprep.subr.bf16.mxu0 0
    %2322 = vmatpush1.bf16.msra.mxu0 %v1984
    %2323 = vmatprep.subr.bf16.mxu0 0
    %2324 = vmatpush1.bf16.msra.mxu0 %v1985
    %2325 = vmatprep.subr.bf16.mxu0 0
    %2326 = vmatpush1.bf16.msra.mxu0 %v1986
    %2327 = vmatprep.subr.bf16.mxu0 0
    %2328 = vmatpush1.bf16.msra.mxu0 %v1987
    %2329 = vmatprep.subr.bf16.mxu0 0
    %2330 = vmatpush1.bf16.msra.mxu0 %v1988
    %2331 = vmatprep.subr.bf16.mxu0 0
    %2332 = vmatpush1.bf16.msra.mxu0 %v1989
    %2333 = vmatprep.subr.bf16.mxu0 0
    %2334 = vmatpush1.bf16.msra.mxu0 %v1990
    %2335 = vmatprep.mubr.bf16.mxu0 %v1143
    %2336 = vmatmul.mubr.bf16.gmra.mrb[0].mxu0 %v1142
    %v2337 = vpop.f32.mrb[0].mxu0
    %v2338 = vadd.f32 %v2298, %v2337
    %v2339 = vpop.f32.mrb[0].mxu0
    %v2340 = vpop.f32.mrb[0].mxu0
    %v2341 = vpop.f32.mrb[0].mxu0
    %2342 = vdwg.mxu0
    %2343 = vmatprep.subr.bf16.mxu0 0
    %2344 = vmatpush1.bf16.msra.mxu0 %v1991
    %2345 = vmatprep.subr.bf16.mxu0 0
    %2346 = vmatpush1.bf16.msra.mxu0 %v1992
    %2347 = vmatprep.subr.bf16.mxu0 0
    %2348 = vmatpush1.bf16.msra.mxu0 %v1993
    %2349 = vmatprep.subr.bf16.mxu0 0
    %2350 = vmatpush1.bf16.msra.mxu0 %v1994
    %2351 = vmatprep.subr.bf16.mxu0 0
    %2352 = vmatpush1.bf16.msra.mxu0 %v1995
    %2353 = vmatprep.subr.bf16.mxu0 0
    %2354 = vmatpush1.bf16.msra.mxu0 %v1996
    %2355 = vmatprep.subr.bf16.mxu0 0
    %2356 = vmatpush1.bf16.msra.mxu0 %v1997
    %2357 = vmatprep.subr.bf16.mxu0 0
    %2358 = vmatpush1.bf16.msra.mxu0 %v1998
    %2359 = vmatprep.subr.bf16.mxu0 0
    %2360 = vmatpush1.bf16.msra.mxu0 %v1999
    %2361 = vmatprep.subr.bf16.mxu0 0
    %2362 = vmatpush1.bf16.msra.mxu0 %v2000
    %2363 = vmatprep.subr.bf16.mxu0 0
    %2364 = vmatpush1.bf16.msra.mxu0 %v2001
    %2365 = vmatprep.subr.bf16.mxu0 0
    %2366 = vmatpush1.bf16.msra.mxu0 %v2002
    %2367 = vmatprep.subr.bf16.mxu0 0
    %2368 = vmatpush1.bf16.msra.mxu0 %v2003
    %2369 = vmatprep.subr.bf16.mxu0 0
    %2370 = vmatpush1.bf16.msra.mxu0 %v2004
    %2371 = vmatprep.subr.bf16.mxu0 0
    %2372 = vmatpush1.bf16.msra.mxu0 %v2005
    %2373 = vmatprep.subr.bf16.mxu0 0
    %2374 = vmatpush1.bf16.msra.mxu0 %v2006
    %2375 = vmatprep.mubr.bf16.mxu0 %v1145
    %2376 = vmatmul.mubr.bf16.gmra.mrb[0].mxu0 %v1144
    %v2377 = vpop.f32.mrb[0].mxu0
    %v2378 = vadd.f32 %v2338, %v2377
    %v2379 = vpop.f32.mrb[0].mxu0
    %v2380 = vpop.f32.mrb[0].mxu0
    %v2381 = vpop.f32.mrb[0].mxu0
    %2382 = vdwg.mxu0
    %2383 = vmatprep.subr.bf16.mxu0 0
    %2384 = vmatpush1.bf16.msra.mxu0 %v2007
    %2385 = vmatprep.subr.bf16.mxu0 0
    %2386 = vmatpush1.bf16.msra.mxu0 %v2008
    %2387 = vmatprep.subr.bf16.mxu0 0
    %2388 = vmatpush1.bf16.msra.mxu0 %v2009
    %2389 = vmatprep.subr.bf16.mxu0 0
    %2390 = vmatpush1.bf16.msra.mxu0 %v2010
    %2391 = vmatprep.subr.bf16.mxu0 0
    %2392 = vmatpush1.bf16.msra.mxu0 %v2011
    %2393 = vmatprep.subr.bf16.mxu0 0
    %2394 = vmatpush1.bf16.msra.mxu0 %v2012
    %2395 = vmatprep.subr.bf16.mxu0 0
    %2396 = vmatpush1.bf16.msra.mxu0 %v2013
    %2397 = vmatprep.subr.bf16.mxu0 0
    %2398 = vmatpush1.bf16.msra.mxu0 %v2014
    %2399 = vmatprep.subr.bf16.mxu0 0
    %2400 = vmatpush1.bf16.msra.mxu0 %v2015
    %2401 = vmatprep.subr.bf16.mxu0 0
    %2402 = vmatpush1.bf16.msra.mxu0 %v2016
    %2403 = vmatprep.subr.bf16.mxu0 0
    %2404 = vmatpush1.bf16.msra.mxu0 %v2017
    %2405 = vmatprep.subr.bf16.mxu0 0
    %2406 = vmatpush1.bf16.msra.mxu0 %v2018
    %2407 = vmatprep.subr.bf16.mxu0 0
    %2408 = vmatpush1.bf16.msra.mxu0 %v2019
    %2409 = vmatprep.subr.bf16.mxu0 0
    %2410 = vmatpush1.bf16.msra.mxu0 %v2020
    %2411 = vmatprep.subr.bf16.mxu0 0
    %2412 = vmatpush1.bf16.msra.mxu0 %v2021
    %2413 = vmatprep.subr.bf16.mxu0 0
    %2414 = vmatpush1.bf16.msra.mxu0 %v2022
    %2415 = vmatprep.mubr.bf16.mxu0 %v1147
    %2416 = vmatmul.mubr.bf16.gmra.mrb[0].mxu0 %v1146
    %v2417 = vpop.f32.mrb[0].mxu0
    %v2418 = vadd.f32 %v2378, %v2417
    %v2419 = vpop.f32.mrb[0].mxu0
    %v2420 = vpop.f32.mrb[0].mxu0
    %v2421 = vpop.f32.mrb[0].mxu0
    %2422 = vdwg.mxu0
    %2423 = vmatprep.subr.bf16.mxu0 0
    %2424 = vmatpush1.bf16.msra.mxu0 %v2023
    %2425 = vmatprep.subr.bf16.mxu0 0
    %2426 = vmatpush1.bf16.msra.mxu0 %v2024
    %2427 = vmatprep.subr.bf16.mxu0 0
    %2428 = vmatpush1.bf16.msra.mxu0 %v2025
    %2429 = vmatprep.subr.bf16.mxu0 0
    %2430 = vmatpush1.bf16.msra.mxu0 %v2026
    %2431 = vmatprep.subr.bf16.mxu0 0
    %2432 = vmatpush1.bf16.msra.mxu0 %v2027
    %2433 = vmatprep.subr.bf16.mxu0 0
    %2434 = vmatpush1.bf16.msra.mxu0 %v2028
    %2435 = vmatprep.subr.bf16.mxu0 0
    %2436 = vmatpush1.bf16.msra.mxu0 %v2029
    %2437 = vmatprep.subr.bf16.mxu0 0
    %2438 = vmatpush1.bf16.msra.mxu0 %v2030
    %2439 = vmatprep.subr.bf16.mxu0 0
    %2440 = vmatpush1.bf16.msra.mxu0 %v2031
    %2441 = vmatprep.subr.bf16.mxu0 0
    %2442 = vmatpush1.bf16.msra.mxu0 %v2032
    %2443 = vmatprep.subr.bf16.mxu0 0
    %2444 = vmatpush1.bf16.msra.mxu0 %v2033
    %2445 = vmatprep.subr.bf16.mxu0 0
    %2446 = vmatpush1.bf16.msra.mxu0 %v2034
    %2447 = vmatprep.subr.bf16.mxu0 0
    %2448 = vmatpush1.bf16.msra.mxu0 %v2035
    %2449 = vmatprep.subr.bf16.mxu0 0
    %2450 = vmatpush1.bf16.msra.mxu0 %v2036
    %2451 = vmatprep.subr.bf16.mxu0 0
    %2452 = vmatpush1.bf16.msra.mxu0 %v2037
    %2453 = vmatprep.subr.bf16.mxu0 0
    %2454 = vmatpush1.bf16.msra.mxu0 %v2038
    %2455 = vmatprep.mubr.bf16.mxu0 %v1149
    %2456 = vmatmul.mubr.bf16.gmra.mrb[0].mxu0 %v1148
    %v2457 = vpop.f32.mrb[0].mxu0
    %v2458 = vadd.f32 %v2418, %v2457
    %v2459 = vpop.f32.mrb[0].mxu0
    %v2460 = vpop.f32.mrb[0].mxu0
    %v2461 = vpop.f32.mrb[0].mxu0
    %2462 = vdwg.mxu0
    %2463 = vmatprep.subr.bf16.mxu0 0
    %2464 = vmatpush1.bf16.msra.mxu0 %v2039
    %2465 = vmatprep.subr.bf16.mxu0 0
    %2466 = vmatpush1.bf16.msra.mxu0 %v2040
    %2467 = vmatprep.subr.bf16.mxu0 0
    %2468 = vmatpush1.bf16.msra.mxu0 %v2041
    %2469 = vmatprep.subr.bf16.mxu0 0
    %2470 = vmatpush1.bf16.msra.mxu0 %v2042
    %2471 = vmatprep.subr.bf16.mxu0 0
    %2472 = vmatpush1.bf16.msra.mxu0 %v2043
    %2473 = vmatprep.subr.bf16.mxu0 0
    %2474 = vmatpush1.bf16.msra.mxu0 %v2044
    %2475 = vmatprep.subr.bf16.mxu0 0
    %2476 = vmatpush1.bf16.msra.mxu0 %v2045
    %2477 = vmatprep.subr.bf16.mxu0 0
    %2478 = vmatpush1.bf16.msra.mxu0 %v2046
    %2479 = vmatprep.subr.bf16.mxu0 0
    %2480 = vmatpush1.bf16.msra.mxu0 %v2047
    %2481 = vmatprep.subr.bf16.mxu0 0
    %2482 = vmatpush1.bf16.msra.mxu0 %v2048
    %2483 = vmatprep.subr.bf16.mxu0 0
    %2484 = vmatpush1.bf16.msra.mxu0 %v2049
    %2485 = vmatprep.subr.bf16.mxu0 0
    %2486 = vmatpush1.bf16.msra.mxu0 %v2050
    %2487 = vmatprep.subr.bf16.mxu0 0
    %2488 = vmatpush1.bf16.msra.mxu0 %v2051
    %2489 = vmatprep.subr.bf16.mxu0 0
    %2490 = vmatpush1.bf16.msra.mxu0 %v2052
    %2491 = vmatprep.subr.bf16.mxu0 0
    %2492 = vmatpush1.bf16.msra.mxu0 %v2053
    %2493 = vmatprep.subr.bf16.mxu0 0
    %2494 = vmatpush1.bf16.msra.mxu0 %v2054
    %2495 = vmatprep.mubr.bf16.mxu0 %v1151
    %2496 = vmatmul.mubr.bf16.gmra.mrb[0].mxu0 %v1150
    %v2497 = vpop.f32.mrb[0].mxu0
    %v2498 = vadd.f32 %v2458, %v2497
    %v2499 = vpop.f32.mrb[0].mxu0
    %v2500 = vpop.f32.mrb[0].mxu0
    %v2501 = vpop.f32.mrb[0].mxu0
    %2502 = vdwg.mxu0
    %v2503 = vadd.f32 %v511, %v2498
    %v2504 = vld [vmem:[%s13] sm:$0x1]
    %v2505 = vld [vmem:[%s14] sm:$0x1]
    %v2506 = vsel %vm142, %v2503, 0.0
    %2507 = vadd.xlane.f32.xlu0 %v2506
    %v2508 = vpop.xlane.xlu0 %2507
    %v2509 = vmul.f32 %v2508, %v487
    %v2510 = vsub.f32 %v2503, %v2509
    %v2511 = vmul.f32 %v2510, %v2510
    %v2512 = vsel %vm142, %v2511, 0.0
    %2513 = vadd.xlane.f32.xlu0 %v2512
    %v2514 = vpop.xlane.xlu0 %2513
    %v2515 = vmul.f32 %v2514, %v487
    %v2516 = vadd.f32 %v2515, 1e-05
    %v2517 = vrsqrt.pop %v2516
    %v2518 = vmul.f32 %v2510, %v2517
    %v2520 = vlaneseq
    %v2521 = vshrl.u32 %v2520, 7
    %v2522 = vsub.s32 0, %v2521
    %v2523 = vrot.slane %v2504, %v2522
    %v2525 = vmul.f32 %v2518, %v2523
    %v2527 = vlaneseq
    %v2528 = vshrl.u32 %v2527, 7
    %v2529 = vsub.s32 0, %v2528
    %v2530 = vrot.slane %v2505, %v2529
    %v2532 = vadd.f32 %v2525, %v2530
    %v2533 = vpack.c.bf16 %v2532, %v2532
    %s2534 = scalar_lea.vmem %s3, 16
    %v2535 = vld [vmem:[%s2534] sm:$0xf]
    %v2536 = vld [vmem:[%s2534 + $0x4] sm:$0xf]
    %v2537 = vld [vmem:[%s2534 + $0x8] sm:$0xf]
    %v2538 = vld [vmem:[%s2534 + $0xc] sm:$0xf]
    %s2539 = scalar_lea.vmem %s4, 1
    %v2540 = vld [vmem:[%s2539] sm:$0x1]
    %v2542 = vlaneseq
    %v2543 = vshrl.u32 %v2542, 7
    %v2544 = vsub.s32 0, %v2543
    %v2545 = vrot.slane %v2540, %v2544
    %v2551 = vunpack.c.l.b16 %v2535
    %v2552 = vunpack.c.l.b16 %v2536
    %v2553 = vunpack.c.l.b16 %v2537
    %v2554 = vunpack.c.l.b16 %v2538
    %v2555 = vpack.c.b16 %v2552, %v2551
    %v2556 = vpack.c.b16 %v2554, %v2553
    %v2560 = vsel %vm142, %v2533, 0
    %2562 = vmatprep.subr.bf16.mxu0 0
    %2563 = vmatpush1.bf16.msra.mxu0 %v2555
    %2564 = vmatprep.subr.bf16.mxu0 0
    %2565 = vmatpush1.bf16.msra.mxu0 %v2556
    %2566 = vmatprep.subr.bf16.mxu0 0
    %2567 = vmatpush1.bf16.msra.mxu0 0
    %2568 = vmatprep.subr.bf16.mxu0 0
    %2569 = vmatpush1.bf16.msra.mxu0 0
    %2570 = vmatprep.subr.bf16.mxu0 0
    %2571 = vmatpush1.bf16.msra.mxu0 0
    %2572 = vmatprep.subr.bf16.mxu0 0
    %2573 = vmatpush1.bf16.msra.mxu0 0
    %2574 = vmatprep.subr.bf16.mxu0 0
    %2575 = vmatpush1.bf16.msra.mxu0 0
    %2576 = vmatprep.subr.bf16.mxu0 0
    %2577 = vmatpush1.bf16.msra.mxu0 0
    %2578 = vmatprep.subr.bf16.mxu0 0
    %2579 = vmatpush1.bf16.msra.mxu0 0
    %2580 = vmatprep.subr.bf16.mxu0 0
    %2581 = vmatpush1.bf16.msra.mxu0 0
    %2582 = vmatprep.subr.bf16.mxu0 0
    %2583 = vmatpush1.bf16.msra.mxu0 0
    %2584 = vmatprep.subr.bf16.mxu0 0
    %2585 = vmatpush1.bf16.msra.mxu0 0
    %2586 = vmatprep.subr.bf16.mxu0 0
    %2587 = vmatpush1.bf16.msra.mxu0 0
    %2588 = vmatprep.subr.bf16.mxu0 0
    %2589 = vmatpush1.bf16.msra.mxu0 0
    %2590 = vmatprep.subr.bf16.mxu0 0
    %2591 = vmatpush1.bf16.msra.mxu0 0
    %2592 = vmatprep.subr.bf16.mxu0 0
    %2593 = vmatpush1.bf16.msra.mxu0 0
    %2594 = vmatprep.mubr.bf16.mxu0 0
    %2595 = vmatmul.mubr.bf16.gmra.mrb[0].mxu0 %v2560
    %v2596 = vpop.f32.mrb[0].mxu0
    %v2597 = vadd.f32 %v2545, %v2596
    %v2598 = vpop.f32.mrb[0].mxu0
    %v2599 = vpop.f32.mrb[0].mxu0
    %v2600 = vpop.f32.mrb[0].mxu0
    %2601 = vdwg.mxu0
    %v2602 = vpack.c.bf16 %v2597, %v2597
    %2604 = vrot.lane.b32.xlu0 %v2602, 96
    %v2605 = vpop.permute.xlu0 %2604
    %v2607 = vsel %vm190, %v2602, 0
    %v2610 = vsel %vm190, %v2605, 0
    %2612 = vmatprep.subr.bf16.mxu0 0
    %2613 = vmatpush1.bf16.xpose.msra.mxu0 %v2610
    %2614 = vmatprep.subr.bf16.mxu0 0
    %2615 = vmatpush1.bf16.xpose.msra.mxu0 0
    %2616 = vmatprep.subr.bf16.mxu0 0
    %2617 = vmatpush1.bf16.xpose.msra.mxu0 0
    %2618 = vmatprep.subr.bf16.mxu0 0
    %2619 = vmatpush1.bf16.xpose.msra.mxu0 0
    %2620 = vmatprep.subr.bf16.mxu0 0
    %2621 = vmatpush1.bf16.xpose.msra.mxu0 0
    %2622 = vmatprep.subr.bf16.mxu0 0
    %2623 = vmatpush1.bf16.xpose.msra.mxu0 0
    %2624 = vmatprep.subr.bf16.mxu0 0
    %2625 = vmatpush1.bf16.xpose.msra.mxu0 0
    %2626 = vmatprep.subr.bf16.mxu0 0
    %2627 = vmatpush1.bf16.xpose.msra.mxu0 0
    %2628 = vmatprep.subr.bf16.mxu0 0
    %2629 = vmatpush1.bf16.xpose.msra.mxu0 0
    %2630 = vmatprep.subr.bf16.mxu0 0
    %2631 = vmatpush1.bf16.xpose.msra.mxu0 0
    %2632 = vmatprep.subr.bf16.mxu0 0
    %2633 = vmatpush1.bf16.xpose.msra.mxu0 0
    %2634 = vmatprep.subr.bf16.mxu0 0
    %2635 = vmatpush1.bf16.xpose.msra.mxu0 0
    %2636 = vmatprep.subr.bf16.mxu0 0
    %2637 = vmatpush1.bf16.xpose.msra.mxu0 0
    %2638 = vmatprep.subr.bf16.mxu0 0
    %2639 = vmatpush1.bf16.xpose.msra.mxu0 0
    %2640 = vmatprep.subr.bf16.mxu0 0
    %2641 = vmatpush1.bf16.xpose.msra.mxu0 0
    %2642 = vmatprep.subr.bf16.mxu0 0
    %2643 = vmatpush1.bf16.xpose.msra.mxu0 0
    %2644 = vmatprep.mubr.bf16.mxu0 0
    %2645 = vmatmul.mubr.bf16.gmra.mrb[0].mxu0 %v2607
    %v2646 = vpop.f32.mrb[0].mxu0
    %v2647 = vadd.f32 0.0, %v2646
    %v2648 = vpop.f32.mrb[0].mxu0
    %v2649 = vpop.f32.mrb[0].mxu0
    %v2650 = vpop.f32.mrb[0].mxu0
    %2651 = vdwg.mxu0
    %v2652 = vsel %vm237, %v2647, -inf
    %2653 = vmax.xlane.f32.xlu0 %v2652
    %v2654 = vpop.xlane.xlu0 %2653
    %v2655 = vsub.f32 %v2647, %v2654
    %v2656 = vmul.f32 %v2655, 1.442695
    %v2657 = vpow.pop %v2656
    %v2658 = vpack.c.bf16 %v2657, %v2657
    %2659 = vrot.lane.b32.xlu0 %v2602, 64
    %v2660 = vpop.permute.xlu0 %2659
    %v2662 = vsel %vm237, %v2658, 0
    %v2665 = vsel %vm250, %v2660, 0
    %2667 = vmatprep.subr.bf16.mxu0 0
    %2668 = vmatpush1.bf16.msra.mxu0 %v2665
    %2669 = vmatprep.subr.bf16.mxu0 0
    %2670 = vmatpush1.bf16.msra.mxu0 0
    %2671 = vmatprep.subr.bf16.mxu0 0
    %2672 = vmatpush1.bf16.msra.mxu0 0
    %2673 = vmatprep.subr.bf16.mxu0 0
    %2674 = vmatpush1.bf16.msra.mxu0 0
    %2675 = vmatprep.subr.bf16.mxu0 0
    %2676 = vmatpush1.bf16.msra.mxu0 0
    %2677 = vmatprep.subr.bf16.mxu0 0
    %2678 = vmatpush1.bf16.msra.mxu0 0
    %2679 = vmatprep.subr.bf16.mxu0 0
    %2680 = vmatpush1.bf16.msra.mxu0 0
    %2681 = vmatprep.subr.bf16.mxu0 0
    %2682 = vmatpush1.bf16.msra.mxu0 0
    %2683 = vmatprep.subr.bf16.mxu0 0
    %2684 = vmatpush1.bf16.msra.mxu0 0
    %2685 = vmatprep.subr.bf16.mxu0 0
    %2686 = vmatpush1.bf16.msra.mxu0 0
    %2687 = vmatprep.subr.bf16.mxu0 0
    %2688 = vmatpush1.bf16.msra.mxu0 0
    %2689 = vmatprep.subr.bf16.mxu0 0
    %2690 = vmatpush1.bf16.msra.mxu0 0
    %2691 = vmatprep.subr.bf16.mxu0 0
    %2692 = vmatpush1.bf16.msra.mxu0 0
    %2693 = vmatprep.subr.bf16.mxu0 0
    %2694 = vmatpush1.bf16.msra.mxu0 0
    %2695 = vmatprep.subr.bf16.mxu0 0
    %2696 = vmatpush1.bf16.msra.mxu0 0
    %2697 = vmatprep.subr.bf16.mxu0 0
    %2698 = vmatpush1.bf16.msra.mxu0 0
    %2699 = vmatprep.mubr.bf16.mxu0 0
    %2700 = vmatmul.mubr.bf16.gmra.mrb[0].mxu0 %v2662
    %v2701 = vpop.f32.mrb[0].mxu0
    %v2702 = vadd.f32 0.0, %v2701
    %v2703 = vpop.f32.mrb[0].mxu0
    %v2704 = vpop.f32.mrb[0].mxu0
    %v2705 = vpop.f32.mrb[0].mxu0
    %2706 = vdwg.mxu0
    %v2707 = vsel %vm237, %v2657, 0.0
    %2708 = vadd.xlane.f32.xlu0 %v2707
    %v2709 = vpop.xlane.xlu0 %2708
    %v2710 = vrcp.pop %v2709
    %v2711 = vmul.f32 %v2702, %v2710
    %2712 = vrot.lane.b32.xlu0 %v2602, 112
    %v2713 = vpop.permute.xlu0 %2712
    %2714 = vrot.lane.b32.xlu0 %v2602, 80
    %v2715 = vpop.permute.xlu0 %2714
    %v2717 = vsel %vm190, %v2713, 0
    %v2720 = vsel %vm190, %v2715, 0
    %2722 = vmatprep.subr.bf16.mxu0 0
    %2723 = vmatpush1.bf16.xpose.msra.mxu0 %v2720
    %2724 = vmatprep.subr.bf16.mxu0 0
    %2725 = vmatpush1.bf16.xpose.msra.mxu0 0
    %2726 = vmatprep.subr.bf16.mxu0 0
    %2727 = vmatpush1.bf16.xpose.msra.mxu0 0
    %2728 = vmatprep.subr.bf16.mxu0 0
    %2729 = vmatpush1.bf16.xpose.msra.mxu0 0
    %2730 = vmatprep.subr.bf16.mxu0 0
    %2731 = vmatpush1.bf16.xpose.msra.mxu0 0
    %2732 = vmatprep.subr.bf16.mxu0 0
    %2733 = vmatpush1.bf16.xpose.msra.mxu0 0
    %2734 = vmatprep.subr.bf16.mxu0 0
    %2735 = vmatpush1.bf16.xpose.msra.mxu0 0
    %2736 = vmatprep.subr.bf16.mxu0 0
    %2737 = vmatpush1.bf16.xpose.msra.mxu0 0
    %2738 = vmatprep.subr.bf16.mxu0 0
    %2739 = vmatpush1.bf16.xpose.msra.mxu0 0
    %2740 = vmatprep.subr.bf16.mxu0 0
    %2741 = vmatpush1.bf16.xpose.msra.mxu0 0
    %2742 = vmatprep.subr.bf16.mxu0 0
    %2743 = vmatpush1.bf16.xpose.msra.mxu0 0
    %2744 = vmatprep.subr.bf16.mxu0 0
    %2745 = vmatpush1.bf16.xpose.msra.mxu0 0
    %2746 = vmatprep.subr.bf16.mxu0 0
    %2747 = vmatpush1.bf16.xpose.msra.mxu0 0
    %2748 = vmatprep.subr.bf16.mxu0 0
    %2749 = vmatpush1.bf16.xpose.msra.mxu0 0
    %2750 = vmatprep.subr.bf16.mxu0 0
    %2751 = vmatpush1.bf16.xpose.msra.mxu0 0
    %2752 = vmatprep.subr.bf16.mxu0 0
    %2753 = vmatpush1.bf16.xpose.msra.mxu0 0
    %2754 = vmatprep.mubr.bf16.mxu0 0
    %2755 = vmatmul.mubr.bf16.gmra.mrb[0].mxu0 %v2717
    %v2756 = vpop.f32.mrb[0].mxu0
    %v2757 = vadd.f32 0.0, %v2756
    %v2758 = vpop.f32.mrb[0].mxu0
    %v2759 = vpop.f32.mrb[0].mxu0
    %v2760 = vpop.f32.mrb[0].mxu0
    %2761 = vdwg.mxu0
    %v2762 = vsel %vm237, %v2757, -inf
    %2763 = vmax.xlane.f32.xlu0 %v2762
    %v2764 = vpop.xlane.xlu0 %2763
    %v2765 = vsub.f32 %v2757, %v2764
    %v2766 = vmul.f32 %v2765, 1.442695
    %v2767 = vpow.pop %v2766
    %v2768 = vpack.c.bf16 %v2767, %v2767
    %2769 = vrot.lane.b32.xlu0 %v2602, 48
    %v2770 = vpop.permute.xlu0 %2769
    %v2772 = vsel %vm237, %v2768, 0
    %v2775 = vsel %vm250, %v2770, 0
    %2777 = vmatprep.subr.bf16.mxu0 0
    %2778 = vmatpush1.bf16.msra.mxu0 %v2775
    %2779 = vmatprep.subr.bf16.mxu0 0
    %2780 = vmatpush1.bf16.msra.mxu0 0
    %2781 = vmatprep.subr.bf16.mxu0 0
    %2782 = vmatpush1.bf16.msra.mxu0 0
    %2783 = vmatprep.subr.bf16.mxu0 0
    %2784 = vmatpush1.bf16.msra.mxu0 0
    %2785 = vmatprep.subr.bf16.mxu0 0
    %2786 = vmatpush1.bf16.msra.mxu0 0
    %2787 = vmatprep.subr.bf16.mxu0 0
    %2788 = vmatpush1.bf16.msra.mxu0 0
    %2789 = vmatprep.subr.bf16.mxu0 0
    %2790 = vmatpush1.bf16.msra.mxu0 0
    %2791 = vmatprep.subr.bf16.mxu0 0
    %2792 = vmatpush1.bf16.msra.mxu0 0
    %2793 = vmatprep.subr.bf16.mxu0 0
    %2794 = vmatpush1.bf16.msra.mxu0 0
    %2795 = vmatprep.subr.bf16.mxu0 0
    %2796 = vmatpush1.bf16.msra.mxu0 0
    %2797 = vmatprep.subr.bf16.mxu0 0
    %2798 = vmatpush1.bf16.msra.mxu0 0
    %2799 = vmatprep.subr.bf16.mxu0 0
    %2800 = vmatpush1.bf16.msra.mxu0 0
    %2801 = vmatprep.subr.bf16.mxu0 0
    %2802 = vmatpush1.bf16.msra.mxu0 0
    %2803 = vmatprep.subr.bf16.mxu0 0
    %2804 = vmatpush1.bf16.msra.mxu0 0
    %2805 = vmatprep.subr.bf16.mxu0 0
    %2806 = vmatpush1.bf16.msra.mxu0 0
    %2807 = vmatprep.subr.bf16.mxu0 0
    %2808 = vmatpush1.bf16.msra.mxu0 0
    %2809 = vmatprep.mubr.bf16.mxu0 0
    %2810 = vmatmul.mubr.bf16.gmra.mrb[0].mxu0 %v2772
    %v2811 = vpop.f32.mrb[0].mxu0
    %v2812 = vadd.f32 0.0, %v2811
    %v2813 = vpop.f32.mrb[0].mxu0
    %v2814 = vpop.f32.mrb[0].mxu0
    %v2815 = vpop.f32.mrb[0].mxu0
    %2816 = vdwg.mxu0
    %v2817 = vsel %vm237, %v2767, 0.0
    %2818 = vadd.xlane.f32.xlu0 %v2817
    %v2819 = vpop.xlane.xlu0 %2818
    %v2820 = vrcp.pop %v2819
    %v2821 = vmul.f32 %v2812, %v2820
    %2823 = vrot.lane.b32.xlu0 %v2821, 16
    %v2824 = vpop.permute.xlu0 %2823
    %v2826 = vsel %vm190, %v2711, %v2824
    %v2827 = vpack.c.bf16 %v2826, %v2826
    %s2828 = scalar_lea.vmem %s5, 16
    %v2829 = vld [vmem:[%s2828] sm:$0xf]
    %v2830 = vld [vmem:[%s2828 + $0x4] sm:$0xf]
    %v2831 = vld [vmem:[%s2828 + $0x8] sm:$0xf]
    %v2832 = vld [vmem:[%s2828 + $0xc] sm:$0xf]
    %s2833 = scalar_lea.vmem %s6, 1
    %v2834 = vld [vmem:[%s2833] sm:$0x1]
    %v2836 = vlaneseq
    %v2837 = vshrl.u32 %v2836, 7
    %v2838 = vsub.s32 0, %v2837
    %v2839 = vrot.slane %v2834, %v2838
    %v2845 = vunpack.c.l.b16 %v2829
    %v2846 = vunpack.c.l.b16 %v2830
    %v2847 = vunpack.c.l.b16 %v2831
    %v2848 = vunpack.c.l.b16 %v2832
    %v2849 = vpack.c.b16 %v2846, %v2845
    %v2850 = vpack.c.b16 %v2848, %v2847
    %v2854 = vsel %vm142, %v2827, 0
    %2856 = vmatprep.subr.bf16.mxu0 0
    %2857 = vmatpush1.bf16.msra.mxu0 %v2849
    %2858 = vmatprep.subr.bf16.mxu0 0
    %2859 = vmatpush1.bf16.msra.mxu0 %v2850
    %2860 = vmatprep.subr.bf16.mxu0 0
    %2861 = vmatpush1.bf16.msra.mxu0 0
    %2862 = vmatprep.subr.bf16.mxu0 0
    %2863 = vmatpush1.bf16.msra.mxu0 0
    %2864 = vmatprep.subr.bf16.mxu0 0
    %2865 = vmatpush1.bf16.msra.mxu0 0
    %2866 = vmatprep.subr.bf16.mxu0 0
    %2867 = vmatpush1.bf16.msra.mxu0 0
    %2868 = vmatprep.subr.bf16.mxu0 0
    %2869 = vmatpush1.bf16.msra.mxu0 0
    %2870 = vmatprep.subr.bf16.mxu0 0
    %2871 = vmatpush1.bf16.msra.mxu0 0
    %2872 = vmatprep.subr.bf16.mxu0 0
    %2873 = vmatpush1.bf16.msra.mxu0 0
    %2874 = vmatprep.subr.bf16.mxu0 0
    %2875 = vmatpush1.bf16.msra.mxu0 0
    %2876 = vmatprep.subr.bf16.mxu0 0
    %2877 = vmatpush1.bf16.msra.mxu0 0
    %2878 = vmatprep.subr.bf16.mxu0 0
    %2879 = vmatpush1.bf16.msra.mxu0 0
    %2880 = vmatprep.subr.bf16.mxu0 0
    %2881 = vmatpush1.bf16.msra.mxu0 0
    %2882 = vmatprep.subr.bf16.mxu0 0
    %2883 = vmatpush1.bf16.msra.mxu0 0
    %2884 = vmatprep.subr.bf16.mxu0 0
    %2885 = vmatpush1.bf16.msra.mxu0 0
    %2886 = vmatprep.subr.bf16.mxu0 0
    %2887 = vmatpush1.bf16.msra.mxu0 0
    %2888 = vmatprep.mubr.bf16.mxu0 0
    %2889 = vmatmul.mubr.bf16.gmra.mrb[0].mxu0 %v2854
    %v2890 = vpop.f32.mrb[0].mxu0
    %v2891 = vadd.f32 %v2839, %v2890
    %v2892 = vpop.f32.mrb[0].mxu0
    %v2893 = vpop.f32.mrb[0].mxu0
    %v2894 = vpop.f32.mrb[0].mxu0
    %2895 = vdwg.mxu0
    %v2896 = vadd.f32 %v2532, %v2891
    %s2897 = scalar_lea.vmem %s11, 1
    %v2898 = vld [vmem:[%s2897] sm:$0x1]
    %s2899 = scalar_lea.vmem %s12, 1
    %v2900 = vld [vmem:[%s2899] sm:$0x1]
    %v2901 = vsel %vm142, %v2896, 0.0
    %2902 = vadd.xlane.f32.xlu0 %v2901
    %v2903 = vpop.xlane.xlu0 %2902
    %v2904 = vmul.f32 %v2903, %v487
    %v2905 = vsub.f32 %v2896, %v2904
    %v2906 = vmul.f32 %v2905, %v2905
    %v2907 = vsel %vm142, %v2906, 0.0
    %2908 = vadd.xlane.f32.xlu0 %v2907
    %v2909 = vpop.xlane.xlu0 %2908
    %v2910 = vmul.f32 %v2909, %v487
    %v2911 = vadd.f32 %v2910, 1e-05
    %v2912 = vrsqrt.pop %v2911
    %v2913 = vmul.f32 %v2905, %v2912
    %v2915 = vlaneseq
    %v2916 = vshrl.u32 %v2915, 7
    %v2917 = vsub.s32 0, %v2916
    %v2918 = vrot.slane %v2898, %v2917
    %v2920 = vmul.f32 %v2913, %v2918
    %v2922 = vlaneseq
    %v2923 = vshrl.u32 %v2922, 7
    %v2924 = vsub.s32 0, %v2923
    %v2925 = vrot.slane %v2900, %v2924
    %v2927 = vadd.f32 %v2920, %v2925
    %v2928 = vpack.c.bf16 %v2927, %v2927
    %s2929 = scalar_lea.vmem %s7, 256
    %v2930 = vld [vmem:[%s2929] sm:$0xff]
    %v2931 = vld [vmem:[%s2929 + $0x8] sm:$0xff]
    %v2932 = vld [vmem:[%s2929 + $0x10] sm:$0xff]
    %v2933 = vld [vmem:[%s2929 + $0x18] sm:$0xff]
    %v2934 = vld [vmem:[%s2929 + $0x20] sm:$0xff]
    %v2935 = vld [vmem:[%s2929 + $0x28] sm:$0xff]
    %v2936 = vld [vmem:[%s2929 + $0x30] sm:$0xff]
    %v2937 = vld [vmem:[%s2929 + $0x38] sm:$0xff]
    %v2938 = vld [vmem:[%s2929 + $0x40] sm:$0xff]
    %v2939 = vld [vmem:[%s2929 + $0x48] sm:$0xff]
    %v2940 = vld [vmem:[%s2929 + $0x50] sm:$0xff]
    %v2941 = vld [vmem:[%s2929 + $0x58] sm:$0xff]
    %v2942 = vld [vmem:[%s2929 + $0x60] sm:$0xff]
    %v2943 = vld [vmem:[%s2929 + $0x68] sm:$0xff]
    %v2944 = vld [vmem:[%s2929 + $0x70] sm:$0xff]
    %v2945 = vld [vmem:[%s2929 + $0x78] sm:$0xff]
    %v2946 = vld [vmem:[%s2929 + $0x80] sm:$0xff]
    %v2947 = vld [vmem:[%s2929 + $0x88] sm:$0xff]
    %v2948 = vld [vmem:[%s2929 + $0x90] sm:$0xff]
    %v2949 = vld [vmem:[%s2929 + $0x98] sm:$0xff]
    %v2950 = vld [vmem:[%s2929 + $0xa0] sm:$0xff]
    %v2951 = vld [vmem:[%s2929 + $0xa8] sm:$0xff]
    %v2952 = vld [vmem:[%s2929 + $0xb0] sm:$0xff]
    %v2953 = vld [vmem:[%s2929 + $0xb8] sm:$0xff]
    %v2954 = vld [vmem:[%s2929 + $0xc0] sm:$0xff]
    %v2955 = vld [vmem:[%s2929 + $0xc8] sm:$0xff]
    %v2956 = vld [vmem:[%s2929 + $0xd0] sm:$0xff]
    %v2957 = vld [vmem:[%s2929 + $0xd8] sm:$0xff]
    %v2958 = vld [vmem:[%s2929 + $0xe0] sm:$0xff]
    %v2959 = vld [vmem:[%s2929 + $0xe8] sm:$0xff]
    %v2960 = vld [vmem:[%s2929 + $0xf0] sm:$0xff]
    %v2961 = vld [vmem:[%s2929 + $0xf8] sm:$0xff]
    %s2962 = scalar_lea.vmem %s8, 16
    %v2963 = vld [vmem:[%s2962] sm:$0xff]
    %v2964 = vld [vmem:[%s2962 + $0x8] sm:$0xff]
    %v2967 = vlaneseq
    %v2968 = vshrl.u32 %v2967, 7
    %v2969 = vsub.s32 0, %v2968
    %v2970 = vrot.slane %v2963, %v2969
    %v2971 = vlaneseq
    %v2972 = vshrl.u32 %v2971, 7
    %v2973 = vsub.s32 1, %v2972
    %v2974 = vrot.slane %v2963, %v2973
    %v2975 = vlaneseq
    %v2976 = vshrl.u32 %v2975, 7
    %v2977 = vsub.s32 2, %v2976
    %v2978 = vrot.slane %v2963, %v2977
    %v2979 = vlaneseq
    %v2980 = vshrl.u32 %v2979, 7
    %v2981 = vsub.s32 3, %v2980
    %v2982 = vrot.slane %v2963, %v2981
    %v2983 = vlaneseq
    %v2984 = vshrl.u32 %v2983, 7
    %v2985 = vsub.s32 4, %v2984
    %v2986 = vrot.slane %v2963, %v2985
    %v2987 = vlaneseq
    %v2988 = vshrl.u32 %v2987, 7
    %v2989 = vsub.s32 5, %v2988
    %v2990 = vrot.slane %v2963, %v2989
    %v2991 = vlaneseq
    %v2992 = vshrl.u32 %v2991, 7
    %v2993 = vsub.s32 6, %v2992
    %v2994 = vrot.slane %v2963, %v2993
    %v2995 = vlaneseq
    %v2996 = vshrl.u32 %v2995, 7
    %v2997 = vsub.s32 7, %v2996
    %v2998 = vrot.slane %v2963, %v2997
    %v2999 = vlaneseq
    %v3000 = vshrl.u32 %v2999, 7
    %v3001 = vsub.s32 0, %v3000
    %v3002 = vrot.slane %v2964, %v3001
    %v3003 = vlaneseq
    %v3004 = vshrl.u32 %v3003, 7
    %v3005 = vsub.s32 1, %v3004
    %v3006 = vrot.slane %v2964, %v3005
    %v3007 = vlaneseq
    %v3008 = vshrl.u32 %v3007, 7
    %v3009 = vsub.s32 2, %v3008
    %v3010 = vrot.slane %v2964, %v3009
    %v3011 = vlaneseq
    %v3012 = vshrl.u32 %v3011, 7
    %v3013 = vsub.s32 3, %v3012
    %v3014 = vrot.slane %v2964, %v3013
    %v3015 = vlaneseq
    %v3016 = vshrl.u32 %v3015, 7
    %v3017 = vsub.s32 4, %v3016
    %v3018 = vrot.slane %v2964, %v3017
    %v3019 = vlaneseq
    %v3020 = vshrl.u32 %v3019, 7
    %v3021 = vsub.s32 5, %v3020
    %v3022 = vrot.slane %v2964, %v3021
    %v3023 = vlaneseq
    %v3024 = vshrl.u32 %v3023, 7
    %v3025 = vsub.s32 6, %v3024
    %v3026 = vrot.slane %v2964, %v3025
    %v3027 = vlaneseq
    %v3028 = vshrl.u32 %v3027, 7
    %v3029 = vsub.s32 7, %v3028
    %v3030 = vrot.slane %v2964, %v3029
    %v3079 = vunpack.c.l.b16 %v2930
    %v3080 = vunpack.c.h.b16 %v2930
    %v3081 = vunpack.c.l.b16 %v2931
    %v3082 = vunpack.c.h.b16 %v2931
    %v3083 = vunpack.c.l.b16 %v2932
    %v3084 = vunpack.c.h.b16 %v2932
    %v3085 = vunpack.c.l.b16 %v2933
    %v3086 = vunpack.c.h.b16 %v2933
    %v3087 = vunpack.c.l.b16 %v2934
    %v3088 = vunpack.c.h.b16 %v2934
    %v3089 = vunpack.c.l.b16 %v2935
    %v3090 = vunpack.c.h.b16 %v2935
    %v3091 = vunpack.c.l.b16 %v2936
    %v3092 = vunpack.c.h.b16 %v2936
    %v3093 = vunpack.c.l.b16 %v2937
    %v3094 = vunpack.c.h.b16 %v2937
    %v3095 = vunpack.c.l.b16 %v2938
    %v3096 = vunpack.c.h.b16 %v2938
    %v3097 = vunpack.c.l.b16 %v2939
    %v3098 = vunpack.c.h.b16 %v2939
    %v3099 = vunpack.c.l.b16 %v2940
    %v3100 = vunpack.c.h.b16 %v2940
    %v3101 = vunpack.c.l.b16 %v2941
    %v3102 = vunpack.c.h.b16 %v2941
    %v3103 = vunpack.c.l.b16 %v2942
    %v3104 = vunpack.c.h.b16 %v2942
    %v3105 = vunpack.c.l.b16 %v2943
    %v3106 = vunpack.c.h.b16 %v2943
    %v3107 = vunpack.c.l.b16 %v2944
    %v3108 = vunpack.c.h.b16 %v2944
    %v3109 = vunpack.c.l.b16 %v2945
    %v3110 = vunpack.c.h.b16 %v2945
    %v3111 = vunpack.c.l.b16 %v2946
    %v3112 = vunpack.c.h.b16 %v2946
    %v3113 = vunpack.c.l.b16 %v2947
    %v3114 = vunpack.c.h.b16 %v2947
    %v3115 = vunpack.c.l.b16 %v2948
    %v3116 = vunpack.c.h.b16 %v2948
    %v3117 = vunpack.c.l.b16 %v2949
    %v3118 = vunpack.c.h.b16 %v2949
    %v3119 = vunpack.c.l.b16 %v2950
    %v3120 = vunpack.c.h.b16 %v2950
    %v3121 = vunpack.c.l.b16 %v2951
    %v3122 = vunpack.c.h.b16 %v2951
    %v3123 = vunpack.c.l.b16 %v2952
    %v3124 = vunpack.c.h.b16 %v2952
    %v3125 = vunpack.c.l.b16 %v2953
    %v3126 = vunpack.c.h.b16 %v2953
    %v3127 = vunpack.c.l.b16 %v2954
    %v3128 = vunpack.c.h.b16 %v2954
    %v3129 = vunpack.c.l.b16 %v2955
    %v3130 = vunpack.c.h.b16 %v2955
    %v3131 = vunpack.c.l.b16 %v2956
    %v3132 = vunpack.c.h.b16 %v2956
    %v3133 = vunpack.c.l.b16 %v2957
    %v3134 = vunpack.c.h.b16 %v2957
    %v3135 = vunpack.c.l.b16 %v2958
    %v3136 = vunpack.c.h.b16 %v2958
    %v3137 = vunpack.c.l.b16 %v2959
    %v3138 = vunpack.c.h.b16 %v2959
    %v3139 = vunpack.c.l.b16 %v2960
    %v3140 = vunpack.c.h.b16 %v2960
    %v3141 = vunpack.c.l.b16 %v2961
    %v3142 = vunpack.c.h.b16 %v2961
    %v3143 = vpack.c.b16 %v3095, %v3079
    %v3144 = vpack.c.b16 %v3096, %v3080
    %v3145 = vpack.c.b16 %v3097, %v3081
    %v3146 = vpack.c.b16 %v3098, %v3082
    %v3147 = vpack.c.b16 %v3099, %v3083
    %v3148 = vpack.c.b16 %v3100, %v3084
    %v3149 = vpack.c.b16 %v3101, %v3085
    %v3150 = vpack.c.b16 %v3102, %v3086
    %v3151 = vpack.c.b16 %v3103, %v3087
    %v3152 = vpack.c.b16 %v3104, %v3088
    %v3153 = vpack.c.b16 %v3105, %v3089
    %v3154 = vpack.c.b16 %v3106, %v3090
    %v3155 = vpack.c.b16 %v3107, %v3091
    %v3156 = vpack.c.b16 %v3108, %v3092
    %v3157 = vpack.c.b16 %v3109, %v3093
    %v3158 = vpack.c.b16 %v3110, %v3094
    %v3159 = vpack.c.b16 %v3127, %v3111
    %v3160 = vpack.c.b16 %v3128, %v3112
    %v3161 = vpack.c.b16 %v3129, %v3113
    %v3162 = vpack.c.b16 %v3130, %v3114
    %v3163 = vpack.c.b16 %v3131, %v3115
    %v3164 = vpack.c.b16 %v3132, %v3116
    %v3165 = vpack.c.b16 %v3133, %v3117
    %v3166 = vpack.c.b16 %v3134, %v3118
    %v3167 = vpack.c.b16 %v3135, %v3119
    %v3168 = vpack.c.b16 %v3136, %v3120
    %v3169 = vpack.c.b16 %v3137, %v3121
    %v3170 = vpack.c.b16 %v3138, %v3122
    %v3171 = vpack.c.b16 %v3139, %v3123
    %v3172 = vpack.c.b16 %v3140, %v3124
    %v3173 = vpack.c.b16 %v3141, %v3125
    %v3174 = vpack.c.b16 %v3142, %v3126
    %v3208 = vsel %vm142, %v2928, 0
    %3210 = vmatprep.subr.bf16.mxu0 %v3144
    %3211 = vmatpush1.bf16.msra.mxu0 %v3143
    %3212 = vmatprep.subr.bf16.mxu0 %v3160
    %3213 = vmatpush1.bf16.msra.mxu0 %v3159
    %3214 = vmatprep.subr.bf16.mxu0 0
    %3215 = vmatpush1.bf16.msra.mxu0 0
    %3216 = vmatprep.subr.bf16.mxu0 0
    %3217 = vmatpush1.bf16.msra.mxu0 0
    %3218 = vmatprep.subr.bf16.mxu0 0
    %3219 = vmatpush1.bf16.msra.mxu0 0
    %3220 = vmatprep.subr.bf16.mxu0 0
    %3221 = vmatpush1.bf16.msra.mxu0 0
    %3222 = vmatprep.subr.bf16.mxu0 0
    %3223 = vmatpush1.bf16.msra.mxu0 0
    %3224 = vmatprep.subr.bf16.mxu0 0
    %3225 = vmatpush1.bf16.msra.mxu0 0
    %3226 = vmatprep.subr.bf16.mxu0 0
    %3227 = vmatpush1.bf16.msra.mxu0 0
    %3228 = vmatprep.subr.bf16.mxu0 0
    %3229 = vmatpush1.bf16.msra.mxu0 0
    %3230 = vmatprep.subr.bf16.mxu0 0
    %3231 = vmatpush1.bf16.msra.mxu0 0
    %3232 = vmatprep.subr.bf16.mxu0 0
    %3233 = vmatpush1.bf16.msra.mxu0 0
    %3234 = vmatprep.subr.bf16.mxu0 0
    %3235 = vmatpush1.bf16.msra.mxu0 0
    %3236 = vmatprep.subr.bf16.mxu0 0
    %3237 = vmatpush1.bf16.msra.mxu0 0
    %3238 = vmatprep.subr.bf16.mxu0 0
    %3239 = vmatpush1.bf16.msra.mxu0 0
    %3240 = vmatprep.subr.bf16.mxu0 0
    %3241 = vmatpush1.bf16.msra.mxu0 0
    %3242 = vmatprep.mubr.bf16.mxu0 0
    %3243 = vmatmul.mubr.bf16.gmra.mrb[0].mxu0 %v3208
    %v3244 = vpop.f32.mrb[0].mxu0
    %v3245 = vadd.f32 %v2970, %v3244
    %v3246 = vpop.f32.mrb[0].mxu0
    %v3247 = vadd.f32 %v2974, %v3246
    %v3248 = vpop.f32.mrb[0].mxu0
    %v3249 = vpop.f32.mrb[0].mxu0
    %3250 = vdwg.mxu0
    %3251 = vmatprep.subr.bf16.mxu0 %v3146
    %3252 = vmatpush1.bf16.msra.mxu0 %v3145
    %3253 = vmatprep.subr.bf16.mxu0 %v3162
    %3254 = vmatpush1.bf16.msra.mxu0 %v3161
    %3255 = vmatprep.subr.bf16.mxu0 0
    %3256 = vmatpush1.bf16.msra.mxu0 0
    %3257 = vmatprep.subr.bf16.mxu0 0
    %3258 = vmatpush1.bf16.msra.mxu0 0
    %3259 = vmatprep.subr.bf16.mxu0 0
    %3260 = vmatpush1.bf16.msra.mxu0 0
    %3261 = vmatprep.subr.bf16.mxu0 0
    %3262 = vmatpush1.bf16.msra.mxu0 0
    %3263 = vmatprep.subr.bf16.mxu0 0
    %3264 = vmatpush1.bf16.msra.mxu0 0
    %3265 = vmatprep.subr.bf16.mxu0 0
    %3266 = vmatpush1.bf16.msra.mxu0 0
    %3267 = vmatprep.subr.bf16.mxu0 0
    %3268 = vmatpush1.bf16.msra.mxu0 0
    %3269 = vmatprep.subr.bf16.mxu0 0
    %3270 = vmatpush1.bf16.msra.mxu0 0
    %3271 = vmatprep.subr.bf16.mxu0 0
    %3272 = vmatpush1.bf16.msra.mxu0 0
    %3273 = vmatprep.subr.bf16.mxu0 0
    %3274 = vmatpush1.bf16.msra.mxu0 0
    %3275 = vmatprep.subr.bf16.mxu0 0
    %3276 = vmatpush1.bf16.msra.mxu0 0
    %3277 = vmatprep.subr.bf16.mxu0 0
    %3278 = vmatpush1.bf16.msra.mxu0 0
    %3279 = vmatprep.subr.bf16.mxu0 0
    %3280 = vmatpush1.bf16.msra.mxu0 0
    %3281 = vmatprep.subr.bf16.mxu0 0
    %3282 = vmatpush1.bf16.msra.mxu0 0
    %3283 = vmatprep.mubr.bf16.mxu0 0
    %3284 = vmatmul.mubr.bf16.gmra.mrb[0].mxu0 %v3208
    %v3285 = vpop.f32.mrb[0].mxu0
    %v3286 = vadd.f32 %v2978, %v3285
    %v3287 = vpop.f32.mrb[0].mxu0
    %v3288 = vadd.f32 %v2982, %v3287
    %v3289 = vpop.f32.mrb[0].mxu0
    %v3290 = vpop.f32.mrb[0].mxu0
    %3291 = vdwg.mxu0
    %3292 = vmatprep.subr.bf16.mxu0 %v3148
    %3293 = vmatpush1.bf16.msra.mxu0 %v3147
    %3294 = vmatprep.subr.bf16.mxu0 %v3164
    %3295 = vmatpush1.bf16.msra.mxu0 %v3163
    %3296 = vmatprep.subr.bf16.mxu0 0
    %3297 = vmatpush1.bf16.msra.mxu0 0
    %3298 = vmatprep.subr.bf16.mxu0 0
    %3299 = vmatpush1.bf16.msra.mxu0 0
    %3300 = vmatprep.subr.bf16.mxu0 0
    %3301 = vmatpush1.bf16.msra.mxu0 0
    %3302 = vmatprep.subr.bf16.mxu0 0
    %3303 = vmatpush1.bf16.msra.mxu0 0
    %3304 = vmatprep.subr.bf16.mxu0 0
    %3305 = vmatpush1.bf16.msra.mxu0 0
    %3306 = vmatprep.subr.bf16.mxu0 0
    %3307 = vmatpush1.bf16.msra.mxu0 0
    %3308 = vmatprep.subr.bf16.mxu0 0
    %3309 = vmatpush1.bf16.msra.mxu0 0
    %3310 = vmatprep.subr.bf16.mxu0 0
    %3311 = vmatpush1.bf16.msra.mxu0 0
    %3312 = vmatprep.subr.bf16.mxu0 0
    %3313 = vmatpush1.bf16.msra.mxu0 0
    %3314 = vmatprep.subr.bf16.mxu0 0
    %3315 = vmatpush1.bf16.msra.mxu0 0
    %3316 = vmatprep.subr.bf16.mxu0 0
    %3317 = vmatpush1.bf16.msra.mxu0 0
    %3318 = vmatprep.subr.bf16.mxu0 0
    %3319 = vmatpush1.bf16.msra.mxu0 0
    %3320 = vmatprep.subr.bf16.mxu0 0
    %3321 = vmatpush1.bf16.msra.mxu0 0
    %3322 = vmatprep.subr.bf16.mxu0 0
    %3323 = vmatpush1.bf16.msra.mxu0 0
    %3324 = vmatprep.mubr.bf16.mxu0 0
    %3325 = vmatmul.mubr.bf16.gmra.mrb[0].mxu0 %v3208
    %v3326 = vpop.f32.mrb[0].mxu0
    %v3327 = vadd.f32 %v2986, %v3326
    %v3328 = vpop.f32.mrb[0].mxu0
    %v3329 = vadd.f32 %v2990, %v3328
    %v3330 = vpop.f32.mrb[0].mxu0
    %v3331 = vpop.f32.mrb[0].mxu0
    %3332 = vdwg.mxu0
    %3333 = vmatprep.subr.bf16.mxu0 %v3150
    %3334 = vmatpush1.bf16.msra.mxu0 %v3149
    %3335 = vmatprep.subr.bf16.mxu0 %v3166
    %3336 = vmatpush1.bf16.msra.mxu0 %v3165
    %3337 = vmatprep.subr.bf16.mxu0 0
    %3338 = vmatpush1.bf16.msra.mxu0 0
    %3339 = vmatprep.subr.bf16.mxu0 0
    %3340 = vmatpush1.bf16.msra.mxu0 0
    %3341 = vmatprep.subr.bf16.mxu0 0
    %3342 = vmatpush1.bf16.msra.mxu0 0
    %3343 = vmatprep.subr.bf16.mxu0 0
    %3344 = vmatpush1.bf16.msra.mxu0 0
    %3345 = vmatprep.subr.bf16.mxu0 0
    %3346 = vmatpush1.bf16.msra.mxu0 0
    %3347 = vmatprep.subr.bf16.mxu0 0
    %3348 = vmatpush1.bf16.msra.mxu0 0
    %3349 = vmatprep.subr.bf16.mxu0 0
    %3350 = vmatpush1.bf16.msra.mxu0 0
    %3351 = vmatprep.subr.bf16.mxu0 0
    %3352 = vmatpush1.bf16.msra.mxu0 0
    %3353 = vmatprep.subr.bf16.mxu0 0
    %3354 = vmatpush1.bf16.msra.mxu0 0
    %3355 = vmatprep.subr.bf16.mxu0 0
    %3356 = vmatpush1.bf16.msra.mxu0 0
    %3357 = vmatprep.subr.bf16.mxu0 0
    %3358 = vmatpush1.bf16.msra.mxu0 0
    %3359 = vmatprep.subr.bf16.mxu0 0
    %3360 = vmatpush1.bf16.msra.mxu0 0
    %3361 = vmatprep.subr.bf16.mxu0 0
    %3362 = vmatpush1.bf16.msra.mxu0 0
    %3363 = vmatprep.subr.bf16.mxu0 0
    %3364 = vmatpush1.bf16.msra.mxu0 0
    %3365 = vmatprep.mubr.bf16.mxu0 0
    %3366 = vmatmul.mubr.bf16.gmra.mrb[0].mxu0 %v3208
    %v3367 = vpop.f32.mrb[0].mxu0
    %v3368 = vadd.f32 %v2994, %v3367
    %v3369 = vpop.f32.mrb[0].mxu0
    %v3370 = vadd.f32 %v2998, %v3369
    %v3371 = vpop.f32.mrb[0].mxu0
    %v3372 = vpop.f32.mrb[0].mxu0
    %3373 = vdwg.mxu0
    %3374 = vmatprep.subr.bf16.mxu0 %v3152
    %3375 = vmatpush1.bf16.msra.mxu0 %v3151
    %3376 = vmatprep.subr.bf16.mxu0 %v3168
    %3377 = vmatpush1.bf16.msra.mxu0 %v3167
    %3378 = vmatprep.subr.bf16.mxu0 0
    %3379 = vmatpush1.bf16.msra.mxu0 0
    %3380 = vmatprep.subr.bf16.mxu0 0
    %3381 = vmatpush1.bf16.msra.mxu0 0
    %3382 = vmatprep.subr.bf16.mxu0 0
    %3383 = vmatpush1.bf16.msra.mxu0 0
    %3384 = vmatprep.subr.bf16.mxu0 0
    %3385 = vmatpush1.bf16.msra.mxu0 0
    %3386 = vmatprep.subr.bf16.mxu0 0
    %3387 = vmatpush1.bf16.msra.mxu0 0
    %3388 = vmatprep.subr.bf16.mxu0 0
    %3389 = vmatpush1.bf16.msra.mxu0 0
    %3390 = vmatprep.subr.bf16.mxu0 0
    %3391 = vmatpush1.bf16.msra.mxu0 0
    %3392 = vmatprep.subr.bf16.mxu0 0
    %3393 = vmatpush1.bf16.msra.mxu0 0
    %3394 = vmatprep.subr.bf16.mxu0 0
    %3395 = vmatpush1.bf16.msra.mxu0 0
    %3396 = vmatprep.subr.bf16.mxu0 0
    %3397 = vmatpush1.bf16.msra.mxu0 0
    %3398 = vmatprep.subr.bf16.mxu0 0
    %3399 = vmatpush1.bf16.msra.mxu0 0
    %3400 = vmatprep.subr.bf16.mxu0 0
    %3401 = vmatpush1.bf16.msra.mxu0 0
    %3402 = vmatprep.subr.bf16.mxu0 0
    %3403 = vmatpush1.bf16.msra.mxu0 0
    %3404 = vmatprep.subr.bf16.mxu0 0
    %3405 = vmatpush1.bf16.msra.mxu0 0
    %3406 = vmatprep.mubr.bf16.mxu0 0
    %3407 = vmatmul.mubr.bf16.gmra.mrb[0].mxu0 %v3208
    %v3408 = vpop.f32.mrb[0].mxu0
    %v3409 = vadd.f32 %v3002, %v3408
    %v3410 = vpop.f32.mrb[0].mxu0
    %v3411 = vadd.f32 %v3006, %v3410
    %v3412 = vpop.f32.mrb[0].mxu0
    %v3413 = vpop.f32.mrb[0].mxu0
    %3414 = vdwg.mxu0
    %3415 = vmatprep.subr.bf16.mxu0 %v3154
    %3416 = vmatpush1.bf16.msra.mxu0 %v3153
    %3417 = vmatprep.subr.bf16.mxu0 %v3170
    %3418 = vmatpush1.bf16.msra.mxu0 %v3169
    %3419 = vmatprep.subr.bf16.mxu0 0
    %3420 = vmatpush1.bf16.msra.mxu0 0
    %3421 = vmatprep.subr.bf16.mxu0 0
    %3422 = vmatpush1.bf16.msra.mxu0 0
    %3423 = vmatprep.subr.bf16.mxu0 0
    %3424 = vmatpush1.bf16.msra.mxu0 0
    %3425 = vmatprep.subr.bf16.mxu0 0
    %3426 = vmatpush1.bf16.msra.mxu0 0
    %3427 = vmatprep.subr.bf16.mxu0 0
    %3428 = vmatpush1.bf16.msra.mxu0 0
    %3429 = vmatprep.subr.bf16.mxu0 0
    %3430 = vmatpush1.bf16.msra.mxu0 0
    %3431 = vmatprep.subr.bf16.mxu0 0
    %3432 = vmatpush1.bf16.msra.mxu0 0
    %3433 = vmatprep.subr.bf16.mxu0 0
    %3434 = vmatpush1.bf16.msra.mxu0 0
    %3435 = vmatprep.subr.bf16.mxu0 0
    %3436 = vmatpush1.bf16.msra.mxu0 0
    %3437 = vmatprep.subr.bf16.mxu0 0
    %3438 = vmatpush1.bf16.msra.mxu0 0
    %3439 = vmatprep.subr.bf16.mxu0 0
    %3440 = vmatpush1.bf16.msra.mxu0 0
    %3441 = vmatprep.subr.bf16.mxu0 0
    %3442 = vmatpush1.bf16.msra.mxu0 0
    %3443 = vmatprep.subr.bf16.mxu0 0
    %3444 = vmatpush1.bf16.msra.mxu0 0
    %3445 = vmatprep.subr.bf16.mxu0 0
    %3446 = vmatpush1.bf16.msra.mxu0 0
    %3447 = vmatprep.mubr.bf16.mxu0 0
    %3448 = vmatmul.mubr.bf16.gmra.mrb[0].mxu0 %v3208
    %v3449 = vpop.f32.mrb[0].mxu0
    %v3450 = vadd.f32 %v3010, %v3449
    %v3451 = vpop.f32.mrb[0].mxu0
    %v3452 = vadd.f32 %v3014, %v3451
    %v3453 = vpop.f32.mrb[0].mxu0
    %v3454 = vpop.f32.mrb[0].mxu0
    %3455 = vdwg.mxu0
    %3456 = vmatprep.subr.bf16.mxu0 %v3156
    %3457 = vmatpush1.bf16.msra.mxu0 %v3155
    %3458 = vmatprep.subr.bf16.mxu0 %v3172
    %3459 = vmatpush1.bf16.msra.mxu0 %v3171
    %3460 = vmatprep.subr.bf16.mxu0 0
    %3461 = vmatpush1.bf16.msra.mxu0 0
    %3462 = vmatprep.subr.bf16.mxu0 0
    %3463 = vmatpush1.bf16.msra.mxu0 0
    %3464 = vmatprep.subr.bf16.mxu0 0
    %3465 = vmatpush1.bf16.msra.mxu0 0
    %3466 = vmatprep.subr.bf16.mxu0 0
    %3467 = vmatpush1.bf16.msra.mxu0 0
    %3468 = vmatprep.subr.bf16.mxu0 0
    %3469 = vmatpush1.bf16.msra.mxu0 0
    %3470 = vmatprep.subr.bf16.mxu0 0
    %3471 = vmatpush1.bf16.msra.mxu0 0
    %3472 = vmatprep.subr.bf16.mxu0 0
    %3473 = vmatpush1.bf16.msra.mxu0 0
    %3474 = vmatprep.subr.bf16.mxu0 0
    %3475 = vmatpush1.bf16.msra.mxu0 0
    %3476 = vmatprep.subr.bf16.mxu0 0
    %3477 = vmatpush1.bf16.msra.mxu0 0
    %3478 = vmatprep.subr.bf16.mxu0 0
    %3479 = vmatpush1.bf16.msra.mxu0 0
    %3480 = vmatprep.subr.bf16.mxu0 0
    %3481 = vmatpush1.bf16.msra.mxu0 0
    %3482 = vmatprep.subr.bf16.mxu0 0
    %3483 = vmatpush1.bf16.msra.mxu0 0
    %3484 = vmatprep.subr.bf16.mxu0 0
    %3485 = vmatpush1.bf16.msra.mxu0 0
    %3486 = vmatprep.subr.bf16.mxu0 0
    %3487 = vmatpush1.bf16.msra.mxu0 0
    %3488 = vmatprep.mubr.bf16.mxu0 0
    %3489 = vmatmul.mubr.bf16.gmra.mrb[0].mxu0 %v3208
    %v3490 = vpop.f32.mrb[0].mxu0
    %v3491 = vadd.f32 %v3018, %v3490
    %v3492 = vpop.f32.mrb[0].mxu0
    %v3493 = vadd.f32 %v3022, %v3492
    %v3494 = vpop.f32.mrb[0].mxu0
    %v3495 = vpop.f32.mrb[0].mxu0
    %3496 = vdwg.mxu0
    %3497 = vmatprep.subr.bf16.mxu0 %v3158
    %3498 = vmatpush1.bf16.msra.mxu0 %v3157
    %3499 = vmatprep.subr.bf16.mxu0 %v3174
    %3500 = vmatpush1.bf16.msra.mxu0 %v3173
    %3501 = vmatprep.subr.bf16.mxu0 0
    %3502 = vmatpush1.bf16.msra.mxu0 0
    %3503 = vmatprep.subr.bf16.mxu0 0
    %3504 = vmatpush1.bf16.msra.mxu0 0
    %3505 = vmatprep.subr.bf16.mxu0 0
    %3506 = vmatpush1.bf16.msra.mxu0 0
    %3507 = vmatprep.subr.bf16.mxu0 0
    %3508 = vmatpush1.bf16.msra.mxu0 0
    %3509 = vmatprep.subr.bf16.mxu0 0
    %3510 = vmatpush1.bf16.msra.mxu0 0
    %3511 = vmatprep.subr.bf16.mxu0 0
    %3512 = vmatpush1.bf16.msra.mxu0 0
    %3513 = vmatprep.subr.bf16.mxu0 0
    %3514 = vmatpush1.bf16.msra.mxu0 0
    %3515 = vmatprep.subr.bf16.mxu0 0
    %3516 = vmatpush1.bf16.msra.mxu0 0
    %3517 = vmatprep.subr.bf16.mxu0 0
    %3518 = vmatpush1.bf16.msra.mxu0 0
    %3519 = vmatprep.subr.bf16.mxu0 0
    %3520 = vmatpush1.bf16.msra.mxu0 0
    %3521 = vmatprep.subr.bf16.mxu0 0
    %3522 = vmatpush1.bf16.msra.mxu0 0
    %3523 = vmatprep.subr.bf16.mxu0 0
    %3524 = vmatpush1.bf16.msra.mxu0 0
    %3525 = vmatprep.subr.bf16.mxu0 0
    %3526 = vmatpush1.bf16.msra.mxu0 0
    %3527 = vmatprep.subr.bf16.mxu0 0
    %3528 = vmatpush1.bf16.msra.mxu0 0
    %3529 = vmatprep.mubr.bf16.mxu0 0
    %3530 = vmatmul.mubr.bf16.gmra.mrb[0].mxu0 %v3208
    %v3531 = vpop.f32.mrb[0].mxu0
    %v3532 = vadd.f32 %v3026, %v3531
    %v3533 = vpop.f32.mrb[0].mxu0
    %v3534 = vadd.f32 %v3030, %v3533
    %v3535 = vpop.f32.mrb[0].mxu0
    %v3536 = vpop.f32.mrb[0].mxu0
    %3537 = vdwg.mxu0
    %v3538 = vmax.f32 %v3245, 0.0
    %v3539 = vmax.f32 %v3247, 0.0
    %v3540 = vmax.f32 %v3286, 0.0
    %v3541 = vmax.f32 %v3288, 0.0
    %v3542 = vmax.f32 %v3327, 0.0
    %v3543 = vmax.f32 %v3329, 0.0
    %v3544 = vmax.f32 %v3368, 0.0
    %v3545 = vmax.f32 %v3370, 0.0
    %v3546 = vmax.f32 %v3409, 0.0
    %v3547 = vmax.f32 %v3411, 0.0
    %v3548 = vmax.f32 %v3450, 0.0
    %v3549 = vmax.f32 %v3452, 0.0
    %v3550 = vmax.f32 %v3491, 0.0
    %v3551 = vmax.f32 %v3493, 0.0
    %v3552 = vmax.f32 %v3532, 0.0
    %v3553 = vmax.f32 %v3534, 0.0
    %v3554 = vpack.c.bf16 %v3538, %v3538
    %v3555 = vpack.c.bf16 %v3539, %v3539
    %v3556 = vpack.c.bf16 %v3540, %v3540
    %v3557 = vpack.c.bf16 %v3541, %v3541
    %v3558 = vpack.c.bf16 %v3542, %v3542
    %v3559 = vpack.c.bf16 %v3543, %v3543
    %v3560 = vpack.c.bf16 %v3544, %v3544
    %v3561 = vpack.c.bf16 %v3545, %v3545
    %v3562 = vpack.c.bf16 %v3546, %v3546
    %v3563 = vpack.c.bf16 %v3547, %v3547
    %v3564 = vpack.c.bf16 %v3548, %v3548
    %v3565 = vpack.c.bf16 %v3549, %v3549
    %v3566 = vpack.c.bf16 %v3550, %v3550
    %v3567 = vpack.c.bf16 %v3551, %v3551
    %v3568 = vpack.c.bf16 %v3552, %v3552
    %v3569 = vpack.c.bf16 %v3553, %v3553
    %s3570 = scalar_lea.vmem %s9, 1024
    %v3571 = vld [vmem:[%s3570] sm:$0xf]
    %v3572 = vld [vmem:[%s3570 + $0x4] sm:$0xf]
    %v3573 = vld [vmem:[%s3570 + $0x8] sm:$0xf]
    %v3574 = vld [vmem:[%s3570 + $0xc] sm:$0xf]
    %v3575 = vld [vmem:[%s3570 + $0x10] sm:$0xf]
    %v3576 = vld [vmem:[%s3570 + $0x14] sm:$0xf]
    %v3577 = vld [vmem:[%s3570 + $0x18] sm:$0xf]
    %v3578 = vld [vmem:[%s3570 + $0x1c] sm:$0xf]
    %v3579 = vld [vmem:[%s3570 + $0x20] sm:$0xf]
    %v3580 = vld [vmem:[%s3570 + $0x24] sm:$0xf]
    %v3581 = vld [vmem:[%s3570 + $0x28] sm:$0xf]
    %v3582 = vld [vmem:[%s3570 + $0x2c] sm:$0xf]
    %v3583 = vld [vmem:[%s3570 + $0x30] sm:$0xf]
    %v3584 = vld [vmem:[%s3570 + $0x34] sm:$0xf]
    %v3585 = vld [vmem:[%s3570 + $0x38] sm:$0xf]
    %v3586 = vld [vmem:[%s3570 + $0x3c] sm:$0xf]
    %v3587 = vld [vmem:[%s3570 + $0x40] sm:$0xf]
    %v3588 = vld [vmem:[%s3570 + $0x44] sm:$0xf]
    %v3589 = vld [vmem:[%s3570 + $0x48] sm:$0xf]
    %v3590 = vld [vmem:[%s3570 + $0x4c] sm:$0xf]
    %v3591 = vld [vmem:[%s3570 + $0x50] sm:$0xf]
    %v3592 = vld [vmem:[%s3570 + $0x54] sm:$0xf]
    %v3593 = vld [vmem:[%s3570 + $0x58] sm:$0xf]
    %v3594 = vld [vmem:[%s3570 + $0x5c] sm:$0xf]
    %v3595 = vld [vmem:[%s3570 + $0x60] sm:$0xf]
    %v3596 = vld [vmem:[%s3570 + $0x64] sm:$0xf]
    %v3597 = vld [vmem:[%s3570 + $0x68] sm:$0xf]
    %v3598 = vld [vmem:[%s3570 + $0x6c] sm:$0xf]
    %v3599 = vld [vmem:[%s3570 + $0x70] sm:$0xf]
    %v3600 = vld [vmem:[%s3570 + $0x74] sm:$0xf]
    %v3601 = vld [vmem:[%s3570 + $0x78] sm:$0xf]
    %v3602 = vld [vmem:[%s3570 + $0x7c] sm:$0xf]
    %v3603 = vld [vmem:[%s3570 + $0x80] sm:$0xf]
    %v3604 = vld [vmem:[%s3570 + $0x84] sm:$0xf]
    %v3605 = vld [vmem:[%s3570 + $0x88] sm:$0xf]
    %v3606 = vld [vmem:[%s3570 + $0x8c] sm:$0xf]
    %v3607 = vld [vmem:[%s3570 + $0x90] sm:$0xf]
    %v3608 = vld [vmem:[%s3570 + $0x94] sm:$0xf]
    %v3609 = vld [vmem:[%s3570 + $0x98] sm:$0xf]
    %v3610 = vld [vmem:[%s3570 + $0x9c] sm:$0xf]
    %v3611 = vld [vmem:[%s3570 + $0xa0] sm:$0xf]
    %v3612 = vld [vmem:[%s3570 + $0xa4] sm:$0xf]
    %v3613 = vld [vmem:[%s3570 + $0xa8] sm:$0xf]
    %v3614 = vld [vmem:[%s3570 + $0xac] sm:$0xf]
    %v3615 = vld [vmem:[%s3570 + $0xb0] sm:$0xf]
    %v3616 = vld [vmem:[%s3570 + $0xb4] sm:$0xf]
    %v3617 = vld [vmem:[%s3570 + $0xb8] sm:$0xf]
    %v3618 = vld [vmem:[%s3570 + $0xbc] sm:$0xf]
    %v3619 = vld [vmem:[%s3570 + $0xc0] sm:$0xf]
    %v3620 = vld [vmem:[%s3570 + $0xc4] sm:$0xf]
    %v3621 = vld [vmem:[%s3570 + $0xc8] sm:$0xf]
    %v3622 = vld [vmem:[%s3570 + $0xcc] sm:$0xf]
    %v3623 = vld [vmem:[%s3570 + $0xd0] sm:$0xf]
    %v3624 = vld [vmem:[%s3570 + $0xd4] sm:$0xf]
    %v3625 = vld [vmem:[%s3570 + $0xd8] sm:$0xf]
    %v3626 = vld [vmem:[%s3570 + $0xdc] sm:$0xf]
    %v3627 = vld [vmem:[%s3570 + $0xe0] sm:$0xf]
    %v3628 = vld [vmem:[%s3570 + $0xe4] sm:$0xf]
    %v3629 = vld [vmem:[%s3570 + $0xe8] sm:$0xf]
    %v3630 = vld [vmem:[%s3570 + $0xec] sm:$0xf]
    %v3631 = vld [vmem:[%s3570 + $0xf0] sm:$0xf]
    %v3632 = vld [vmem:[%s3570 + $0xf4] sm:$0xf]
    %v3633 = vld [vmem:[%s3570 + $0xf8] sm:$0xf]
    %v3634 = vld [vmem:[%s3570 + $0xfc] sm:$0xf]
    %v3635 = vld [vmem:[%s3570 + $0x100] sm:$0xf]
    %v3636 = vld [vmem:[%s3570 + $0x104] sm:$0xf]
    %v3637 = vld [vmem:[%s3570 + $0x108] sm:$0xf]
    %v3638 = vld [vmem:[%s3570 + $0x10c] sm:$0xf]
    %v3639 = vld [vmem:[%s3570 + $0x110] sm:$0xf]
    %v3640 = vld [vmem:[%s3570 + $0x114] sm:$0xf]
    %v3641 = vld [vmem:[%s3570 + $0x118] sm:$0xf]
    %v3642 = vld [vmem:[%s3570 + $0x11c] sm:$0xf]
    %v3643 = vld [vmem:[%s3570 + $0x120] sm:$0xf]
    %v3644 = vld [vmem:[%s3570 + $0x124] sm:$0xf]
    %v3645 = vld [vmem:[%s3570 + $0x128] sm:$0xf]
    %v3646 = vld [vmem:[%s3570 + $0x12c] sm:$0xf]
    %v3647 = vld [vmem:[%s3570 + $0x130] sm:$0xf]
    %v3648 = vld [vmem:[%s3570 + $0x134] sm:$0xf]
    %v3649 = vld [vmem:[%s3570 + $0x138] sm:$0xf]
    %v3650 = vld [vmem:[%s3570 + $0x13c] sm:$0xf]
    %v3651 = vld [vmem:[%s3570 + $0x140] sm:$0xf]
    %v3652 = vld [vmem:[%s3570 + $0x144] sm:$0xf]
    %v3653 = vld [vmem:[%s3570 + $0x148] sm:$0xf]
    %v3654 = vld [vmem:[%s3570 + $0x14c] sm:$0xf]
    %v3655 = vld [vmem:[%s3570 + $0x150] sm:$0xf]
    %v3656 = vld [vmem:[%s3570 + $0x154] sm:$0xf]
    %v3657 = vld [vmem:[%s3570 + $0x158] sm:$0xf]
    %v3658 = vld [vmem:[%s3570 + $0x15c] sm:$0xf]
    %v3659 = vld [vmem:[%s3570 + $0x160] sm:$0xf]
    %v3660 = vld [vmem:[%s3570 + $0x164] sm:$0xf]
    %v3661 = vld [vmem:[%s3570 + $0x168] sm:$0xf]
    %v3662 = vld [vmem:[%s3570 + $0x16c] sm:$0xf]
    %v3663 = vld [vmem:[%s3570 + $0x170] sm:$0xf]
    %v3664 = vld [vmem:[%s3570 + $0x174] sm:$0xf]
    %v3665 = vld [vmem:[%s3570 + $0x178] sm:$0xf]
    %v3666 = vld [vmem:[%s3570 + $0x17c] sm:$0xf]
    %v3667 = vld [vmem:[%s3570 + $0x180] sm:$0xf]
    %v3668 = vld [vmem:[%s3570 + $0x184] sm:$0xf]
    %v3669 = vld [vmem:[%s3570 + $0x188] sm:$0xf]
    %v3670 = vld [vmem:[%s3570 + $0x18c] sm:$0xf]
    %v3671 = vld [vmem:[%s3570 + $0x190] sm:$0xf]
    %v3672 = vld [vmem:[%s3570 + $0x194] sm:$0xf]
    %v3673 = vld [vmem:[%s3570 + $0x198] sm:$0xf]
    %v3674 = vld [vmem:[%s3570 + $0x19c] sm:$0xf]
    %v3675 = vld [vmem:[%s3570 + $0x1a0] sm:$0xf]
    %v3676 = vld [vmem:[%s3570 + $0x1a4] sm:$0xf]
    %v3677 = vld [vmem:[%s3570 + $0x1a8] sm:$0xf]
    %v3678 = vld [vmem:[%s3570 + $0x1ac] sm:$0xf]
    %v3679 = vld [vmem:[%s3570 + $0x1b0] sm:$0xf]
    %v3680 = vld [vmem:[%s3570 + $0x1b4] sm:$0xf]
    %v3681 = vld [vmem:[%s3570 + $0x1b8] sm:$0xf]
    %v3682 = vld [vmem:[%s3570 + $0x1bc] sm:$0xf]
    %v3683 = vld [vmem:[%s3570 + $0x1c0] sm:$0xf]
    %v3684 = vld [vmem:[%s3570 + $0x1c4] sm:$0xf]
    %v3685 = vld [vmem:[%s3570 + $0x1c8] sm:$0xf]
    %v3686 = vld [vmem:[%s3570 + $0x1cc] sm:$0xf]
    %v3687 = vld [vmem:[%s3570 + $0x1d0] sm:$0xf]
    %v3688 = vld [vmem:[%s3570 + $0x1d4] sm:$0xf]
    %v3689 = vld [vmem:[%s3570 + $0x1d8] sm:$0xf]
    %v3690 = vld [vmem:[%s3570 + $0x1dc] sm:$0xf]
    %v3691 = vld [vmem:[%s3570 + $0x1e0] sm:$0xf]
    %v3692 = vld [vmem:[%s3570 + $0x1e4] sm:$0xf]
    %v3693 = vld [vmem:[%s3570 + $0x1e8] sm:$0xf]
    %v3694 = vld [vmem:[%s3570 + $0x1ec] sm:$0xf]
    %v3695 = vld [vmem:[%s3570 + $0x1f0] sm:$0xf]
    %v3696 = vld [vmem:[%s3570 + $0x1f4] sm:$0xf]
    %v3697 = vld [vmem:[%s3570 + $0x1f8] sm:$0xf]
    %v3698 = vld [vmem:[%s3570 + $0x1fc] sm:$0xf]
    %v3699 = vld [vmem:[%s3570 + $0x200] sm:$0xf]
    %v3700 = vld [vmem:[%s3570 + $0x204] sm:$0xf]
    %v3701 = vld [vmem:[%s3570 + $0x208] sm:$0xf]
    %v3702 = vld [vmem:[%s3570 + $0x20c] sm:$0xf]
    %v3703 = vld [vmem:[%s3570 + $0x210] sm:$0xf]
    %v3704 = vld [vmem:[%s3570 + $0x214] sm:$0xf]
    %v3705 = vld [vmem:[%s3570 + $0x218] sm:$0xf]
    %v3706 = vld [vmem:[%s3570 + $0x21c] sm:$0xf]
    %v3707 = vld [vmem:[%s3570 + $0x220] sm:$0xf]
    %v3708 = vld [vmem:[%s3570 + $0x224] sm:$0xf]
    %v3709 = vld [vmem:[%s3570 + $0x228] sm:$0xf]
    %v3710 = vld [vmem:[%s3570 + $0x22c] sm:$0xf]
    %v3711 = vld [vmem:[%s3570 + $0x230] sm:$0xf]
    %v3712 = vld [vmem:[%s3570 + $0x234] sm:$0xf]
    %v3713 = vld [vmem:[%s3570 + $0x238] sm:$0xf]
    %v3714 = vld [vmem:[%s3570 + $0x23c] sm:$0xf]
    %v3715 = vld [vmem:[%s3570 + $0x240] sm:$0xf]
    %v3716 = vld [vmem:[%s3570 + $0x244] sm:$0xf]
    %v3717 = vld [vmem:[%s3570 + $0x248] sm:$0xf]
    %v3718 = vld [vmem:[%s3570 + $0x24c] sm:$0xf]
    %v3719 = vld [vmem:[%s3570 + $0x250] sm:$0xf]
    %v3720 = vld [vmem:[%s3570 + $0x254] sm:$0xf]
    %v3721 = vld [vmem:[%s3570 + $0x258] sm:$0xf]
    %v3722 = vld [vmem:[%s3570 + $0x25c] sm:$0xf]
    %v3723 = vld [vmem:[%s3570 + $0x260] sm:$0xf]
    %v3724 = vld [vmem:[%s3570 + $0x264] sm:$0xf]
    %v3725 = vld [vmem:[%s3570 + $0x268] sm:$0xf]
    %v3726 = vld [vmem:[%s3570 + $0x26c] sm:$0xf]
    %v3727 = vld [vmem:[%s3570 + $0x270] sm:$0xf]
    %v3728 = vld [vmem:[%s3570 + $0x274] sm:$0xf]
    %v3729 = vld [vmem:[%s3570 + $0x278] sm:$0xf]
    %v3730 = vld [vmem:[%s3570 + $0x27c] sm:$0xf]
    %v3731 = vld [vmem:[%s3570 + $0x280] sm:$0xf]
    %v3732 = vld [vmem:[%s3570 + $0x284] sm:$0xf]
    %v3733 = vld [vmem:[%s3570 + $0x288] sm:$0xf]
    %v3734 = vld [vmem:[%s3570 + $0x28c] sm:$0xf]
    %v3735 = vld [vmem:[%s3570 + $0x290] sm:$0xf]
    %v3736 = vld [vmem:[%s3570 + $0x294] sm:$0xf]
    %v3737 = vld [vmem:[%s3570 + $0x298] sm:$0xf]
    %v3738 = vld [vmem:[%s3570 + $0x29c] sm:$0xf]
    %v3739 = vld [vmem:[%s3570 + $0x2a0] sm:$0xf]
    %v3740 = vld [vmem:[%s3570 + $0x2a4] sm:$0xf]
    %v3741 = vld [vmem:[%s3570 + $0x2a8] sm:$0xf]
    %v3742 = vld [vmem:[%s3570 + $0x2ac] sm:$0xf]
    %v3743 = vld [vmem:[%s3570 + $0x2b0] sm:$0xf]
    %v3744 = vld [vmem:[%s3570 + $0x2b4] sm:$0xf]
    %v3745 = vld [vmem:[%s3570 + $0x2b8] sm:$0xf]
    %v3746 = vld [vmem:[%s3570 + $0x2bc] sm:$0xf]
    %v3747 = vld [vmem:[%s3570 + $0x2c0] sm:$0xf]
    %v3748 = vld [vmem:[%s3570 + $0x2c4] sm:$0xf]
    %v3749 = vld [vmem:[%s3570 + $0x2c8] sm:$0xf]
    %v3750 = vld [vmem:[%s3570 + $0x2cc] sm:$0xf]
    %v3751 = vld [vmem:[%s3570 + $0x2d0] sm:$0xf]
    %v3752 = vld [vmem:[%s3570 + $0x2d4] sm:$0xf]
    %v3753 = vld [vmem:[%s3570 + $0x2d8] sm:$0xf]
    %v3754 = vld [vmem:[%s3570 + $0x2dc] sm:$0xf]
    %v3755 = vld [vmem:[%s3570 + $0x2e0] sm:$0xf]
    %v3756 = vld [vmem:[%s3570 + $0x2e4] sm:$0xf]
    %v3757 = vld [vmem:[%s3570 + $0x2e8] sm:$0xf]
    %v3758 = vld [vmem:[%s3570 + $0x2ec] sm:$0xf]
    %v3759 = vld [vmem:[%s3570 + $0x2f0] sm:$0xf]
    %v3760 = vld [vmem:[%s3570 + $0x2f4] sm:$0xf]
    %v3761 = vld [vmem:[%s3570 + $0x2f8] sm:$0xf]
    %v3762 = vld [vmem:[%s3570 + $0x2fc] sm:$0xf]
    %v3763 = vld [vmem:[%s3570 + $0x300] sm:$0xf]
    %v3764 = vld [vmem:[%s3570 + $0x304] sm:$0xf]
    %v3765 = vld [vmem:[%s3570 + $0x308] sm:$0xf]
    %v3766 = vld [vmem:[%s3570 + $0x30c] sm:$0xf]
    %v3767 = vld [vmem:[%s3570 + $0x310] sm:$0xf]
    %v3768 = vld [vmem:[%s3570 + $0x314] sm:$0xf]
    %v3769 = vld [vmem:[%s3570 + $0x318] sm:$0xf]
    %v3770 = vld [vmem:[%s3570 + $0x31c] sm:$0xf]
    %v3771 = vld [vmem:[%s3570 + $0x320] sm:$0xf]
    %v3772 = vld [vmem:[%s3570 + $0x324] sm:$0xf]
    %v3773 = vld [vmem:[%s3570 + $0x328] sm:$0xf]
    %v3774 = vld [vmem:[%s3570 + $0x32c] sm:$0xf]
    %v3775 = vld [vmem:[%s3570 + $0x330] sm:$0xf]
    %v3776 = vld [vmem:[%s3570 + $0x334] sm:$0xf]
    %v3777 = vld [vmem:[%s3570 + $0x338] sm:$0xf]
    %v3778 = vld [vmem:[%s3570 + $0x33c] sm:$0xf]
    %v3779 = vld [vmem:[%s3570 + $0x340] sm:$0xf]
    %v3780 = vld [vmem:[%s3570 + $0x344] sm:$0xf]
    %v3781 = vld [vmem:[%s3570 + $0x348] sm:$0xf]
    %v3782 = vld [vmem:[%s3570 + $0x34c] sm:$0xf]
    %v3783 = vld [vmem:[%s3570 + $0x350] sm:$0xf]
    %v3784 = vld [vmem:[%s3570 + $0x354] sm:$0xf]
    %v3785 = vld [vmem:[%s3570 + $0x358] sm:$0xf]
    %v3786 = vld [vmem:[%s3570 + $0x35c] sm:$0xf]
    %v3787 = vld [vmem:[%s3570 + $0x360] sm:$0xf]
    %v3788 = vld [vmem:[%s3570 + $0x364] sm:$0xf]
    %v3789 = vld [vmem:[%s3570 + $0x368] sm:$0xf]
    %v3790 = vld [vmem:[%s3570 + $0x36c] sm:$0xf]
    %v3791 = vld [vmem:[%s3570 + $0x370] sm:$0xf]
    %v3792 = vld [vmem:[%s3570 + $0x374] sm:$0xf]
    %v3793 = vld [vmem:[%s3570 + $0x378] sm:$0xf]
    %v3794 = vld [vmem:[%s3570 + $0x37c] sm:$0xf]
    %v3795 = vld [vmem:[%s3570 + $0x380] sm:$0xf]
    %v3796 = vld [vmem:[%s3570 + $0x384] sm:$0xf]
    %v3797 = vld [vmem:[%s3570 + $0x388] sm:$0xf]
    %v3798 = vld [vmem:[%s3570 + $0x38c] sm:$0xf]
    %v3799 = vld [vmem:[%s3570 + $0x390] sm:$0xf]
    %v3800 = vld [vmem:[%s3570 + $0x394] sm:$0xf]
    %v3801 = vld [vmem:[%s3570 + $0x398] sm:$0xf]
    %v3802 = vld [vmem:[%s3570 + $0x39c] sm:$0xf]
    %v3803 = vld [vmem:[%s3570 + $0x3a0] sm:$0xf]
    %v3804 = vld [vmem:[%s3570 + $0x3a4] sm:$0xf]
    %v3805 = vld [vmem:[%s3570 + $0x3a8] sm:$0xf]
    %v3806 = vld [vmem:[%s3570 + $0x3ac] sm:$0xf]
    %v3807 = vld [vmem:[%s3570 + $0x3b0] sm:$0xf]
    %v3808 = vld [vmem:[%s3570 + $0x3b4] sm:$0xf]
    %v3809 = vld [vmem:[%s3570 + $0x3b8] sm:$0xf]
    %v3810 = vld [vmem:[%s3570 + $0x3bc] sm:$0xf]
    %v3811 = vld [vmem:[%s3570 + $0x3c0] sm:$0xf]
    %v3812 = vld [vmem:[%s3570 + $0x3c4] sm:$0xf]
    %v3813 = vld [vmem:[%s3570 + $0x3c8] sm:$0xf]
    %v3814 = vld [vmem:[%s3570 + $0x3cc] sm:$0xf]
    %v3815 = vld [vmem:[%s3570 + $0x3d0] sm:$0xf]
    %v3816 = vld [vmem:[%s3570 + $0x3d4] sm:$0xf]
    %v3817 = vld [vmem:[%s3570 + $0x3d8] sm:$0xf]
    %v3818 = vld [vmem:[%s3570 + $0x3dc] sm:$0xf]
    %v3819 = vld [vmem:[%s3570 + $0x3e0] sm:$0xf]
    %v3820 = vld [vmem:[%s3570 + $0x3e4] sm:$0xf]
    %v3821 = vld [vmem:[%s3570 + $0x3e8] sm:$0xf]
    %v3822 = vld [vmem:[%s3570 + $0x3ec] sm:$0xf]
    %v3823 = vld [vmem:[%s3570 + $0x3f0] sm:$0xf]
    %v3824 = vld [vmem:[%s3570 + $0x3f4] sm:$0xf]
    %v3825 = vld [vmem:[%s3570 + $0x3f8] sm:$0xf]
    %v3826 = vld [vmem:[%s3570 + $0x3fc] sm:$0xf]
    %s3827 = scalar_lea.vmem %s10, 1
    %v3828 = vld [vmem:[%s3827] sm:$0x1]
    %v3830 = vlaneseq
    %v3831 = vshrl.u32 %v3830, 7
    %v3832 = vsub.s32 0, %v3831
    %v3833 = vrot.slane %v3828, %v3832
    %v4091 = vunpack.c.l.b16 %v3571
    %v4092 = vunpack.c.l.b16 %v3572
    %v4093 = vunpack.c.l.b16 %v3573
    %v4094 = vunpack.c.l.b16 %v3574
    %v4095 = vunpack.c.l.b16 %v3575
    %v4096 = vunpack.c.l.b16 %v3576
    %v4097 = vunpack.c.l.b16 %v3577
    %v4098 = vunpack.c.l.b16 %v3578
    %v4099 = vunpack.c.l.b16 %v3579
    %v4100 = vunpack.c.l.b16 %v3580
    %v4101 = vunpack.c.l.b16 %v3581
    %v4102 = vunpack.c.l.b16 %v3582
    %v4103 = vunpack.c.l.b16 %v3583
    %v4104 = vunpack.c.l.b16 %v3584
    %v4105 = vunpack.c.l.b16 %v3585
    %v4106 = vunpack.c.l.b16 %v3586
    %v4107 = vunpack.c.l.b16 %v3587
    %v4108 = vunpack.c.l.b16 %v3588
    %v4109 = vunpack.c.l.b16 %v3589
    %v4110 = vunpack.c.l.b16 %v3590
    %v4111 = vunpack.c.l.b16 %v3591
    %v4112 = vunpack.c.l.b16 %v3592
    %v4113 = vunpack.c.l.b16 %v3593
    %v4114 = vunpack.c.l.b16 %v3594
    %v4115 = vunpack.c.l.b16 %v3595
    %v4116 = vunpack.c.l.b16 %v3596
    %v4117 = vunpack.c.l.b16 %v3597
    %v4118 = vunpack.c.l.b16 %v3598
    %v4119 = vunpack.c.l.b16 %v3599
    %v4120 = vunpack.c.l.b16 %v3600
    %v4121 = vunpack.c.l.b16 %v3601
    %v4122 = vunpack.c.l.b16 %v3602
    %v4123 = vunpack.c.l.b16 %v3603
    %v4124 = vunpack.c.l.b16 %v3604
    %v4125 = vunpack.c.l.b16 %v3605
    %v4126 = vunpack.c.l.b16 %v3606
    %v4127 = vunpack.c.l.b16 %v3607
    %v4128 = vunpack.c.l.b16 %v3608
    %v4129 = vunpack.c.l.b16 %v3609
    %v4130 = vunpack.c.l.b16 %v3610
    %v4131 = vunpack.c.l.b16 %v3611
    %v4132 = vunpack.c.l.b16 %v3612
    %v4133 = vunpack.c.l.b16 %v3613
    %v4134 = vunpack.c.l.b16 %v3614
    %v4135 = vunpack.c.l.b16 %v3615
    %v4136 = vunpack.c.l.b16 %v3616
    %v4137 = vunpack.c.l.b16 %v3617
    %v4138 = vunpack.c.l.b16 %v3618
    %v4139 = vunpack.c.l.b16 %v3619
    %v4140 = vunpack.c.l.b16 %v3620
    %v4141 = vunpack.c.l.b16 %v3621
    %v4142 = vunpack.c.l.b16 %v3622
    %v4143 = vunpack.c.l.b16 %v3623
    %v4144 = vunpack.c.l.b16 %v3624
    %v4145 = vunpack.c.l.b16 %v3625
    %v4146 = vunpack.c.l.b16 %v3626
    %v4147 = vunpack.c.l.b16 %v3627
    %v4148 = vunpack.c.l.b16 %v3628
    %v4149 = vunpack.c.l.b16 %v3629
    %v4150 = vunpack.c.l.b16 %v3630
    %v4151 = vunpack.c.l.b16 %v3631
    %v4152 = vunpack.c.l.b16 %v3632
    %v4153 = vunpack.c.l.b16 %v3633
    %v4154 = vunpack.c.l.b16 %v3634
    %v4155 = vunpack.c.l.b16 %v3635
    %v4156 = vunpack.c.l.b16 %v3636
    %v4157 = vunpack.c.l.b16 %v3637
    %v4158 = vunpack.c.l.b16 %v3638
    %v4159 = vunpack.c.l.b16 %v3639
    %v4160 = vunpack.c.l.b16 %v3640
    %v4161 = vunpack.c.l.b16 %v3641
    %v4162 = vunpack.c.l.b16 %v3642
    %v4163 = vunpack.c.l.b16 %v3643
    %v4164 = vunpack.c.l.b16 %v3644
    %v4165 = vunpack.c.l.b16 %v3645
    %v4166 = vunpack.c.l.b16 %v3646
    %v4167 = vunpack.c.l.b16 %v3647
    %v4168 = vunpack.c.l.b16 %v3648
    %v4169 = vunpack.c.l.b16 %v3649
    %v4170 = vunpack.c.l.b16 %v3650
    %v4171 = vunpack.c.l.b16 %v3651
    %v4172 = vunpack.c.l.b16 %v3652
    %v4173 = vunpack.c.l.b16 %v3653
    %v4174 = vunpack.c.l.b16 %v3654
    %v4175 = vunpack.c.l.b16 %v3655
    %v4176 = vunpack.c.l.b16 %v3656
    %v4177 = vunpack.c.l.b16 %v3657
    %v4178 = vunpack.c.l.b16 %v3658
    %v4179 = vunpack.c.l.b16 %v3659
    %v4180 = vunpack.c.l.b16 %v3660
    %v4181 = vunpack.c.l.b16 %v3661
    %v4182 = vunpack.c.l.b16 %v3662
    %v4183 = vunpack.c.l.b16 %v3663
    %v4184 = vunpack.c.l.b16 %v3664
    %v4185 = vunpack.c.l.b16 %v3665
    %v4186 = vunpack.c.l.b16 %v3666
    %v4187 = vunpack.c.l.b16 %v3667
    %v4188 = vunpack.c.l.b16 %v3668
    %v4189 = vunpack.c.l.b16 %v3669
    %v4190 = vunpack.c.l.b16 %v3670
    %v4191 = vunpack.c.l.b16 %v3671
    %v4192 = vunpack.c.l.b16 %v3672
    %v4193 = vunpack.c.l.b16 %v3673
    %v4194 = vunpack.c.l.b16 %v3674
    %v4195 = vunpack.c.l.b16 %v3675
    %v4196 = vunpack.c.l.b16 %v3676
    %v4197 = vunpack.c.l.b16 %v3677
    %v4198 = vunpack.c.l.b16 %v3678
    %v4199 = vunpack.c.l.b16 %v3679
    %v4200 = vunpack.c.l.b16 %v3680
    %v4201 = vunpack.c.l.b16 %v3681
    %v4202 = vunpack.c.l.b16 %v3682
    %v4203 = vunpack.c.l.b16 %v3683
    %v4204 = vunpack.c.l.b16 %v3684
    %v4205 = vunpack.c.l.b16 %v3685
    %v4206 = vunpack.c.l.b16 %v3686
    %v4207 = vunpack.c.l.b16 %v3687
    %v4208 = vunpack.c.l.b16 %v3688
    %v4209 = vunpack.c.l.b16 %v3689
    %v4210 = vunpack.c.l.b16 %v3690
    %v4211 = vunpack.c.l.b16 %v3691
    %v4212 = vunpack.c.l.b16 %v3692
    %v4213 = vunpack.c.l.b16 %v3693
    %v4214 = vunpack.c.l.b16 %v3694
    %v4215 = vunpack.c.l.b16 %v3695
    %v4216 = vunpack.c.l.b16 %v3696
    %v4217 = vunpack.c.l.b16 %v3697
    %v4218 = vunpack.c.l.b16 %v3698
    %v4219 = vunpack.c.l.b16 %v3699
    %v4220 = vunpack.c.l.b16 %v3700
    %v4221 = vunpack.c.l.b16 %v3701
    %v4222 = vunpack.c.l.b16 %v3702
    %v4223 = vunpack.c.l.b16 %v3703
    %v4224 = vunpack.c.l.b16 %v3704
    %v4225 = vunpack.c.l.b16 %v3705
    %v4226 = vunpack.c.l.b16 %v3706
    %v4227 = vunpack.c.l.b16 %v3707
    %v4228 = vunpack.c.l.b16 %v3708
    %v4229 = vunpack.c.l.b16 %v3709
    %v4230 = vunpack.c.l.b16 %v3710
    %v4231 = vunpack.c.l.b16 %v3711
    %v4232 = vunpack.c.l.b16 %v3712
    %v4233 = vunpack.c.l.b16 %v3713
    %v4234 = vunpack.c.l.b16 %v3714
    %v4235 = vunpack.c.l.b16 %v3715
    %v4236 = vunpack.c.l.b16 %v3716
    %v4237 = vunpack.c.l.b16 %v3717
    %v4238 = vunpack.c.l.b16 %v3718
    %v4239 = vunpack.c.l.b16 %v3719
    %v4240 = vunpack.c.l.b16 %v3720
    %v4241 = vunpack.c.l.b16 %v3721
    %v4242 = vunpack.c.l.b16 %v3722
    %v4243 = vunpack.c.l.b16 %v3723
    %v4244 = vunpack.c.l.b16 %v3724
    %v4245 = vunpack.c.l.b16 %v3725
    %v4246 = vunpack.c.l.b16 %v3726
    %v4247 = vunpack.c.l.b16 %v3727
    %v4248 = vunpack.c.l.b16 %v3728
    %v4249 = vunpack.c.l.b16 %v3729
    %v4250 = vunpack.c.l.b16 %v3730
    %v4251 = vunpack.c.l.b16 %v3731
    %v4252 = vunpack.c.l.b16 %v3732
    %v4253 = vunpack.c.l.b16 %v3733
    %v4254 = vunpack.c.l.b16 %v3734
    %v4255 = vunpack.c.l.b16 %v3735
    %v4256 = vunpack.c.l.b16 %v3736
    %v4257 = vunpack.c.l.b16 %v3737
    %v4258 = vunpack.c.l.b16 %v3738
    %v4259 = vunpack.c.l.b16 %v3739
    %v4260 = vunpack.c.l.b16 %v3740
    %v4261 = vunpack.c.l.b16 %v3741
    %v4262 = vunpack.c.l.b16 %v3742
    %v4263 = vunpack.c.l.b16 %v3743
    %v4264 = vunpack.c.l.b16 %v3744
    %v4265 = vunpack.c.l.b16 %v3745
    %v4266 = vunpack.c.l.b16 %v3746
    %v4267 = vunpack.c.l.b16 %v3747
    %v4268 = vunpack.c.l.b16 %v3748
    %v4269 = vunpack.c.l.b16 %v3749
    %v4270 = vunpack.c.l.b16 %v3750
    %v4271 = vunpack.c.l.b16 %v3751
    %v4272 = vunpack.c.l.b16 %v3752
    %v4273 = vunpack.c.l.b16 %v3753
    %v4274 = vunpack.c.l.b16 %v3754
    %v4275 = vunpack.c.l.b16 %v3755
    %v4276 = vunpack.c.l.b16 %v3756
    %v4277 = vunpack.c.l.b16 %v3757
    %v4278 = vunpack.c.l.b16 %v3758
    %v4279 = vunpack.c.l.b16 %v3759
    %v4280 = vunpack.c.l.b16 %v3760
    %v4281 = vunpack.c.l.b16 %v3761
    %v4282 = vunpack.c.l.b16 %v3762
    %v4283 = vunpack.c.l.b16 %v3763
    %v4284 = vunpack.c.l.b16 %v3764
    %v4285 = vunpack.c.l.b16 %v3765
    %v4286 = vunpack.c.l.b16 %v3766
    %v4287 = vunpack.c.l.b16 %v3767
    %v4288 = vunpack.c.l.b16 %v3768
    %v4289 = vunpack.c.l.b16 %v3769
    %v4290 = vunpack.c.l.b16 %v3770
    %v4291 = vunpack.c.l.b16 %v3771
    %v4292 = vunpack.c.l.b16 %v3772
    %v4293 = vunpack.c.l.b16 %v3773
    %v4294 = vunpack.c.l.b16 %v3774
    %v4295 = vunpack.c.l.b16 %v3775
    %v4296 = vunpack.c.l.b16 %v3776
    %v4297 = vunpack.c.l.b16 %v3777
    %v4298 = vunpack.c.l.b16 %v3778
    %v4299 = vunpack.c.l.b16 %v3779
    %v4300 = vunpack.c.l.b16 %v3780
    %v4301 = vunpack.c.l.b16 %v3781
    %v4302 = vunpack.c.l.b16 %v3782
    %v4303 = vunpack.c.l.b16 %v3783
    %v4304 = vunpack.c.l.b16 %v3784
    %v4305 = vunpack.c.l.b16 %v3785
    %v4306 = vunpack.c.l.b16 %v3786
    %v4307 = vunpack.c.l.b16 %v3787
    %v4308 = vunpack.c.l.b16 %v3788
    %v4309 = vunpack.c.l.b16 %v3789
    %v4310 = vunpack.c.l.b16 %v3790
    %v4311 = vunpack.c.l.b16 %v3791
    %v4312 = vunpack.c.l.b16 %v3792
    %v4313 = vunpack.c.l.b16 %v3793
    %v4314 = vunpack.c.l.b16 %v3794
    %v4315 = vunpack.c.l.b16 %v3795
    %v4316 = vunpack.c.l.b16 %v3796
    %v4317 = vunpack.c.l.b16 %v3797
    %v4318 = vunpack.c.l.b16 %v3798
    %v4319 = vunpack.c.l.b16 %v3799
    %v4320 = vunpack.c.l.b16 %v3800
    %v4321 = vunpack.c.l.b16 %v3801
    %v4322 = vunpack.c.l.b16 %v3802
    %v4323 = vunpack.c.l.b16 %v3803
    %v4324 = vunpack.c.l.b16 %v3804
    %v4325 = vunpack.c.l.b16 %v3805
    %v4326 = vunpack.c.l.b16 %v3806
    %v4327 = vunpack.c.l.b16 %v3807
    %v4328 = vunpack.c.l.b16 %v3808
    %v4329 = vunpack.c.l.b16 %v3809
    %v4330 = vunpack.c.l.b16 %v3810
    %v4331 = vunpack.c.l.b16 %v3811
    %v4332 = vunpack.c.l.b16 %v3812
    %v4333 = vunpack.c.l.b16 %v3813
    %v4334 = vunpack.c.l.b16 %v3814
    %v4335 = vunpack.c.l.b16 %v3815
    %v4336 = vunpack.c.l.b16 %v3816
    %v4337 = vunpack.c.l.b16 %v3817
    %v4338 = vunpack.c.l.b16 %v3818
    %v4339 = vunpack.c.l.b16 %v3819
    %v4340 = vunpack.c.l.b16 %v3820
    %v4341 = vunpack.c.l.b16 %v3821
    %v4342 = vunpack.c.l.b16 %v3822
    %v4343 = vunpack.c.l.b16 %v3823
    %v4344 = vunpack.c.l.b16 %v3824
    %v4345 = vunpack.c.l.b16 %v3825
    %v4346 = vunpack.c.l.b16 %v3826
    %v4347 = vpack.c.b16 %v4092, %v4091
    %v4348 = vpack.c.b16 %v4094, %v4093
    %v4349 = vpack.c.b16 %v4096, %v4095
    %v4350 = vpack.c.b16 %v4098, %v4097
    %v4351 = vpack.c.b16 %v4100, %v4099
    %v4352 = vpack.c.b16 %v4102, %v4101
    %v4353 = vpack.c.b16 %v4104, %v4103
    %v4354 = vpack.c.b16 %v4106, %v4105
    %v4355 = vpack.c.b16 %v4108, %v4107
    %v4356 = vpack.c.b16 %v4110, %v4109
    %v4357 = vpack.c.b16 %v4112, %v4111
    %v4358 = vpack.c.b16 %v4114, %v4113
    %v4359 = vpack.c.b16 %v4116, %v4115
    %v4360 = vpack.c.b16 %v4118, %v4117
    %v4361 = vpack.c.b16 %v4120, %v4119
    %v4362 = vpack.c.b16 %v4122, %v4121
    %v4363 = vpack.c.b16 %v4124, %v4123
    %v4364 = vpack.c.b16 %v4126, %v4125
    %v4365 = vpack.c.b16 %v4128, %v4127
    %v4366 = vpack.c.b16 %v4130, %v4129
    %v4367 = vpack.c.b16 %v4132, %v4131
    %v4368 = vpack.c.b16 %v4134, %v4133
    %v4369 = vpack.c.b16 %v4136, %v4135
    %v4370 = vpack.c.b16 %v4138, %v4137
    %v4371 = vpack.c.b16 %v4140, %v4139
    %v4372 = vpack.c.b16 %v4142, %v4141
    %v4373 = vpack.c.b16 %v4144, %v4143
    %v4374 = vpack.c.b16 %v4146, %v4145
    %v4375 = vpack.c.b16 %v4148, %v4147
    %v4376 = vpack.c.b16 %v4150, %v4149
    %v4377 = vpack.c.b16 %v4152, %v4151
    %v4378 = vpack.c.b16 %v4154, %v4153
    %v4379 = vpack.c.b16 %v4156, %v4155
    %v4380 = vpack.c.b16 %v4158, %v4157
    %v4381 = vpack.c.b16 %v4160, %v4159
    %v4382 = vpack.c.b16 %v4162, %v4161
    %v4383 = vpack.c.b16 %v4164, %v4163
    %v4384 = vpack.c.b16 %v4166, %v4165
    %v4385 = vpack.c.b16 %v4168, %v4167
    %v4386 = vpack.c.b16 %v4170, %v4169
    %v4387 = vpack.c.b16 %v4172, %v4171
    %v4388 = vpack.c.b16 %v4174, %v4173
    %v4389 = vpack.c.b16 %v4176, %v4175
    %v4390 = vpack.c.b16 %v4178, %v4177
    %v4391 = vpack.c.b16 %v4180, %v4179
    %v4392 = vpack.c.b16 %v4182, %v4181
    %v4393 = vpack.c.b16 %v4184, %v4183
    %v4394 = vpack.c.b16 %v4186, %v4185
    %v4395 = vpack.c.b16 %v4188, %v4187
    %v4396 = vpack.c.b16 %v4190, %v4189
    %v4397 = vpack.c.b16 %v4192, %v4191
    %v4398 = vpack.c.b16 %v4194, %v4193
    %v4399 = vpack.c.b16 %v4196, %v4195
    %v4400 = vpack.c.b16 %v4198, %v4197
    %v4401 = vpack.c.b16 %v4200, %v4199
    %v4402 = vpack.c.b16 %v4202, %v4201
    %v4403 = vpack.c.b16 %v4204, %v4203
    %v4404 = vpack.c.b16 %v4206, %v4205
    %v4405 = vpack.c.b16 %v4208, %v4207
    %v4406 = vpack.c.b16 %v4210, %v4209
    %v4407 = vpack.c.b16 %v4212, %v4211
    %v4408 = vpack.c.b16 %v4214, %v4213
    %v4409 = vpack.c.b16 %v4216, %v4215
    %v4410 = vpack.c.b16 %v4218, %v4217
    %v4411 = vpack.c.b16 %v4220, %v4219
    %v4412 = vpack.c.b16 %v4222, %v4221
    %v4413 = vpack.c.b16 %v4224, %v4223
    %v4414 = vpack.c.b16 %v4226, %v4225
    %v4415 = vpack.c.b16 %v4228, %v4227
    %v4416 = vpack.c.b16 %v4230, %v4229
    %v4417 = vpack.c.b16 %v4232, %v4231
    %v4418 = vpack.c.b16 %v4234, %v4233
    %v4419 = vpack.c.b16 %v4236, %v4235
    %v4420 = vpack.c.b16 %v4238, %v4237
    %v4421 = vpack.c.b16 %v4240, %v4239
    %v4422 = vpack.c.b16 %v4242, %v4241
    %v4423 = vpack.c.b16 %v4244, %v4243
    %v4424 = vpack.c.b16 %v4246, %v4245
    %v4425 = vpack.c.b16 %v4248, %v4247
    %v4426 = vpack.c.b16 %v4250, %v4249
    %v4427 = vpack.c.b16 %v4252, %v4251
    %v4428 = vpack.c.b16 %v4254, %v4253
    %v4429 = vpack.c.b16 %v4256, %v4255
    %v4430 = vpack.c.b16 %v4258, %v4257
    %v4431 = vpack.c.b16 %v4260, %v4259
    %v4432 = vpack.c.b16 %v4262, %v4261
    %v4433 = vpack.c.b16 %v4264, %v4263
    %v4434 = vpack.c.b16 %v4266, %v4265
    %v4435 = vpack.c.b16 %v4268, %v4267
    %v4436 = vpack.c.b16 %v4270, %v4269
    %v4437 = vpack.c.b16 %v4272, %v4271
    %v4438 = vpack.c.b16 %v4274, %v4273
    %v4439 = vpack.c.b16 %v4276, %v4275
    %v4440 = vpack.c.b16 %v4278, %v4277
    %v4441 = vpack.c.b16 %v4280, %v4279
    %v4442 = vpack.c.b16 %v4282, %v4281
    %v4443 = vpack.c.b16 %v4284, %v4283
    %v4444 = vpack.c.b16 %v4286, %v4285
    %v4445 = vpack.c.b16 %v4288, %v4287
    %v4446 = vpack.c.b16 %v4290, %v4289
    %v4447 = vpack.c.b16 %v4292, %v4291
    %v4448 = vpack.c.b16 %v4294, %v4293
    %v4449 = vpack.c.b16 %v4296, %v4295
    %v4450 = vpack.c.b16 %v4298, %v4297
    %v4451 = vpack.c.b16 %v4300, %v4299
    %v4452 = vpack.c.b16 %v4302, %v4301
    %v4453 = vpack.c.b16 %v4304, %v4303
    %v4454 = vpack.c.b16 %v4306, %v4305
    %v4455 = vpack.c.b16 %v4308, %v4307
    %v4456 = vpack.c.b16 %v4310, %v4309
    %v4457 = vpack.c.b16 %v4312, %v4311
    %v4458 = vpack.c.b16 %v4314, %v4313
    %v4459 = vpack.c.b16 %v4316, %v4315
    %v4460 = vpack.c.b16 %v4318, %v4317
    %v4461 = vpack.c.b16 %v4320, %v4319
    %v4462 = vpack.c.b16 %v4322, %v4321
    %v4463 = vpack.c.b16 %v4324, %v4323
    %v4464 = vpack.c.b16 %v4326, %v4325
    %v4465 = vpack.c.b16 %v4328, %v4327
    %v4466 = vpack.c.b16 %v4330, %v4329
    %v4467 = vpack.c.b16 %v4332, %v4331
    %v4468 = vpack.c.b16 %v4334, %v4333
    %v4469 = vpack.c.b16 %v4336, %v4335
    %v4470 = vpack.c.b16 %v4338, %v4337
    %v4471 = vpack.c.b16 %v4340, %v4339
    %v4472 = vpack.c.b16 %v4342, %v4341
    %v4473 = vpack.c.b16 %v4344, %v4343
    %v4474 = vpack.c.b16 %v4346, %v4345
    %4603 = vmatprep.subr.bf16.mxu0 0
    %4604 = vmatpush1.bf16.msra.mxu0 %v4347
    %4605 = vmatprep.subr.bf16.mxu0 0
    %4606 = vmatpush1.bf16.msra.mxu0 %v4348
    %4607 = vmatprep.subr.bf16.mxu0 0
    %4608 = vmatpush1.bf16.msra.mxu0 %v4349
    %4609 = vmatprep.subr.bf16.mxu0 0
    %4610 = vmatpush1.bf16.msra.mxu0 %v4350
    %4611 = vmatprep.subr.bf16.mxu0 0
    %4612 = vmatpush1.bf16.msra.mxu0 %v4351
    %4613 = vmatprep.subr.bf16.mxu0 0
    %4614 = vmatpush1.bf16.msra.mxu0 %v4352
    %4615 = vmatprep.subr.bf16.mxu0 0
    %4616 = vmatpush1.bf16.msra.mxu0 %v4353
    %4617 = vmatprep.subr.bf16.mxu0 0
    %4618 = vmatpush1.bf16.msra.mxu0 %v4354
    %4619 = vmatprep.subr.bf16.mxu0 0
    %4620 = vmatpush1.bf16.msra.mxu0 %v4355
    %4621 = vmatprep.subr.bf16.mxu0 0
    %4622 = vmatpush1.bf16.msra.mxu0 %v4356
    %4623 = vmatprep.subr.bf16.mxu0 0
    %4624 = vmatpush1.bf16.msra.mxu0 %v4357
    %4625 = vmatprep.subr.bf16.mxu0 0
    %4626 = vmatpush1.bf16.msra.mxu0 %v4358
    %4627 = vmatprep.subr.bf16.mxu0 0
    %4628 = vmatpush1.bf16.msra.mxu0 %v4359
    %4629 = vmatprep.subr.bf16.mxu0 0
    %4630 = vmatpush1.bf16.msra.mxu0 %v4360
    %4631 = vmatprep.subr.bf16.mxu0 0
    %4632 = vmatpush1.bf16.msra.mxu0 %v4361
    %4633 = vmatprep.subr.bf16.mxu0 0
    %4634 = vmatpush1.bf16.msra.mxu0 %v4362
    %4635 = vmatprep.mubr.bf16.mxu0 %v3555
    %4636 = vmatmul.mubr.bf16.gmra.mrb[0].mxu0 %v3554
    %v4637 = vpop.f32.mrb[0].mxu0
    %v4638 = vadd.f32 %v3833, %v4637
    %v4639 = vpop.f32.mrb[0].mxu0
    %v4640 = vpop.f32.mrb[0].mxu0
    %v4641 = vpop.f32.mrb[0].mxu0
    %4642 = vdwg.mxu0
    %4643 = vmatprep.subr.bf16.mxu0 0
    %4644 = vmatpush1.bf16.msra.mxu0 %v4363
    %4645 = vmatprep.subr.bf16.mxu0 0
    %4646 = vmatpush1.bf16.msra.mxu0 %v4364
    %4647 = vmatprep.subr.bf16.mxu0 0
    %4648 = vmatpush1.bf16.msra.mxu0 %v4365
    %4649 = vmatprep.subr.bf16.mxu0 0
    %4650 = vmatpush1.bf16.msra.mxu0 %v4366
    %4651 = vmatprep.subr.bf16.mxu0 0
    %4652 = vmatpush1.bf16.msra.mxu0 %v4367
    %4653 = vmatprep.subr.bf16.mxu0 0
    %4654 = vmatpush1.bf16.msra.mxu0 %v4368
    %4655 = vmatprep.subr.bf16.mxu0 0
    %4656 = vmatpush1.bf16.msra.mxu0 %v4369
    %4657 = vmatprep.subr.bf16.mxu0 0
    %4658 = vmatpush1.bf16.msra.mxu0 %v4370
    %4659 = vmatprep.subr.bf16.mxu0 0
    %4660 = vmatpush1.bf16.msra.mxu0 %v4371
    %4661 = vmatprep.subr.bf16.mxu0 0
    %4662 = vmatpush1.bf16.msra.mxu0 %v4372
    %4663 = vmatprep.subr.bf16.mxu0 0
    %4664 = vmatpush1.bf16.msra.mxu0 %v4373
    %4665 = vmatprep.subr.bf16.mxu0 0
    %4666 = vmatpush1.bf16.msra.mxu0 %v4374
    %4667 = vmatprep.subr.bf16.mxu0 0
    %4668 = vmatpush1.bf16.msra.mxu0 %v4375
    %4669 = vmatprep.subr.bf16.mxu0 0
    %4670 = vmatpush1.bf16.msra.mxu0 %v4376
    %4671 = vmatprep.subr.bf16.mxu0 0
    %4672 = vmatpush1.bf16.msra.mxu0 %v4377
    %4673 = vmatprep.subr.bf16.mxu0 0
    %4674 = vmatpush1.bf16.msra.mxu0 %v4378
    %4675 = vmatprep.mubr.bf16.mxu0 %v3557
    %4676 = vmatmul.mubr.bf16.gmra.mrb[0].mxu0 %v3556
    %v4677 = vpop.f32.mrb[0].mxu0
    %v4678 = vadd.f32 %v4638, %v4677
    %v4679 = vpop.f32.mrb[0].mxu0
    %v4680 = vpop.f32.mrb[0].mxu0
    %v4681 = vpop.f32.mrb[0].mxu0
    %4682 = vdwg.mxu0
    %4683 = vmatprep.subr.bf16.mxu0 0
    %4684 = vmatpush1.bf16.msra.mxu0 %v4379
    %4685 = vmatprep.subr.bf16.mxu0 0
    %4686 = vmatpush1.bf16.msra.mxu0 %v4380
    %4687 = vmatprep.subr.bf16.mxu0 0
    %4688 = vmatpush1.bf16.msra.mxu0 %v4381
    %4689 = vmatprep.subr.bf16.mxu0 0
    %4690 = vmatpush1.bf16.msra.mxu0 %v4382
    %4691 = vmatprep.subr.bf16.mxu0 0
    %4692 = vmatpush1.bf16.msra.mxu0 %v4383
    %4693 = vmatprep.subr.bf16.mxu0 0
    %4694 = vmatpush1.bf16.msra.mxu0 %v4384
    %4695 = vmatprep.subr.bf16.mxu0 0
    %4696 = vmatpush1.bf16.msra.mxu0 %v4385
    %4697 = vmatprep.subr.bf16.mxu0 0
    %4698 = vmatpush1.bf16.msra.mxu0 %v4386
    %4699 = vmatprep.subr.bf16.mxu0 0
    %4700 = vmatpush1.bf16.msra.mxu0 %v4387
    %4701 = vmatprep.subr.bf16.mxu0 0
    %4702 = vmatpush1.bf16.msra.mxu0 %v4388
    %4703 = vmatprep.subr.bf16.mxu0 0
    %4704 = vmatpush1.bf16.msra.mxu0 %v4389
    %4705 = vmatprep.subr.bf16.mxu0 0
    %4706 = vmatpush1.bf16.msra.mxu0 %v4390
    %4707 = vmatprep.subr.bf16.mxu0 0
    %4708 = vmatpush1.bf16.msra.mxu0 %v4391
    %4709 = vmatprep.subr.bf16.mxu0 0
    %4710 = vmatpush1.bf16.msra.mxu0 %v4392
    %4711 = vmatprep.subr.bf16.mxu0 0
    %4712 = vmatpush1.bf16.msra.mxu0 %v4393
    %4713 = vmatprep.subr.bf16.mxu0 0
    %4714 = vmatpush1.bf16.msra.mxu0 %v4394
    %4715 = vmatprep.mubr.bf16.mxu0 %v3559
    %4716 = vmatmul.mubr.bf16.gmra.mrb[0].mxu0 %v3558
    %v4717 = vpop.f32.mrb[0].mxu0
    %v4718 = vadd.f32 %v4678, %v4717
    %v4719 = vpop.f32.mrb[0].mxu0
    %v4720 = vpop.f32.mrb[0].mxu0
    %v4721 = vpop.f32.mrb[0].mxu0
    %4722 = vdwg.mxu0
    %4723 = vmatprep.subr.bf16.mxu0 0
    %4724 = vmatpush1.bf16.msra.mxu0 %v4395
    %4725 = vmatprep.subr.bf16.mxu0 0
    %4726 = vmatpush1.bf16.msra.mxu0 %v4396
    %4727 = vmatprep.subr.bf16.mxu0 0
    %4728 = vmatpush1.bf16.msra.mxu0 %v4397
    %4729 = vmatprep.subr.bf16.mxu0 0
    %4730 = vmatpush1.bf16.msra.mxu0 %v4398
    %4731 = vmatprep.subr.bf16.mxu0 0
    %4732 = vmatpush1.bf16.msra.mxu0 %v4399
    %4733 = vmatprep.subr.bf16.mxu0 0
    %4734 = vmatpush1.bf16.msra.mxu0 %v4400
    %4735 = vmatprep.subr.bf16.mxu0 0
    %4736 = vmatpush1.bf16.msra.mxu0 %v4401
    %4737 = vmatprep.subr.bf16.mxu0 0
    %4738 = vmatpush1.bf16.msra.mxu0 %v4402
    %4739 = vmatprep.subr.bf16.mxu0 0
    %4740 = vmatpush1.bf16.msra.mxu0 %v4403
    %4741 = vmatprep.subr.bf16.mxu0 0
    %4742 = vmatpush1.bf16.msra.mxu0 %v4404
    %4743 = vmatprep.subr.bf16.mxu0 0
    %4744 = vmatpush1.bf16.msra.mxu0 %v4405
    %4745 = vmatprep.subr.bf16.mxu0 0
    %4746 = vmatpush1.bf16.msra.mxu0 %v4406
    %4747 = vmatprep.subr.bf16.mxu0 0
    %4748 = vmatpush1.bf16.msra.mxu0 %v4407
    %4749 = vmatprep.subr.bf16.mxu0 0
    %4750 = vmatpush1.bf16.msra.mxu0 %v4408
    %4751 = vmatprep.subr.bf16.mxu0 0
    %4752 = vmatpush1.bf16.msra.mxu0 %v4409
    %4753 = vmatprep.subr.bf16.mxu0 0
    %4754 = vmatpush1.bf16.msra.mxu0 %v4410
    %4755 = vmatprep.mubr.bf16.mxu0 %v3561
    %4756 = vmatmul.mubr.bf16.gmra.mrb[0].mxu0 %v3560
    %v4757 = vpop.f32.mrb[0].mxu0
    %v4758 = vadd.f32 %v4718, %v4757
    %v4759 = vpop.f32.mrb[0].mxu0
    %v4760 = vpop.f32.mrb[0].mxu0
    %v4761 = vpop.f32.mrb[0].mxu0
    %4762 = vdwg.mxu0
    %4763 = vmatprep.subr.bf16.mxu0 0
    %4764 = vmatpush1.bf16.msra.mxu0 %v4411
    %4765 = vmatprep.subr.bf16.mxu0 0
    %4766 = vmatpush1.bf16.msra.mxu0 %v4412
    %4767 = vmatprep.subr.bf16.mxu0 0
    %4768 = vmatpush1.bf16.msra.mxu0 %v4413
    %4769 = vmatprep.subr.bf16.mxu0 0
    %4770 = vmatpush1.bf16.msra.mxu0 %v4414
    %4771 = vmatprep.subr.bf16.mxu0 0
    %4772 = vmatpush1.bf16.msra.mxu0 %v4415
    %4773 = vmatprep.subr.bf16.mxu0 0
    %4774 = vmatpush1.bf16.msra.mxu0 %v4416
    %4775 = vmatprep.subr.bf16.mxu0 0
    %4776 = vmatpush1.bf16.msra.mxu0 %v4417
    %4777 = vmatprep.subr.bf16.mxu0 0
    %4778 = vmatpush1.bf16.msra.mxu0 %v4418
    %4779 = vmatprep.subr.bf16.mxu0 0
    %4780 = vmatpush1.bf16.msra.mxu0 %v4419
    %4781 = vmatprep.subr.bf16.mxu0 0
    %4782 = vmatpush1.bf16.msra.mxu0 %v4420
    %4783 = vmatprep.subr.bf16.mxu0 0
    %4784 = vmatpush1.bf16.msra.mxu0 %v4421
    %4785 = vmatprep.subr.bf16.mxu0 0
    %4786 = vmatpush1.bf16.msra.mxu0 %v4422
    %4787 = vmatprep.subr.bf16.mxu0 0
    %4788 = vmatpush1.bf16.msra.mxu0 %v4423
    %4789 = vmatprep.subr.bf16.mxu0 0
    %4790 = vmatpush1.bf16.msra.mxu0 %v4424
    %4791 = vmatprep.subr.bf16.mxu0 0
    %4792 = vmatpush1.bf16.msra.mxu0 %v4425
    %4793 = vmatprep.subr.bf16.mxu0 0
    %4794 = vmatpush1.bf16.msra.mxu0 %v4426
    %4795 = vmatprep.mubr.bf16.mxu0 %v3563
    %4796 = vmatmul.mubr.bf16.gmra.mrb[0].mxu0 %v3562
    %v4797 = vpop.f32.mrb[0].mxu0
    %v4798 = vadd.f32 %v4758, %v4797
    %v4799 = vpop.f32.mrb[0].mxu0
    %v4800 = vpop.f32.mrb[0].mxu0
    %v4801 = vpop.f32.mrb[0].mxu0
    %4802 = vdwg.mxu0
    %4803 = vmatprep.subr.bf16.mxu0 0
    %4804 = vmatpush1.bf16.msra.mxu0 %v4427
    %4805 = vmatprep.subr.bf16.mxu0 0
    %4806 = vmatpush1.bf16.msra.mxu0 %v4428
    %4807 = vmatprep.subr.bf16.mxu0 0
    %4808 = vmatpush1.bf16.msra.mxu0 %v4429
    %4809 = vmatprep.subr.bf16.mxu0 0
    %4810 = vmatpush1.bf16.msra.mxu0 %v4430
    %4811 = vmatprep.subr.bf16.mxu0 0
    %4812 = vmatpush1.bf16.msra.mxu0 %v4431
    %4813 = vmatprep.subr.bf16.mxu0 0
    %4814 = vmatpush1.bf16.msra.mxu0 %v4432
    %4815 = vmatprep.subr.bf16.mxu0 0
    %4816 = vmatpush1.bf16.msra.mxu0 %v4433
    %4817 = vmatprep.subr.bf16.mxu0 0
    %4818 = vmatpush1.bf16.msra.mxu0 %v4434
    %4819 = vmatprep.subr.bf16.mxu0 0
    %4820 = vmatpush1.bf16.msra.mxu0 %v4435
    %4821 = vmatprep.subr.bf16.mxu0 0
    %4822 = vmatpush1.bf16.msra.mxu0 %v4436
    %4823 = vmatprep.subr.bf16.mxu0 0
    %4824 = vmatpush1.bf16.msra.mxu0 %v4437
    %4825 = vmatprep.subr.bf16.mxu0 0
    %4826 = vmatpush1.bf16.msra.mxu0 %v4438
    %4827 = vmatprep.subr.bf16.mxu0 0
    %4828 = vmatpush1.bf16.msra.mxu0 %v4439
    %4829 = vmatprep.subr.bf16.mxu0 0
    %4830 = vmatpush1.bf16.msra.mxu0 %v4440
    %4831 = vmatprep.subr.bf16.mxu0 0
    %4832 = vmatpush1.bf16.msra.mxu0 %v4441
    %4833 = vmatprep.subr.bf16.mxu0 0
    %4834 = vmatpush1.bf16.msra.mxu0 %v4442
    %4835 = vmatprep.mubr.bf16.mxu0 %v3565
    %4836 = vmatmul.mubr.bf16.gmra.mrb[0].mxu0 %v3564
    %v4837 = vpop.f32.mrb[0].mxu0
    %v4838 = vadd.f32 %v4798, %v4837
    %v4839 = vpop.f32.mrb[0].mxu0
    %v4840 = vpop.f32.mrb[0].mxu0
    %v4841 = vpop.f32.mrb[0].mxu0
    %4842 = vdwg.mxu0
    %4843 = vmatprep.subr.bf16.mxu0 0
    %4844 = vmatpush1.bf16.msra.mxu0 %v4443
    %4845 = vmatprep.subr.bf16.mxu0 0
    %4846 = vmatpush1.bf16.msra.mxu0 %v4444
    %4847 = vmatprep.subr.bf16.mxu0 0
    %4848 = vmatpush1.bf16.msra.mxu0 %v4445
    %4849 = vmatprep.subr.bf16.mxu0 0
    %4850 = vmatpush1.bf16.msra.mxu0 %v4446
    %4851 = vmatprep.subr.bf16.mxu0 0
    %4852 = vmatpush1.bf16.msra.mxu0 %v4447
    %4853 = vmatprep.subr.bf16.mxu0 0
    %4854 = vmatpush1.bf16.msra.mxu0 %v4448
    %4855 = vmatprep.subr.bf16.mxu0 0
    %4856 = vmatpush1.bf16.msra.mxu0 %v4449
    %4857 = vmatprep.subr.bf16.mxu0 0
    %4858 = vmatpush1.bf16.msra.mxu0 %v4450
    %4859 = vmatprep.subr.bf16.mxu0 0
    %4860 = vmatpush1.bf16.msra.mxu0 %v4451
    %4861 = vmatprep.subr.bf16.mxu0 0
    %4862 = vmatpush1.bf16.msra.mxu0 %v4452
    %4863 = vmatprep.subr.bf16.mxu0 0
    %4864 = vmatpush1.bf16.msra.mxu0 %v4453
    %4865 = vmatprep.subr.bf16.mxu0 0
    %4866 = vmatpush1.bf16.msra.mxu0 %v4454
    %4867 = vmatprep.subr.bf16.mxu0 0
    %4868 = vmatpush1.bf16.msra.mxu0 %v4455
    %4869 = vmatprep.subr.bf16.mxu0 0
    %4870 = vmatpush1.bf16.msra.mxu0 %v4456
    %4871 = vmatprep.subr.bf16.mxu0 0
    %4872 = vmatpush1.bf16.msra.mxu0 %v4457
    %4873 = vmatprep.subr.bf16.mxu0 0
    %4874 = vmatpush1.bf16.msra.mxu0 %v4458
    %4875 = vmatprep.mubr.bf16.mxu0 %v3567
    %4876 = vmatmul.mubr.bf16.gmra.mrb[0].mxu0 %v3566
    %v4877 = vpop.f32.mrb[0].mxu0
    %v4878 = vadd.f32 %v4838, %v4877
    %v4879 = vpop.f32.mrb[0].mxu0
    %v4880 = vpop.f32.mrb[0].mxu0
    %v4881 = vpop.f32.mrb[0].mxu0
    %4882 = vdwg.mxu0
    %4883 = vmatprep.subr.bf16.mxu0 0
    %4884 = vmatpush1.bf16.msra.mxu0 %v4459
    %4885 = vmatprep.subr.bf16.mxu0 0
    %4886 = vmatpush1.bf16.msra.mxu0 %v4460
    %4887 = vmatprep.subr.bf16.mxu0 0
    %4888 = vmatpush1.bf16.msra.mxu0 %v4461
    %4889 = vmatprep.subr.bf16.mxu0 0
    %4890 = vmatpush1.bf16.msra.mxu0 %v4462
    %4891 = vmatprep.subr.bf16.mxu0 0
    %4892 = vmatpush1.bf16.msra.mxu0 %v4463
    %4893 = vmatprep.subr.bf16.mxu0 0
    %4894 = vmatpush1.bf16.msra.mxu0 %v4464
    %4895 = vmatprep.subr.bf16.mxu0 0
    %4896 = vmatpush1.bf16.msra.mxu0 %v4465
    %4897 = vmatprep.subr.bf16.mxu0 0
    %4898 = vmatpush1.bf16.msra.mxu0 %v4466
    %4899 = vmatprep.subr.bf16.mxu0 0
    %4900 = vmatpush1.bf16.msra.mxu0 %v4467
    %4901 = vmatprep.subr.bf16.mxu0 0
    %4902 = vmatpush1.bf16.msra.mxu0 %v4468
    %4903 = vmatprep.subr.bf16.mxu0 0
    %4904 = vmatpush1.bf16.msra.mxu0 %v4469
    %4905 = vmatprep.subr.bf16.mxu0 0
    %4906 = vmatpush1.bf16.msra.mxu0 %v4470
    %4907 = vmatprep.subr.bf16.mxu0 0
    %4908 = vmatpush1.bf16.msra.mxu0 %v4471
    %4909 = vmatprep.subr.bf16.mxu0 0
    %4910 = vmatpush1.bf16.msra.mxu0 %v4472
    %4911 = vmatprep.subr.bf16.mxu0 0
    %4912 = vmatpush1.bf16.msra.mxu0 %v4473
    %4913 = vmatprep.subr.bf16.mxu0 0
    %4914 = vmatpush1.bf16.msra.mxu0 %v4474
    %4915 = vmatprep.mubr.bf16.mxu0 %v3569
    %4916 = vmatmul.mubr.bf16.gmra.mrb[0].mxu0 %v3568
    %v4917 = vpop.f32.mrb[0].mxu0
    %v4918 = vadd.f32 %v4878, %v4917
    %v4919 = vpop.f32.mrb[0].mxu0
    %v4920 = vpop.f32.mrb[0].mxu0
    %v4921 = vpop.f32.mrb[0].mxu0
    %4922 = vdwg.mxu0
    %v4923 = vadd.f32 %v2927, %v4918
    %s4924 = scalar_lea.vmem %s13, 1
    %v4925 = vld [vmem:[%s4924] sm:$0x1]
    %s4926 = scalar_lea.vmem %s14, 1
    %v4927 = vld [vmem:[%s4926] sm:$0x1]
    %v4928 = vsel %vm142, %v4923, 0.0
    %4929 = vadd.xlane.f32.xlu0 %v4928
    %v4930 = vpop.xlane.xlu0 %4929
    %v4931 = vmul.f32 %v4930, %v487
    %v4932 = vsub.f32 %v4923, %v4931
    %v4933 = vmul.f32 %v4932, %v4932
    %v4934 = vsel %vm142, %v4933, 0.0
    %4935 = vadd.xlane.f32.xlu0 %v4934
    %v4936 = vpop.xlane.xlu0 %4935
    %v4937 = vmul.f32 %v4936, %v487
    %v4938 = vadd.f32 %v4937, 1e-05
    %v4939 = vrsqrt.pop %v4938
    %v4940 = vmul.f32 %v4932, %v4939
    %v4942 = vlaneseq
    %v4943 = vshrl.u32 %v4942, 7
    %v4944 = vsub.s32 0, %v4943
    %v4945 = vrot.slane %v4925, %v4944
    %v4947 = vmul.f32 %v4940, %v4945
    %v4949 = vlaneseq
    %v4950 = vshrl.u32 %v4949, 7
    %v4951 = vsub.s32 0, %v4950
    %v4952 = vrot.slane %v4927, %v4951
    %v4954 = vadd.f32 %v4947, %v4952
    %v4955 = vld [vmem:[%s15] sm:$0x1]
    %v4956 = vpack.c.bf16 %v4954, %v4954
    %v4957 = vld [vmem:[#allocation2] sm:$0x1]
    %4959 = vset.pattern.permute.xlu0 0
    %4960 = vperm.xlu0 %4959, %v4957
    %v4961 = vpop.permute.xlu0 %4960
    %v4963 = vlaneseq
    %v4964 = vshrl.u32 %v4963, 7
    %v4965 = vsub.s32 0, %v4964
    %v4966 = vrot.slane %v4961, %v4965
    %v4968 = vsel %vm142, %v4955, 0
    %v4971 = vsel %vm142, %v4956, 0
    %4973 = vmatprep.subr.bf16.mxu0 0
    %4974 = vmatpush1.bf16.xpose.msra.mxu0 %v4971
    %4975 = vmatprep.subr.bf16.mxu0 0
    %4976 = vmatpush1.bf16.xpose.msra.mxu0 0
    %4977 = vmatprep.subr.bf16.mxu0 0
    %4978 = vmatpush1.bf16.xpose.msra.mxu0 0
    %4979 = vmatprep.subr.bf16.mxu0 0
    %4980 = vmatpush1.bf16.xpose.msra.mxu0 0
    %4981 = vmatprep.subr.bf16.mxu0 0
    %4982 = vmatpush1.bf16.xpose.msra.mxu0 0
    %4983 = vmatprep.subr.bf16.mxu0 0
    %4984 = vmatpush1.bf16.xpose.msra.mxu0 0
    %4985 = vmatprep.subr.bf16.mxu0 0
    %4986 = vmatpush1.bf16.xpose.msra.mxu0 0
    %4987 = vmatprep.subr.bf16.mxu0 0
    %4988 = vmatpush1.bf16.xpose.msra.mxu0 0
    %4989 = vmatprep.subr.bf16.mxu0 0
    %4990 = vmatpush1.bf16.xpose.msra.mxu0 0
    %4991 = vmatprep.subr.bf16.mxu0 0
    %4992 = vmatpush1.bf16.xpose.msra.mxu0 0
    %4993 = vmatprep.subr.bf16.mxu0 0
    %4994 = vmatpush1.bf16.xpose.msra.mxu0 0
    %4995 = vmatprep.subr.bf16.mxu0 0
    %4996 = vmatpush1.bf16.xpose.msra.mxu0 0
    %4997 = vmatprep.subr.bf16.mxu0 0
    %4998 = vmatpush1.bf16.xpose.msra.mxu0 0
    %4999 = vmatprep.subr.bf16.mxu0 0
    %5000 = vmatpush1.bf16.xpose.msra.mxu0 0
    %5001 = vmatprep.subr.bf16.mxu0 0
    %5002 = vmatpush1.bf16.xpose.msra.mxu0 0
    %5003 = vmatprep.subr.bf16.mxu0 0
    %5004 = vmatpush1.bf16.xpose.msra.mxu0 0
    %5005 = vmatprep.mubr.bf16.mxu0 0
    %5006 = vmatmul.mubr.bf16.gmra.mrb[0].mxu0 %v4968
    %v5007 = vpop.f32.mrb[0].mxu0
    %v5008 = vadd.f32 %v4966, %v5007
    %v5009 = vpop.f32.mrb[0].mxu0
    %v5010 = vpop.f32.mrb[0].mxu0
    %v5011 = vpop.f32.mrb[0].mxu0
    %5012 = vdwg.mxu0
    %v5013 = vxor.u32 %v5008, 2147483648
    %v5014 = vmul.f32 %v5013, 1.442695
    %v5015 = vpow.pop %v5014
    %v5016 = vadd.f32 %v5015, 1.0
    %v5017 = vrcp.pop %v5016
    %v5018 = vmul.f32 1.0, %v5017
    %vm5019 = vcmask 57344
    %5020 = vst.msk [vmem:[#allocation3] sm:$0x1] %vm5019, %v5018
    // Predicated region
    $region70: #{diabetes_transformer.1} parent=1 // pred_check
      _
    $region71: #{diabetes_transformer.1} parent=1 // pred_check_branch
      %5022 = sbr.rel (0) target = $region73
    $region72: #{diabetes_transformer.1} parent=1 // pred_region
      %s5024 = ssub.s32 16, 16
      %5025 = vsyncadd [#allocation4], %s5024
      %s5027 = sshll.u32 [#allocation3], 4
      %s5028 = int_to_ptr.vmem [resolvable:$true] %s5027
      %5030 = dma.vmem_to_hbm [thread:$0]  %s5028, 16, %s17, [#allocation4]
    $region73: #{diabetes_transformer.1} parent=1 // pred_fallthru
      _
    // Predicated region
    $region74: #{diabetes_transformer.1} parent=1 // pred_check
      _
    $region75: #{diabetes_transformer.1} parent=1 // pred_check_branch
      %5032 = sbr.rel (0) target = $region77
    $region76: #{diabetes_transformer.1} parent=1 // pred_region
      %5033 = dma.done [#allocation4], 16
    $region77: #{diabetes_transformer.1} parent=1 // pred_fallthru
      _
    %5034 = vsyncpa [#allocation4], 1

</llo_original>
